<compile_context>
chip_gen: v5e
topology: v5e:2x2
jax: 0.10.0
libtpu: 0.0.40
codegen_flags: <defaults>
</compile_context>

<pallas_src>
import math
from functools import lru_cache

import numpy as np
import jax
import jax.numpy as jnp
from jax.experimental import pallas as pl
from jax.experimental.pallas import tpu as pltpu


# ----------------------- host-side constant construction (cached) -----------------------

def _adaptive_pool_1d(in_size: int, out_size: int) -> np.ndarray:
    """1-D adaptive-average-pool matrix (in_size, out_size), matching torch semantics."""
    P = np.zeros((in_size, out_size), dtype=np.float64)
    for o in range(out_size):
        s = (o * in_size) // out_size
        e = math.ceil((o + 1) * in_size / out_size)
        P[s:e, o] = 1.0 / (e - s)
    return P


def _adaptive_pool_matrix(H: int, W: int, out: int) -> np.ndarray:
    """(H*W, out*out) flattened-spatial matrix for AdaptiveAvgPool2d(out); handles H != W."""
    Ph = _adaptive_pool_1d(H, out)
    Pw = _adaptive_pool_1d(W, out)
    G = np.einsum('ip,jq->ijpq', Ph, Pw).reshape(H * W, out * out)
    return G.astype(np.float32)


def _bicubic_1d(in_size: int, out_size: int, a: float = -0.75) -> np.ndarray:
    """1-D bicubic upsample matrix (out_size, in_size), F.interpolate(align_corners=False)."""
    def w(x):
        x = abs(x)
        if x <= 1.0:
            return (a + 2.0) * x ** 3 - (a + 3.0) * x ** 2 + 1.0
        if x < 2.0:
            return a * x ** 3 - 5.0 * a * x ** 2 + 8.0 * a * x - 4.0 * a
        return 0.0

    scale = in_size / out_size
    M = np.zeros((out_size, in_size), dtype=np.float64)
    for o in range(out_size):
        src = (o + 0.5) * scale - 0.5
        f = math.floor(src)
        t = src - f
        coeffs = [w(t + 1.0), w(t), w(1.0 - t), w(2.0 - t)]
        for k in range(4):
            idx = min(max(f - 1 + k, 0), in_size - 1)
            M[o, idx] += coeffs[k]
    return M.astype(np.float32)


def _bicubic_flat(in_size: int, out_size: int) -> np.ndarray:
    """(in^2, out^2) separable bicubic matrix on flattened spatial dims."""
    M = _bicubic_1d(in_size, out_size)
    MF = np.einsum('up,vq->pquv', M, M).reshape(in_size * in_size, out_size * out_size)
    return MF.astype(np.float32)


def _shift_select() -> np.ndarray:
    """sel[k] (25, 9): picks the 3x3 'valid' window of a flattened 5x5 map for offset k."""
    sel = np.zeros((9, 25, 9), dtype=np.float32)
    for di in range(3):
        for dj in range(3):
            k = di * 3 + dj
            for i in range(3):
                for j in range(3):
                    sel[k, (i + di) * 5 + (j + dj), i * 3 + j] = 1.0
    return sel


@lru_cache(maxsize=None)
def _pool_consts_np(H: int, W: int):
    g1 = np.full((H * W, 1), 1.0 / (H * W), dtype=np.float32)                 # gap1 column
    g3up = (_adaptive_pool_matrix(H, W, 3) @ _bicubic_flat(3, 5)).astype(np.float32)  # (HW, 25)
    g5 = _adaptive_pool_matrix(H, W, 5)                                       # (HW, 25)
    sel = _shift_select()                                                     # (9, 25, 9)
    return g1, g3up, g5, sel


_DEVICE_CONST_CACHE = {}


def _pool_consts(H: int, W: int):
    """Device-resident pooling / selection constants, built once per (H, W)."""
    key = (H, W)
    if key not in _DEVICE_CONST_CACHE:
        _DEVICE_CONST_CACHE[key] = tuple(jnp.asarray(a) for a in _pool_consts_np(H, W))
    return _DEVICE_CONST_CACHE[key]


# ------------------------- host-side exact weight folding (glue) -------------------------

def _fold_weights(w1, wd1, wd2, w4, H, W):
    """Exact refactoring of the module's weights into 4 dense matmul operands.

    K1[c*HW+p, s*25+t] = w1a[s,c]/(H*W) + w1b[s,c]*G3up[p,t] + w1c[s,c]*G5[p,t]
    D1[s*25+p, s'*9+m] = delta(s,s') * sum_k wd1[s,k] * SEL_k[p,m]     (depthwise 5x5->3x3)
    D2[s*9+m,  s']     = delta(s,s') * wd2[s,m]                        (depthwise 3x3->1x1)
    W4T                = w4.T
    """
    S = w1.shape[0]
    C = w1.shape[1] // 3
    HW = H * W
    g1, g3up, g5, sel = _pool_consts(H, W)

    w1a, w1b, w1c = w1[:, :C], w1[:, C:2 * C], w1[:, 2 * C:]
    k1 = (jnp.einsum('sc,pt->cpst', w1a, jnp.broadcast_to(g1, (HW, 25)))
          + jnp.einsum('sc,pt->cpst', w1b, g3up)
          + jnp.einsum('sc,pt->cpst', w1c, g5)).reshape(C * HW, S * 25)

    eye_s = jnp.eye(S, dtype=jnp.float32)
    blocks = jnp.einsum('sk,kpm->spm', wd1, sel)                              # (S, 25, 9)
    d1 = (blocks[:, :, None, :] * eye_s[:, None, :, None]).reshape(S * 25, S * 9)
    d2 = (wd2[:, :, None] * eye_s[:, None, :]).reshape(S * 9, S)
    w4t = w4.T                                                                # (S, E*C)
    return k1, d1, d2, w4t


def _pick_block_b(B: int, cap: int = 64) -> int:
    """Batch block size: full batch when small, else a multiple-of-16 divisor <= cap."""
    if B <= cap:
        return B
    for bt in range(cap, 0, -1):
        if B % bt == 0 and bt % 16 == 0:
            return bt
    return B  # fallback: single block over the whole batch (always layout-legal)


# ----------------------------------------- kernel -----------------------------------------

def route_func_kernel(x_ref, k1_ref, d1_ref, d2_ref, w4t_ref, out_ref):
    # x_ref : (Bt, C*H*W)  bf16   k1_ref : (C*H*W, S*25) bf16
    # d1_ref: (S*25, S*9)  f32    d2_ref : (S*9, S)      f32    w4t_ref: (S, E*C) f32
    # out_ref: (Bt, E*C)   f32   (lane-dense output block)
    # pooling (1/3/5) + bicubic upsample + channel concat + Conv1x1(3C->S), f32 accumulation
    y1 = jnp.dot(x_ref[...], k1_ref[...], preferred_element_type=jnp.float32)   # (Bt, S*25)
    y1 = jnp.maximum(y1, 0.0)
    # depthwise Conv3x3 (valid, 5x5 -> 3x3) as one block-diagonal matmul
    y2 = jnp.maximum(jnp.dot(y1, d1_ref[...], preferred_element_type=jnp.float32), 0.0)  # (Bt, S*9)
    # depthwise Conv3x3 (valid, 3x3 -> 1x1) as one block-diagonal matmul
    y3 = jnp.maximum(jnp.dot(y2, d2_ref[...], preferred_element_type=jnp.float32), 0.0)  # (Bt, S)
    # Conv1x1 (S -> E*C) + sigmoid
    logits = jnp.dot(y3, w4t_ref[...], preferred_element_type=jnp.float32)               # (Bt, E*C)
    out_ref[...] = jax.nn.sigmoid(logits)


# ---------------------------------------- wrapper -----------------------------------------

def route_func_forward(x_nchw, w1, wd1, wd2, w4, *, block_b=None):
    """x_nchw: (B, C, H, W) f32; weights as in the PyTorch module (flattened).
    Returns (B, num_experts*C, 1, 1)."""
    B, C, H, W = x_nchw.shape
    S = w1.shape[0]
    OC = w4.shape[0]
    HW = H * W

    k1, d1, d2, w4t = _fold_weights(w1, wd1, wd2, w4, H, W)

    # bf16 inputs to the big matmul (f32 accumulation inside the kernel); halves x DMA bytes.
    x_wide = x_nchw.reshape(B, C * HW).astype(jnp.bfloat16)
    k1 = k1.astype(jnp.bfloat16)

    Bt = _pick_block_b(B) if block_b is None else block_b
    assert B % Bt == 0, "batch block must divide B"
    nb = B // Bt

    out = pl.pallas_call(
        route_func_kernel,
        out_shape=jax.ShapeDtypeStruct((B, OC), jnp.float32),
        grid=(nb,),
        in_specs=[
            pl.BlockSpec((Bt, C * HW), lambda b: (b, 0)),       # x block (batch-tiled)
            pl.BlockSpec((C * HW, S * 25), lambda b: (0, 0)),   # K1 (resident across grid)
            pl.BlockSpec((S * 25, S * 9), lambda b: (0, 0)),    # D1
            pl.BlockSpec((S * 9, S), lambda b: (0, 0)),         # D2
            pl.BlockSpec((S, OC), lambda b: (0, 0)),            # W4^T
        ],
        out_specs=pl.BlockSpec((Bt, OC), lambda b: (b, 0)),     # lane-dense (Bt, E*C)
        compiler_params=pltpu.CompilerParams(dimension_semantics=("parallel",)),
    )(x_wide, k1, d1, d2, w4t)
    return out.reshape(B, OC, 1, 1)


# ------------------------------- pure-JAX reference (f32) ---------------------------------

def route_func_reference(x_nchw, w1, wd1, wd2, w4):
    """Faithful f32 re-implementation of the PyTorch module's math (for cross-checking)."""
    B, C, H, W = x_nchw.shape
    x = x_nchw.reshape(B, C, H * W).astype(jnp.float32)
    g1, g3up, g5, sel = _pool_consts(H, W)

    a1 = jnp.einsum('bcs,su->bcu', x, g1)                 # AdaptiveAvgPool2d(1)
    a3 = jnp.einsum('bcs,st->bct', x, g3up)               # AdaptiveAvgPool2d(3) + bicubic->5x5
    a5 = jnp.einsum('bcs,st->bct', x, g5)                 # AdaptiveAvgPool2d(5)
    att = jnp.concatenate([jnp.broadcast_to(a1, a5.shape), a3, a5], axis=1)   # (B, 3C, 25)

    y1 = jax.nn.relu(jnp.einsum('oc,bct->bot', w1, att))                      # Conv1x1 + ReLU
    y2 = 0.0
    for k in range(9):                                                        # DW 3x3 (valid)
        y2 = y2 + wd1[None, :, k:k + 1] * jnp.einsum('bst,tm->bsm', y1, sel[k])
    y2 = jax.nn.relu(y2)
    y3 = jax.nn.relu(jnp.sum(wd2[None] * y2, axis=2, keepdims=True))          # DW 3x3 -> 1x1
    out = jax.nn.sigmoid(jnp.einsum('os,bsu->bou', w4, y3))                   # Conv1x1 + sigmoid
    return out.reshape(B, -1, 1, 1)


# ------------------------------------------ main ------------------------------------------

if __name__ == "__main__":
    # Small deterministic config (mode='A'): in_channels=16, num_experts=3, reduction=16
    B, C, H, W = 2, 16, 15, 15
    num_experts, reduction = 3, 16
    S = max(C // reduction, reduction)          # squeeze_channels = 16

    key = jax.random.PRNGKey(0)
    kx, kw1, kwd1, kwd2, kw4 = jax.random.split(key, 5)

    x = jax.random.normal(kx, (B, C, H, W), dtype=jnp.float32)

    # Conv weights (bias=False everywhere), stored pre-flattened as in the module:
    w1 = 0.1 * jax.random.normal(kw1, (S, 3 * C), dtype=jnp.float32)             # Conv2d(3C, S, 1)
    wd1 = 0.1 * jax.random.normal(kwd1, (S, 9), dtype=jnp.float32)               # DW Conv2d(S, 3, g=S)
    wd2 = 0.1 * jax.random.normal(kwd2, (S, 9), dtype=jnp.float32)               # DW Conv2d(S, 3, g=S)
    w4 = 0.1 * jax.random.normal(kw4, (num_experts * C, S), dtype=jnp.float32)   # Conv2d(S, E*C, 1)

    out = jax.block_until_ready(route_func_forward(x, w1, wd1, wd2, w4))
    ref = jax.block_until_ready(route_func_reference(x, w1, wd1, wd2, w4))

    assert out.shape == (B, num_experts * C, 1, 1)
    # Tolerance accounts for the deliberate bf16 cast of the big pooling/conv matmul
    # (perf-review item); f32 reference agrees well within this bound.
    np.testing.assert_allclose(np.asarray(out), np.asarray(ref), rtol=2e-2, atol=2e-2)

    print("KERNEL_OK")
</pallas_src>

<mosaic_0001>
module attributes {stable_mosaic.version = 11 : i64} {
  func.func @route_func_kernel(%arg0: i32, %arg1: memref<2x3600xbf16, #tpu.memory_space<vmem>>, %arg2: memref<3600x400xbf16, #tpu.memory_space<vmem>>, %arg3: memref<400x144xf32, #tpu.memory_space<vmem>>, %arg4: memref<144x16xf32, #tpu.memory_space<vmem>>, %arg5: memref<16x48xf32, #tpu.memory_space<vmem>>, %arg6: memref<2x48xf32, #tpu.memory_space<vmem>>) attributes {dimension_semantics = [#tpu.dimension_semantics<parallel>], iteration_bounds = array<i64: 1>, scalar_prefetch = 0 : i64, scratch_operands = 0 : i64, tpu.core_type = #tpu.core_type<tc>, window_params = [{transform_indices = @transform_0, window_bounds = array<i64: 2, 3600>}, {pipeline_mode = #tpu.pipeline_mode<synchronous>, transform_indices = @transform_1, window_bounds = array<i64: 3600, 400>}, {pipeline_mode = #tpu.pipeline_mode<synchronous>, transform_indices = @transform_2, window_bounds = array<i64: 400, 144>}, {pipeline_mode = #tpu.pipeline_mode<synchronous>, transform_indices = @transform_3, window_bounds = array<i64: 144, 16>}, {pipeline_mode = #tpu.pipeline_mode<synchronous>, transform_indices = @transform_4, window_bounds = array<i64: 16, 48>}, {transform_indices = @transform_5, window_bounds = array<i64: 2, 48>}]} {
    %c0 = arith.constant 0 : index
    %c0_0 = arith.constant 0 : index
    %0 = vector.load %arg1[%c0, %c0_0] : memref<2x3600xbf16, #tpu.memory_space<vmem>>, vector<2x3600xbf16>
    %c0_1 = arith.constant 0 : index
    %c0_2 = arith.constant 0 : index
    %1 = vector.load %arg2[%c0_1, %c0_2] : memref<3600x400xbf16, #tpu.memory_space<vmem>>, vector<3600x400xbf16>
    %cst = arith.constant dense<0.000000e+00> : vector<2x400xf32>
    %2 = tpu.matmul %0, %1, %cst {dimension_numbers = #tpu.dot_dimension_numbers<[1], [0], [0], [1], [0, 0, 1, 1], [], []>} : vector<2x3600xbf16>, vector<3600x400xbf16>, vector<2x400xf32> -> vector<2x400xf32>
    %cst_3 = arith.constant 0.000000e+00 : f32
    %3 = vector.broadcast %cst_3 : f32 to vector<2x400xf32>
    %4 = arith.maximumf %2, %3 : vector<2x400xf32>
    %c0_4 = arith.constant 0 : index
    %c0_5 = arith.constant 0 : index
    %5 = vector.load %arg3[%c0_4, %c0_5] : memref<400x144xf32, #tpu.memory_space<vmem>>, vector<400x144xf32>
    %cst_6 = arith.constant dense<0.000000e+00> : vector<2x144xf32>
    %6 = tpu.matmul %4, %5, %cst_6 {dimension_numbers = #tpu.dot_dimension_numbers<[1], [0], [0], [1], [0, 0, 1, 1], [], []>} : vector<2x400xf32>, vector<400x144xf32>, vector<2x144xf32> -> vector<2x144xf32>
    %cst_7 = arith.constant 0.000000e+00 : f32
    %7 = vector.broadcast %cst_7 : f32 to vector<2x144xf32>
    %8 = arith.maximumf %6, %7 : vector<2x144xf32>
    %c0_8 = arith.constant 0 : index
    %c0_9 = arith.constant 0 : index
    %9 = vector.load %arg4[%c0_8, %c0_9] : memref<144x16xf32, #tpu.memory_space<vmem>>, vector<144x16xf32>
    %cst_10 = arith.constant dense<0.000000e+00> : vector<2x16xf32>
    %10 = tpu.matmul %8, %9, %cst_10 {dimension_numbers = #tpu.dot_dimension_numbers<[1], [0], [0], [1], [0, 0, 1, 1], [], []>} : vector<2x144xf32>, vector<144x16xf32>, vector<2x16xf32> -> vector<2x16xf32>
    %cst_11 = arith.constant 0.000000e+00 : f32
    %11 = vector.broadcast %cst_11 : f32 to vector<2x16xf32>
    %12 = arith.maximumf %10, %11 : vector<2x16xf32>
    %c0_12 = arith.constant 0 : index
    %c0_13 = arith.constant 0 : index
    %13 = vector.load %arg5[%c0_12, %c0_13] : memref<16x48xf32, #tpu.memory_space<vmem>>, vector<16x48xf32>
    %cst_14 = arith.constant dense<0.000000e+00> : vector<2x48xf32>
    %14 = tpu.matmul %12, %13, %cst_14 {dimension_numbers = #tpu.dot_dimension_numbers<[1], [0], [0], [1], [0, 0, 1, 1], [], []>} : vector<2x16xf32>, vector<16x48xf32>, vector<2x48xf32> -> vector<2x48xf32>
    %15 = arith.negf %14 : vector<2x48xf32>
    %16 = math.exp %15 : vector<2x48xf32>
    %cst_15 = arith.constant 1.000000e+00 : f32
    %17 = vector.broadcast %cst_15 : f32 to vector<2x48xf32>
    %18 = arith.addf %17, %16 : vector<2x48xf32>
    %19 = arith.divf %17, %18 : vector<2x48xf32>
    %c0_16 = arith.constant 0 : index
    %c0_17 = arith.constant 0 : index
    %20 = vector.load %arg6[%c0_16, %c0_17] : memref<2x48xf32, #tpu.memory_space<vmem>>, vector<2x48xf32>
    tpu.vector_store %arg6[%c0_16, %c0_17], %19 {strides = array<i32>} : memref<2x48xf32, #tpu.memory_space<vmem>>, vector<2x48xf32>,
    return
  }
  func.func @transform_0(%arg0: i32) -> (i32, i32) {
    %c0_i32 = arith.constant 0 : i32
    %c0_i32_0 = arith.constant 0 : i32
    return %arg0, %c0_i32 : i32, i32
  }
  func.func @transform_1(%arg0: i32) -> (i32, i32) {
    %c0_i32 = arith.constant 0 : i32
    %c0_i32_0 = arith.constant 0 : i32
    %c0_i32_1 = arith.constant 0 : i32
    return %c0_i32, %c0_i32_0 : i32, i32
  }
  func.func @transform_2(%arg0: i32) -> (i32, i32) {
    %c0_i32 = arith.constant 0 : i32
    %c0_i32_0 = arith.constant 0 : i32
    %c0_i32_1 = arith.constant 0 : i32
    return %c0_i32, %c0_i32_0 : i32, i32
  }
  func.func @transform_3(%arg0: i32) -> (i32, i32) {
    %c0_i32 = arith.constant 0 : i32
    %c0_i32_0 = arith.constant 0 : i32
    %c0_i32_1 = arith.constant 0 : i32
    return %c0_i32, %c0_i32_0 : i32, i32
  }
  func.func @transform_4(%arg0: i32) -> (i32, i32) {
    %c0_i32 = arith.constant 0 : i32
    %c0_i32_0 = arith.constant 0 : i32
    %c0_i32_1 = arith.constant 0 : i32
    return %c0_i32, %c0_i32_0 : i32, i32
  }
  func.func @transform_5(%arg0: i32) -> (i32, i32) {
    %c0_i32 = arith.constant 0 : i32
    %c0_i32_0 = arith.constant 0 : i32
    return %arg0, %c0_i32 : i32, i32
  }
}

</mosaic_0001>

<llo_original>
// kernel: tpu_custom_call.1
$region0: #{tpu_custom_call.1}
  #allocation0 [shape = 'u32[]', space=smem, size = 0x4, offset = 0x4, fixed_abs, tag = 'smem constant byte address 0x4 - core index']
  #allocation1 [shape = 'u32[72,128]{1,0:T(1,128)}', space=vmem, size = 0x9000, scoped, tag = 'internal scratch']
  %s0 = inlined_call_operand.vmem [shape: bf16[2,3600], index: 0, kind: input, shape index: {}]
  %s1 = inlined_call_operand.vmem [shape: bf16[3600,400], index: 1, kind: input, shape index: {}]
  %s2 = inlined_call_operand.vmem [shape: f32[400,144], index: 2, kind: input, shape index: {}]
  %s3 = inlined_call_operand.vmem [shape: f32[144,16], index: 3, kind: input, shape index: {}]
  %s4 = inlined_call_operand.vmem [shape: f32[16,48], index: 4, kind: input, shape index: {}]
  %s5 = inlined_call_operand.hbm [shape: f32[2,48], index: 5, kind: output, shape index: {}]
  %s6 = sld [smem:[#allocation0]]
  $region30: #{tpu_custom_call.1} parent=0
    _
  %s8 = ssub.s32 1, %s6
  %s9 = scalar_select 0, %s8, %s6
  $region1: #{tpu_custom_call.1} parent=0
    #allocation2 [shape = 'u8[1024]{0}', space=vmem, size = 0x400, scoped, tag = 'output window, operand 0, single buffered']
    #allocation3 [shape = 's32[1]{0}', space=sflag, size = 0x4, scoped, tag = 'scoped memory for tpu_custom_call.1']
    %10 = vsyncpa [#allocation3], 0
    // Predicated region
    $region2: #{tpu_custom_call.1} parent=1 // pred_check
      _
    $region3: #{tpu_custom_call.1} parent=1 // pred_check_branch
      %12 = sbr.rel (0) target = $region5
    $region4: #{tpu_custom_call.1} parent=1 // pred_region
      _
    $region5: #{tpu_custom_call.1} parent=1 // pred_fallthru
      _
    // Predicated region
    $region6: #{tpu_custom_call.1} parent=1 // pred_check
      _
    $region7: #{tpu_custom_call.1} parent=1 // pred_check_branch
      %14 = sbr.rel (0) target = $region9
    $region8: #{tpu_custom_call.1} parent=1 // pred_region
      _
    $region9: #{tpu_custom_call.1} parent=1 // pred_fallthru
      _
    // Predicated region
    $region10: #{tpu_custom_call.1} parent=1 // pred_check
      _
    $region11: #{tpu_custom_call.1} parent=1 // pred_check_branch
      %16 = sbr.rel (0) target = $region13
    $region12: #{tpu_custom_call.1} parent=1 // pred_region
      _
    $region13: #{tpu_custom_call.1} parent=1 // pred_fallthru
      _
    // Predicated region
    $region14: #{tpu_custom_call.1} parent=1 // pred_check
      _
    $region15: #{tpu_custom_call.1} parent=1 // pred_check_branch
      %18 = sbr.rel (0) target = $region17
    $region16: #{tpu_custom_call.1} parent=1 // pred_region
      _
    $region17: #{tpu_custom_call.1} parent=1 // pred_fallthru
      _
    // Predicated region
    $region18: #{tpu_custom_call.1} parent=1 // pred_check
      _
    $region19: #{tpu_custom_call.1} parent=1 // pred_check_branch
      %20 = sbr.rel (0) target = $region21
    $region20: #{tpu_custom_call.1} parent=1 // pred_region
      _
    $region21: #{tpu_custom_call.1} parent=1 // pred_fallthru
      _
    %v22 = vld [vmem:[%s0] sm:$0xff]
    %v23 = vld [vmem:[%s0 + $0x8] sm:$0xff]
    %v24 = vld [vmem:[%s0 + $0x10] sm:$0xff]
    %v25 = vld [vmem:[%s0 + $0x18] sm:$0x1f]
    %v26 = vld [vmem:[%s1] sm:$0xff]
    %v27 = vld [vmem:[%s1 + $0x8] sm:$0xff]
    %v28 = vld [vmem:[%s1 + $0x10] sm:$0xff]
    %v29 = vld [vmem:[%s1 + $0x18] sm:$0xff]
    %v30 = vld [vmem:[%s1 + $0x20] sm:$0xff]
    %v31 = vld [vmem:[%s1 + $0x28] sm:$0xff]
    %v32 = vld [vmem:[%s1 + $0x30] sm:$0xff]
    %v33 = vld [vmem:[%s1 + $0x38] sm:$0xff]
    %v34 = vld [vmem:[%s1 + $0x40] sm:$0xff]
    %v35 = vld [vmem:[%s1 + $0x48] sm:$0xff]
    %v36 = vld [vmem:[%s1 + $0x50] sm:$0xff]
    %v37 = vld [vmem:[%s1 + $0x58] sm:$0xff]
    %v38 = vld [vmem:[%s1 + $0x60] sm:$0xff]
    %v39 = vld [vmem:[%s1 + $0x68] sm:$0xff]
    %v40 = vld [vmem:[%s1 + $0x70] sm:$0xff]
    %v41 = vld [vmem:[%s1 + $0x78] sm:$0xff]
    %v42 = vld [vmem:[%s1 + $0x80] sm:$0xff]
    %v43 = vld [vmem:[%s1 + $0x88] sm:$0xff]
    %v44 = vld [vmem:[%s1 + $0x90] sm:$0xff]
    %v45 = vld [vmem:[%s1 + $0x98] sm:$0xff]
    %v46 = vld [vmem:[%s1 + $0xa0] sm:$0xff]
    %v47 = vld [vmem:[%s1 + $0xa8] sm:$0xff]
    %v48 = vld [vmem:[%s1 + $0xb0] sm:$0xff]
    %v49 = vld [vmem:[%s1 + $0xb8] sm:$0xff]
    %v50 = vld [vmem:[%s1 + $0xc0] sm:$0xff]
    %v51 = vld [vmem:[%s1 + $0xc8] sm:$0xff]
    %v52 = vld [vmem:[%s1 + $0xd0] sm:$0xff]
    %v53 = vld [vmem:[%s1 + $0xd8] sm:$0xff]
    %v54 = vld [vmem:[%s1 + $0xe0] sm:$0xff]
    %v55 = vld [vmem:[%s1 + $0xe8] sm:$0xff]
    %v56 = vld [vmem:[%s1 + $0xf0] sm:$0xff]
    %v57 = vld [vmem:[%s1 + $0xf8] sm:$0xff]
    %v58 = vld [vmem:[%s1 + $0x100] sm:$0xff]
    %v59 = vld [vmem:[%s1 + $0x108] sm:$0xff]
    %v60 = vld [vmem:[%s1 + $0x110] sm:$0xff]
    %v61 = vld [vmem:[%s1 + $0x118] sm:$0xff]
    %v62 = vld [vmem:[%s1 + $0x120] sm:$0xff]
    %v63 = vld [vmem:[%s1 + $0x128] sm:$0xff]
    %v64 = vld [vmem:[%s1 + $0x130] sm:$0xff]
    %v65 = vld [vmem:[%s1 + $0x138] sm:$0xff]
    %v66 = vld [vmem:[%s1 + $0x140] sm:$0xff]
    %v67 = vld [vmem:[%s1 + $0x148] sm:$0xff]
    %v68 = vld [vmem:[%s1 + $0x150] sm:$0xff]
    %v69 = vld [vmem:[%s1 + $0x158] sm:$0xff]
    %v70 = vld [vmem:[%s1 + $0x160] sm:$0xff]
    %v71 = vld [vmem:[%s1 + $0x168] sm:$0xff]
    %v72 = vld [vmem:[%s1 + $0x170] sm:$0xff]
    %v73 = vld [vmem:[%s1 + $0x178] sm:$0xff]
    %v74 = vld [vmem:[%s1 + $0x180] sm:$0xff]
    %v75 = vld [vmem:[%s1 + $0x188] sm:$0xff]
    %v76 = vld [vmem:[%s1 + $0x190] sm:$0xff]
    %v77 = vld [vmem:[%s1 + $0x198] sm:$0xff]
    %v78 = vld [vmem:[%s1 + $0x1a0] sm:$0xff]
    %v79 = vld [vmem:[%s1 + $0x1a8] sm:$0xff]
    %v80 = vld [vmem:[%s1 + $0x1b0] sm:$0xff]
    %v81 = vld [vmem:[%s1 + $0x1b8] sm:$0xff]
    %v82 = vld [vmem:[%s1 + $0x1c0] sm:$0xff]
    %v83 = vld [vmem:[%s1 + $0x1c8] sm:$0xff]
    %v84 = vld [vmem:[%s1 + $0x1d0] sm:$0xff]
    %v85 = vld [vmem:[%s1 + $0x1d8] sm:$0xff]
    %v86 = vld [vmem:[%s1 + $0x1e0] sm:$0xff]
    %v87 = vld [vmem:[%s1 + $0x1e8] sm:$0xff]
    %v88 = vld [vmem:[%s1 + $0x1f0] sm:$0xff]
    %v89 = vld [vmem:[%s1 + $0x1f8] sm:$0xff]
    %v90 = vld [vmem:[%s1 + $0x200] sm:$0xff]
    %v91 = vld [vmem:[%s1 + $0x208] sm:$0xff]
    %v92 = vld [vmem:[%s1 + $0x210] sm:$0xff]
    %v93 = vld [vmem:[%s1 + $0x218] sm:$0xff]
    %v94 = vld [vmem:[%s1 + $0x220] sm:$0xff]
    %v95 = vld [vmem:[%s1 + $0x228] sm:$0xff]
    %v96 = vld [vmem:[%s1 + $0x230] sm:$0xff]
    %v97 = vld [vmem:[%s1 + $0x238] sm:$0xff]
    %v98 = vld [vmem:[%s1 + $0x240] sm:$0xff]
    %v99 = vld [vmem:[%s1 + $0x248] sm:$0xff]
    %v100 = vld [vmem:[%s1 + $0x250] sm:$0xff]
    %v101 = vld [vmem:[%s1 + $0x258] sm:$0xff]
    %v102 = vld [vmem:[%s1 + $0x260] sm:$0xff]
    %v103 = vld [vmem:[%s1 + $0x268] sm:$0xff]
    %v104 = vld [vmem:[%s1 + $0x270] sm:$0xff]
    %v105 = vld [vmem:[%s1 + $0x278] sm:$0xff]
    %v106 = vld [vmem:[%s1 + $0x280] sm:$0xff]
    %v107 = vld [vmem:[%s1 + $0x288] sm:$0xff]
    %v108 = vld [vmem:[%s1 + $0x290] sm:$0xff]
    %v109 = vld [vmem:[%s1 + $0x298] sm:$0xff]
    %v110 = vld [vmem:[%s1 + $0x2a0] sm:$0xff]
    %v111 = vld [vmem:[%s1 + $0x2a8] sm:$0xff]
    %v112 = vld [vmem:[%s1 + $0x2b0] sm:$0xff]
    %v113 = vld [vmem:[%s1 + $0x2b8] sm:$0xff]
    %v114 = vld [vmem:[%s1 + $0x2c0] sm:$0xff]
    %v115 = vld [vmem:[%s1 + $0x2c8] sm:$0xff]
    %v116 = vld [vmem:[%s1 + $0x2d0] sm:$0xff]
    %v117 = vld [vmem:[%s1 + $0x2d8] sm:$0xff]
    %v118 = vld [vmem:[%s1 + $0x2e0] sm:$0xff]
    %v119 = vld [vmem:[%s1 + $0x2e8] sm:$0xff]
    %v120 = vld [vmem:[%s1 + $0x2f0] sm:$0xff]
    %v121 = vld [vmem:[%s1 + $0x2f8] sm:$0xff]
    %v122 = vld [vmem:[%s1 + $0x300] sm:$0xff]
    %v123 = vld [vmem:[%s1 + $0x308] sm:$0xff]
    %v124 = vld [vmem:[%s1 + $0x310] sm:$0xff]
    %v125 = vld [vmem:[%s1 + $0x318] sm:$0xff]
    %v126 = vld [vmem:[%s1 + $0x320] sm:$0xff]
    %v127 = vld [vmem:[%s1 + $0x328] sm:$0xff]
    %v128 = vld [vmem:[%s1 + $0x330] sm:$0xff]
    %v129 = vld [vmem:[%s1 + $0x338] sm:$0xff]
    %v130 = vld [vmem:[%s1 + $0x340] sm:$0xff]
    %v131 = vld [vmem:[%s1 + $0x348] sm:$0xff]
    %v132 = vld [vmem:[%s1 + $0x350] sm:$0xff]
    %v133 = vld [vmem:[%s1 + $0x358] sm:$0xff]
    %v134 = vld [vmem:[%s1 + $0x360] sm:$0xff]
    %v135 = vld [vmem:[%s1 + $0x368] sm:$0xff]
    %v136 = vld [vmem:[%s1 + $0x370] sm:$0xff]
    %v137 = vld [vmem:[%s1 + $0x378] sm:$0xff]
    %v138 = vld [vmem:[%s1 + $0x380] sm:$0xff]
    %v139 = vld [vmem:[%s1 + $0x388] sm:$0xff]
    %v140 = vld [vmem:[%s1 + $0x390] sm:$0xff]
    %v141 = vld [vmem:[%s1 + $0x398] sm:$0xff]
    %v142 = vld [vmem:[%s1 + $0x3a0] sm:$0xff]
    %v143 = vld [vmem:[%s1 + $0x3a8] sm:$0xff]
    %v144 = vld [vmem:[%s1 + $0x3b0] sm:$0xff]
    %v145 = vld [vmem:[%s1 + $0x3b8] sm:$0xff]
    %v146 = vld [vmem:[%s1 + $0x3c0] sm:$0xff]
    %v147 = vld [vmem:[%s1 + $0x3c8] sm:$0xff]
    %v148 = vld [vmem:[%s1 + $0x3d0] sm:$0xff]
    %v149 = vld [vmem:[%s1 + $0x3d8] sm:$0xff]
    %v150 = vld [vmem:[%s1 + $0x3e0] sm:$0xff]
    %v151 = vld [vmem:[%s1 + $0x3e8] sm:$0xff]
    %v152 = vld [vmem:[%s1 + $0x3f0] sm:$0xff]
    %v153 = vld [vmem:[%s1 + $0x3f8] sm:$0xff]
    %v154 = vld [vmem:[%s1 + $0x400] sm:$0xff]
    %v155 = vld [vmem:[%s1 + $0x408] sm:$0xff]
    %v156 = vld [vmem:[%s1 + $0x410] sm:$0xff]
    %v157 = vld [vmem:[%s1 + $0x418] sm:$0xff]
    %v158 = vld [vmem:[%s1 + $0x420] sm:$0xff]
    %v159 = vld [vmem:[%s1 + $0x428] sm:$0xff]
    %v160 = vld [vmem:[%s1 + $0x430] sm:$0xff]
    %v161 = vld [vmem:[%s1 + $0x438] sm:$0xff]
    %v162 = vld [vmem:[%s1 + $0x440] sm:$0xff]
    %v163 = vld [vmem:[%s1 + $0x448] sm:$0xff]
    %v164 = vld [vmem:[%s1 + $0x450] sm:$0xff]
    %v165 = vld [vmem:[%s1 + $0x458] sm:$0xff]
    %v166 = vld [vmem:[%s1 + $0x460] sm:$0xff]
    %v167 = vld [vmem:[%s1 + $0x468] sm:$0xff]
    %v168 = vld [vmem:[%s1 + $0x470] sm:$0xff]
    %v169 = vld [vmem:[%s1 + $0x478] sm:$0xff]
    %v170 = vld [vmem:[%s1 + $0x480] sm:$0xff]
    %v171 = vld [vmem:[%s1 + $0x488] sm:$0xff]
    %v172 = vld [vmem:[%s1 + $0x490] sm:$0xff]
    %v173 = vld [vmem:[%s1 + $0x498] sm:$0xff]
    %v174 = vld [vmem:[%s1 + $0x4a0] sm:$0xff]
    %v175 = vld [vmem:[%s1 + $0x4a8] sm:$0xff]
    %v176 = vld [vmem:[%s1 + $0x4b0] sm:$0xff]
    %v177 = vld [vmem:[%s1 + $0x4b8] sm:$0xff]
    %v178 = vld [vmem:[%s1 + $0x4c0] sm:$0xff]
    %v179 = vld [vmem:[%s1 + $0x4c8] sm:$0xff]
    %v180 = vld [vmem:[%s1 + $0x4d0] sm:$0xff]
    %v181 = vld [vmem:[%s1 + $0x4d8] sm:$0xff]
    %v182 = vld [vmem:[%s1 + $0x4e0] sm:$0xff]
    %v183 = vld [vmem:[%s1 + $0x4e8] sm:$0xff]
    %v184 = vld [vmem:[%s1 + $0x4f0] sm:$0xff]
    %v185 = vld [vmem:[%s1 + $0x4f8] sm:$0xff]
    %v186 = vld [vmem:[%s1 + $0x500] sm:$0xff]
    %v187 = vld [vmem:[%s1 + $0x508] sm:$0xff]
    %v188 = vld [vmem:[%s1 + $0x510] sm:$0xff]
    %v189 = vld [vmem:[%s1 + $0x518] sm:$0xff]
    %v190 = vld [vmem:[%s1 + $0x520] sm:$0xff]
    %v191 = vld [vmem:[%s1 + $0x528] sm:$0xff]
    %v192 = vld [vmem:[%s1 + $0x530] sm:$0xff]
    %v193 = vld [vmem:[%s1 + $0x538] sm:$0xff]
    %v194 = vld [vmem:[%s1 + $0x540] sm:$0xff]
    %v195 = vld [vmem:[%s1 + $0x548] sm:$0xff]
    %v196 = vld [vmem:[%s1 + $0x550] sm:$0xff]
    %v197 = vld [vmem:[%s1 + $0x558] sm:$0xff]
    %v198 = vld [vmem:[%s1 + $0x560] sm:$0xff]
    %v199 = vld [vmem:[%s1 + $0x568] sm:$0xff]
    %v200 = vld [vmem:[%s1 + $0x570] sm:$0xff]
    %v201 = vld [vmem:[%s1 + $0x578] sm:$0xff]
    %v202 = vld [vmem:[%s1 + $0x580] sm:$0xff]
    %v203 = vld [vmem:[%s1 + $0x588] sm:$0xff]
    %v204 = vld [vmem:[%s1 + $0x590] sm:$0xff]
    %v205 = vld [vmem:[%s1 + $0x598] sm:$0xff]
    %v206 = vld [vmem:[%s1 + $0x5a0] sm:$0xff]
    %v207 = vld [vmem:[%s1 + $0x5a8] sm:$0xff]
    %v208 = vld [vmem:[%s1 + $0x5b0] sm:$0xff]
    %v209 = vld [vmem:[%s1 + $0x5b8] sm:$0xff]
    %v210 = vld [vmem:[%s1 + $0x5c0] sm:$0xff]
    %v211 = vld [vmem:[%s1 + $0x5c8] sm:$0xff]
    %v212 = vld [vmem:[%s1 + $0x5d0] sm:$0xff]
    %v213 = vld [vmem:[%s1 + $0x5d8] sm:$0xff]
    %v214 = vld [vmem:[%s1 + $0x5e0] sm:$0xff]
    %v215 = vld [vmem:[%s1 + $0x5e8] sm:$0xff]
    %v216 = vld [vmem:[%s1 + $0x5f0] sm:$0xff]
    %v217 = vld [vmem:[%s1 + $0x5f8] sm:$0xff]
    %v218 = vld [vmem:[%s1 + $0x600] sm:$0xff]
    %v219 = vld [vmem:[%s1 + $0x608] sm:$0xff]
    %v220 = vld [vmem:[%s1 + $0x610] sm:$0xff]
    %v221 = vld [vmem:[%s1 + $0x618] sm:$0xff]
    %v222 = vld [vmem:[%s1 + $0x620] sm:$0xff]
    %v223 = vld [vmem:[%s1 + $0x628] sm:$0xff]
    %v224 = vld [vmem:[%s1 + $0x630] sm:$0xff]
    %v225 = vld [vmem:[%s1 + $0x638] sm:$0xff]
    %v226 = vld [vmem:[%s1 + $0x640] sm:$0xff]
    %v227 = vld [vmem:[%s1 + $0x648] sm:$0xff]
    %v228 = vld [vmem:[%s1 + $0x650] sm:$0xff]
    %v229 = vld [vmem:[%s1 + $0x658] sm:$0xff]
    %v230 = vld [vmem:[%s1 + $0x660] sm:$0xff]
    %v231 = vld [vmem:[%s1 + $0x668] sm:$0xff]
    %v232 = vld [vmem:[%s1 + $0x670] sm:$0xff]
    %v233 = vld [vmem:[%s1 + $0x678] sm:$0xff]
    %v234 = vld [vmem:[%s1 + $0x680] sm:$0xff]
    %v235 = vld [vmem:[%s1 + $0x688] sm:$0xff]
    %v236 = vld [vmem:[%s1 + $0x690] sm:$0xff]
    %v237 = vld [vmem:[%s1 + $0x698] sm:$0xff]
    %v238 = vld [vmem:[%s1 + $0x6a0] sm:$0xff]
    %v239 = vld [vmem:[%s1 + $0x6a8] sm:$0xff]
    %v240 = vld [vmem:[%s1 + $0x6b0] sm:$0xff]
    %v241 = vld [vmem:[%s1 + $0x6b8] sm:$0xff]
    %v242 = vld [vmem:[%s1 + $0x6c0] sm:$0xff]
    %v243 = vld [vmem:[%s1 + $0x6c8] sm:$0xff]
    %v244 = vld [vmem:[%s1 + $0x6d0] sm:$0xff]
    %v245 = vld [vmem:[%s1 + $0x6d8] sm:$0xff]
    %v246 = vld [vmem:[%s1 + $0x6e0] sm:$0xff]
    %v247 = vld [vmem:[%s1 + $0x6e8] sm:$0xff]
    %v248 = vld [vmem:[%s1 + $0x6f0] sm:$0xff]
    %v249 = vld [vmem:[%s1 + $0x6f8] sm:$0xff]
    %v250 = vld [vmem:[%s1 + $0x700] sm:$0xff]
    %v251 = vld [vmem:[%s1 + $0x708] sm:$0xff]
    %v252 = vld [vmem:[%s1 + $0x710] sm:$0xff]
    %v253 = vld [vmem:[%s1 + $0x718] sm:$0xff]
    %v254 = vld [vmem:[%s1 + $0x720] sm:$0xff]
    %v255 = vld [vmem:[%s1 + $0x728] sm:$0xff]
    %v256 = vld [vmem:[%s1 + $0x730] sm:$0xff]
    %v257 = vld [vmem:[%s1 + $0x738] sm:$0xff]
    %v258 = vld [vmem:[%s1 + $0x740] sm:$0xff]
    %v259 = vld [vmem:[%s1 + $0x748] sm:$0xff]
    %v260 = vld [vmem:[%s1 + $0x750] sm:$0xff]
    %v261 = vld [vmem:[%s1 + $0x758] sm:$0xff]
    %v262 = vld [vmem:[%s1 + $0x760] sm:$0xff]
    %v263 = vld [vmem:[%s1 + $0x768] sm:$0xff]
    %v264 = vld [vmem:[%s1 + $0x770] sm:$0xff]
    %v265 = vld [vmem:[%s1 + $0x778] sm:$0xff]
    %v266 = vld [vmem:[%s1 + $0x780] sm:$0xff]
    %v267 = vld [vmem:[%s1 + $0x788] sm:$0xff]
    %v268 = vld [vmem:[%s1 + $0x790] sm:$0xff]
    %v269 = vld [vmem:[%s1 + $0x798] sm:$0xff]
    %v270 = vld [vmem:[%s1 + $0x7a0] sm:$0xff]
    %v271 = vld [vmem:[%s1 + $0x7a8] sm:$0xff]
    %v272 = vld [vmem:[%s1 + $0x7b0] sm:$0xff]
    %v273 = vld [vmem:[%s1 + $0x7b8] sm:$0xff]
    %v274 = vld [vmem:[%s1 + $0x7c0] sm:$0xff]
    %v275 = vld [vmem:[%s1 + $0x7c8] sm:$0xff]
    %v276 = vld [vmem:[%s1 + $0x7d0] sm:$0xff]
    %v277 = vld [vmem:[%s1 + $0x7d8] sm:$0xff]
    %v278 = vld [vmem:[%s1 + $0x7e0] sm:$0xff]
    %v279 = vld [vmem:[%s1 + $0x7e8] sm:$0xff]
    %v280 = vld [vmem:[%s1 + $0x7f0] sm:$0xff]
    %v281 = vld [vmem:[%s1 + $0x7f8] sm:$0xff]
    %v282 = vld [vmem:[%s1 + $0x800] sm:$0xff]
    %v283 = vld [vmem:[%s1 + $0x808] sm:$0xff]
    %v284 = vld [vmem:[%s1 + $0x810] sm:$0xff]
    %v285 = vld [vmem:[%s1 + $0x818] sm:$0xff]
    %v286 = vld [vmem:[%s1 + $0x820] sm:$0xff]
    %v287 = vld [vmem:[%s1 + $0x828] sm:$0xff]
    %v288 = vld [vmem:[%s1 + $0x830] sm:$0xff]
    %v289 = vld [vmem:[%s1 + $0x838] sm:$0xff]
    %v290 = vld [vmem:[%s1 + $0x840] sm:$0xff]
    %v291 = vld [vmem:[%s1 + $0x848] sm:$0xff]
    %v292 = vld [vmem:[%s1 + $0x850] sm:$0xff]
    %v293 = vld [vmem:[%s1 + $0x858] sm:$0xff]
    %v294 = vld [vmem:[%s1 + $0x860] sm:$0xff]
    %v295 = vld [vmem:[%s1 + $0x868] sm:$0xff]
    %v296 = vld [vmem:[%s1 + $0x870] sm:$0xff]
    %v297 = vld [vmem:[%s1 + $0x878] sm:$0xff]
    %v298 = vld [vmem:[%s1 + $0x880] sm:$0xff]
    %v299 = vld [vmem:[%s1 + $0x888] sm:$0xff]
    %v300 = vld [vmem:[%s1 + $0x890] sm:$0xff]
    %v301 = vld [vmem:[%s1 + $0x898] sm:$0xff]
    %v302 = vld [vmem:[%s1 + $0x8a0] sm:$0xff]
    %v303 = vld [vmem:[%s1 + $0x8a8] sm:$0xff]
    %v304 = vld [vmem:[%s1 + $0x8b0] sm:$0xff]
    %v305 = vld [vmem:[%s1 + $0x8b8] sm:$0xff]
    %v306 = vld [vmem:[%s1 + $0x8c0] sm:$0xff]
    %v307 = vld [vmem:[%s1 + $0x8c8] sm:$0xff]
    %v308 = vld [vmem:[%s1 + $0x8d0] sm:$0xff]
    %v309 = vld [vmem:[%s1 + $0x8d8] sm:$0xff]
    %v310 = vld [vmem:[%s1 + $0x8e0] sm:$0xff]
    %v311 = vld [vmem:[%s1 + $0x8e8] sm:$0xff]
    %v312 = vld [vmem:[%s1 + $0x8f0] sm:$0xff]
    %v313 = vld [vmem:[%s1 + $0x8f8] sm:$0xff]
    %v314 = vld [vmem:[%s1 + $0x900] sm:$0xff]
    %v315 = vld [vmem:[%s1 + $0x908] sm:$0xff]
    %v316 = vld [vmem:[%s1 + $0x910] sm:$0xff]
    %v317 = vld [vmem:[%s1 + $0x918] sm:$0xff]
    %v318 = vld [vmem:[%s1 + $0x920] sm:$0xff]
    %v319 = vld [vmem:[%s1 + $0x928] sm:$0xff]
    %v320 = vld [vmem:[%s1 + $0x930] sm:$0xff]
    %v321 = vld [vmem:[%s1 + $0x938] sm:$0xff]
    %v322 = vld [vmem:[%s1 + $0x940] sm:$0xff]
    %v323 = vld [vmem:[%s1 + $0x948] sm:$0xff]
    %v324 = vld [vmem:[%s1 + $0x950] sm:$0xff]
    %v325 = vld [vmem:[%s1 + $0x958] sm:$0xff]
    %v326 = vld [vmem:[%s1 + $0x960] sm:$0xff]
    %v327 = vld [vmem:[%s1 + $0x968] sm:$0xff]
    %v328 = vld [vmem:[%s1 + $0x970] sm:$0xff]
    %v329 = vld [vmem:[%s1 + $0x978] sm:$0xff]
    %v330 = vld [vmem:[%s1 + $0x980] sm:$0xff]
    %v331 = vld [vmem:[%s1 + $0x988] sm:$0xff]
    %v332 = vld [vmem:[%s1 + $0x990] sm:$0xff]
    %v333 = vld [vmem:[%s1 + $0x998] sm:$0xff]
    %v334 = vld [vmem:[%s1 + $0x9a0] sm:$0xff]
    %v335 = vld [vmem:[%s1 + $0x9a8] sm:$0xff]
    %v336 = vld [vmem:[%s1 + $0x9b0] sm:$0xff]
    %v337 = vld [vmem:[%s1 + $0x9b8] sm:$0xff]
    %v338 = vld [vmem:[%s1 + $0x9c0] sm:$0xff]
    %v339 = vld [vmem:[%s1 + $0x9c8] sm:$0xff]
    %v340 = vld [vmem:[%s1 + $0x9d0] sm:$0xff]
    %v341 = vld [vmem:[%s1 + $0x9d8] sm:$0xff]
    %v342 = vld [vmem:[%s1 + $0x9e0] sm:$0xff]
    %v343 = vld [vmem:[%s1 + $0x9e8] sm:$0xff]
    %v344 = vld [vmem:[%s1 + $0x9f0] sm:$0xff]
    %v345 = vld [vmem:[%s1 + $0x9f8] sm:$0xff]
    %v346 = vld [vmem:[%s1 + $0xa00] sm:$0xff]
    %v347 = vld [vmem:[%s1 + $0xa08] sm:$0xff]
    %v348 = vld [vmem:[%s1 + $0xa10] sm:$0xff]
    %v349 = vld [vmem:[%s1 + $0xa18] sm:$0xff]
    %v350 = vld [vmem:[%s1 + $0xa20] sm:$0xff]
    %v351 = vld [vmem:[%s1 + $0xa28] sm:$0xff]
    %v352 = vld [vmem:[%s1 + $0xa30] sm:$0xff]
    %v353 = vld [vmem:[%s1 + $0xa38] sm:$0xff]
    %v354 = vld [vmem:[%s1 + $0xa40] sm:$0xff]
    %v355 = vld [vmem:[%s1 + $0xa48] sm:$0xff]
    %v356 = vld [vmem:[%s1 + $0xa50] sm:$0xff]
    %v357 = vld [vmem:[%s1 + $0xa58] sm:$0xff]
    %v358 = vld [vmem:[%s1 + $0xa60] sm:$0xff]
    %v359 = vld [vmem:[%s1 + $0xa68] sm:$0xff]
    %v360 = vld [vmem:[%s1 + $0xa70] sm:$0xff]
    %v361 = vld [vmem:[%s1 + $0xa78] sm:$0xff]
    %v362 = vld [vmem:[%s1 + $0xa80] sm:$0xff]
    %v363 = vld [vmem:[%s1 + $0xa88] sm:$0xff]
    %v364 = vld [vmem:[%s1 + $0xa90] sm:$0xff]
    %v365 = vld [vmem:[%s1 + $0xa98] sm:$0xff]
    %v366 = vld [vmem:[%s1 + $0xaa0] sm:$0xff]
    %v367 = vld [vmem:[%s1 + $0xaa8] sm:$0xff]
    %v368 = vld [vmem:[%s1 + $0xab0] sm:$0xff]
    %v369 = vld [vmem:[%s1 + $0xab8] sm:$0xff]
    %v370 = vld [vmem:[%s1 + $0xac0] sm:$0xff]
    %v371 = vld [vmem:[%s1 + $0xac8] sm:$0xff]
    %v372 = vld [vmem:[%s1 + $0xad0] sm:$0xff]
    %v373 = vld [vmem:[%s1 + $0xad8] sm:$0xff]
    %v374 = vld [vmem:[%s1 + $0xae0] sm:$0xff]
    %v375 = vld [vmem:[%s1 + $0xae8] sm:$0xff]
    %v376 = vld [vmem:[%s1 + $0xaf0] sm:$0xff]
    %v377 = vld [vmem:[%s1 + $0xaf8] sm:$0xff]
    %v378 = vld [vmem:[%s1 + $0xb00] sm:$0xff]
    %v379 = vld [vmem:[%s1 + $0xb08] sm:$0xff]
    %v380 = vld [vmem:[%s1 + $0xb10] sm:$0xff]
    %v381 = vld [vmem:[%s1 + $0xb18] sm:$0xff]
    %v382 = vld [vmem:[%s1 + $0xb20] sm:$0xff]
    %v383 = vld [vmem:[%s1 + $0xb28] sm:$0xff]
    %v384 = vld [vmem:[%s1 + $0xb30] sm:$0xff]
    %v385 = vld [vmem:[%s1 + $0xb38] sm:$0xff]
    %v386 = vld [vmem:[%s1 + $0xb40] sm:$0xff]
    %v387 = vld [vmem:[%s1 + $0xb48] sm:$0xff]
    %v388 = vld [vmem:[%s1 + $0xb50] sm:$0xff]
    %v389 = vld [vmem:[%s1 + $0xb58] sm:$0xff]
    %v390 = vld [vmem:[%s1 + $0xb60] sm:$0xff]
    %v391 = vld [vmem:[%s1 + $0xb68] sm:$0xff]
    %v392 = vld [vmem:[%s1 + $0xb70] sm:$0xff]
    %v393 = vld [vmem:[%s1 + $0xb78] sm:$0xff]
    %v394 = vld [vmem:[%s1 + $0xb80] sm:$0xff]
    %v395 = vld [vmem:[%s1 + $0xb88] sm:$0xff]
    %v396 = vld [vmem:[%s1 + $0xb90] sm:$0xff]
    %v397 = vld [vmem:[%s1 + $0xb98] sm:$0xff]
    %v398 = vld [vmem:[%s1 + $0xba0] sm:$0xff]
    %v399 = vld [vmem:[%s1 + $0xba8] sm:$0xff]
    %v400 = vld [vmem:[%s1 + $0xbb0] sm:$0xff]
    %v401 = vld [vmem:[%s1 + $0xbb8] sm:$0xff]
    %v402 = vld [vmem:[%s1 + $0xbc0] sm:$0xff]
    %v403 = vld [vmem:[%s1 + $0xbc8] sm:$0xff]
    %v404 = vld [vmem:[%s1 + $0xbd0] sm:$0xff]
    %v405 = vld [vmem:[%s1 + $0xbd8] sm:$0xff]
    %v406 = vld [vmem:[%s1 + $0xbe0] sm:$0xff]
    %v407 = vld [vmem:[%s1 + $0xbe8] sm:$0xff]
    %v408 = vld [vmem:[%s1 + $0xbf0] sm:$0xff]
    %v409 = vld [vmem:[%s1 + $0xbf8] sm:$0xff]
    %v410 = vld [vmem:[%s1 + $0xc00] sm:$0xff]
    %v411 = vld [vmem:[%s1 + $0xc08] sm:$0xff]
    %v412 = vld [vmem:[%s1 + $0xc10] sm:$0xff]
    %v413 = vld [vmem:[%s1 + $0xc18] sm:$0xff]
    %v414 = vld [vmem:[%s1 + $0xc20] sm:$0xff]
    %v415 = vld [vmem:[%s1 + $0xc28] sm:$0xff]
    %v416 = vld [vmem:[%s1 + $0xc30] sm:$0xff]
    %v417 = vld [vmem:[%s1 + $0xc38] sm:$0xff]
    %v418 = vld [vmem:[%s1 + $0xc40] sm:$0xff]
    %v419 = vld [vmem:[%s1 + $0xc48] sm:$0xff]
    %v420 = vld [vmem:[%s1 + $0xc50] sm:$0xff]
    %v421 = vld [vmem:[%s1 + $0xc58] sm:$0xff]
    %v422 = vld [vmem:[%s1 + $0xc60] sm:$0xff]
    %v423 = vld [vmem:[%s1 + $0xc68] sm:$0xff]
    %v424 = vld [vmem:[%s1 + $0xc70] sm:$0xff]
    %v425 = vld [vmem:[%s1 + $0xc78] sm:$0xff]
    %v426 = vld [vmem:[%s1 + $0xc80] sm:$0xff]
    %v427 = vld [vmem:[%s1 + $0xc88] sm:$0xff]
    %v428 = vld [vmem:[%s1 + $0xc90] sm:$0xff]
    %v429 = vld [vmem:[%s1 + $0xc98] sm:$0xff]
    %v430 = vld [vmem:[%s1 + $0xca0] sm:$0xff]
    %v431 = vld [vmem:[%s1 + $0xca8] sm:$0xff]
    %v432 = vld [vmem:[%s1 + $0xcb0] sm:$0xff]
    %v433 = vld [vmem:[%s1 + $0xcb8] sm:$0xff]
    %v434 = vld [vmem:[%s1 + $0xcc0] sm:$0xff]
    %v435 = vld [vmem:[%s1 + $0xcc8] sm:$0xff]
    %v436 = vld [vmem:[%s1 + $0xcd0] sm:$0xff]
    %v437 = vld [vmem:[%s1 + $0xcd8] sm:$0xff]
    %v438 = vld [vmem:[%s1 + $0xce0] sm:$0xff]
    %v439 = vld [vmem:[%s1 + $0xce8] sm:$0xff]
    %v440 = vld [vmem:[%s1 + $0xcf0] sm:$0xff]
    %v441 = vld [vmem:[%s1 + $0xcf8] sm:$0xff]
    %v442 = vld [vmem:[%s1 + $0xd00] sm:$0xff]
    %v443 = vld [vmem:[%s1 + $0xd08] sm:$0xff]
    %v444 = vld [vmem:[%s1 + $0xd10] sm:$0xff]
    %v445 = vld [vmem:[%s1 + $0xd18] sm:$0xff]
    %v446 = vld [vmem:[%s1 + $0xd20] sm:$0xff]
    %v447 = vld [vmem:[%s1 + $0xd28] sm:$0xff]
    %v448 = vld [vmem:[%s1 + $0xd30] sm:$0xff]
    %v449 = vld [vmem:[%s1 + $0xd38] sm:$0xff]
    %v450 = vld [vmem:[%s1 + $0xd40] sm:$0xff]
    %v451 = vld [vmem:[%s1 + $0xd48] sm:$0xff]
    %v452 = vld [vmem:[%s1 + $0xd50] sm:$0xff]
    %v453 = vld [vmem:[%s1 + $0xd58] sm:$0xff]
    %v454 = vld [vmem:[%s1 + $0xd60] sm:$0xff]
    %v455 = vld [vmem:[%s1 + $0xd68] sm:$0xff]
    %v456 = vld [vmem:[%s1 + $0xd70] sm:$0xff]
    %v457 = vld [vmem:[%s1 + $0xd78] sm:$0xff]
    %v458 = vld [vmem:[%s1 + $0xd80] sm:$0xff]
    %v459 = vld [vmem:[%s1 + $0xd88] sm:$0xff]
    %v460 = vld [vmem:[%s1 + $0xd90] sm:$0xff]
    %v461 = vld [vmem:[%s1 + $0xd98] sm:$0xff]
    %v462 = vld [vmem:[%s1 + $0xda0] sm:$0xff]
    %v463 = vld [vmem:[%s1 + $0xda8] sm:$0xff]
    %v464 = vld [vmem:[%s1 + $0xdb0] sm:$0xff]
    %v465 = vld [vmem:[%s1 + $0xdb8] sm:$0xff]
    %v466 = vld [vmem:[%s1 + $0xdc0] sm:$0xff]
    %v467 = vld [vmem:[%s1 + $0xdc8] sm:$0xff]
    %v468 = vld [vmem:[%s1 + $0xdd0] sm:$0xff]
    %v469 = vld [vmem:[%s1 + $0xdd8] sm:$0xff]
    %v470 = vld [vmem:[%s1 + $0xde0] sm:$0xff]
    %v471 = vld [vmem:[%s1 + $0xde8] sm:$0xff]
    %v472 = vld [vmem:[%s1 + $0xdf0] sm:$0xff]
    %v473 = vld [vmem:[%s1 + $0xdf8] sm:$0xff]
    %v474 = vld [vmem:[%s1 + $0xe00] sm:$0xff]
    %v475 = vld [vmem:[%s1 + $0xe08] sm:$0xff]
    %v476 = vld [vmem:[%s1 + $0xe10] sm:$0xff]
    %v477 = vld [vmem:[%s1 + $0xe18] sm:$0xff]
    %v478 = vld [vmem:[%s1 + $0xe20] sm:$0xff]
    %v479 = vld [vmem:[%s1 + $0xe28] sm:$0xff]
    %v480 = vld [vmem:[%s1 + $0xe30] sm:$0xff]
    %v481 = vld [vmem:[%s1 + $0xe38] sm:$0xff]
    %v482 = vld [vmem:[%s1 + $0xe40] sm:$0xff]
    %v483 = vld [vmem:[%s1 + $0xe48] sm:$0xff]
    %v484 = vld [vmem:[%s1 + $0xe50] sm:$0xff]
    %v485 = vld [vmem:[%s1 + $0xe58] sm:$0xff]
    %v486 = vld [vmem:[%s1 + $0xe60] sm:$0xff]
    %v487 = vld [vmem:[%s1 + $0xe68] sm:$0xff]
    %v488 = vld [vmem:[%s1 + $0xe70] sm:$0xff]
    %v489 = vld [vmem:[%s1 + $0xe78] sm:$0xff]
    %v490 = vld [vmem:[%s1 + $0xe80] sm:$0xff]
    %v491 = vld [vmem:[%s1 + $0xe88] sm:$0xff]
    %v492 = vld [vmem:[%s1 + $0xe90] sm:$0xff]
    %v493 = vld [vmem:[%s1 + $0xe98] sm:$0xff]
    %v494 = vld [vmem:[%s1 + $0xea0] sm:$0xff]
    %v495 = vld [vmem:[%s1 + $0xea8] sm:$0xff]
    %v496 = vld [vmem:[%s1 + $0xeb0] sm:$0xff]
    %v497 = vld [vmem:[%s1 + $0xeb8] sm:$0xff]
    %v498 = vld [vmem:[%s1 + $0xec0] sm:$0xff]
    %v499 = vld [vmem:[%s1 + $0xec8] sm:$0xff]
    %v500 = vld [vmem:[%s1 + $0xed0] sm:$0xff]
    %v501 = vld [vmem:[%s1 + $0xed8] sm:$0xff]
    %v502 = vld [vmem:[%s1 + $0xee0] sm:$0xff]
    %v503 = vld [vmem:[%s1 + $0xee8] sm:$0xff]
    %v504 = vld [vmem:[%s1 + $0xef0] sm:$0xff]
    %v505 = vld [vmem:[%s1 + $0xef8] sm:$0xff]
    %v506 = vld [vmem:[%s1 + $0xf00] sm:$0xff]
    %v507 = vld [vmem:[%s1 + $0xf08] sm:$0xff]
    %v508 = vld [vmem:[%s1 + $0xf10] sm:$0xff]
    %v509 = vld [vmem:[%s1 + $0xf18] sm:$0xff]
    %v510 = vld [vmem:[%s1 + $0xf20] sm:$0xff]
    %v511 = vld [vmem:[%s1 + $0xf28] sm:$0xff]
    %v512 = vld [vmem:[%s1 + $0xf30] sm:$0xff]
    %v513 = vld [vmem:[%s1 + $0xf38] sm:$0xff]
    %v514 = vld [vmem:[%s1 + $0xf40] sm:$0xff]
    %v515 = vld [vmem:[%s1 + $0xf48] sm:$0xff]
    %v516 = vld [vmem:[%s1 + $0xf50] sm:$0xff]
    %v517 = vld [vmem:[%s1 + $0xf58] sm:$0xff]
    %v518 = vld [vmem:[%s1 + $0xf60] sm:$0xff]
    %v519 = vld [vmem:[%s1 + $0xf68] sm:$0xff]
    %v520 = vld [vmem:[%s1 + $0xf70] sm:$0xff]
    %v521 = vld [vmem:[%s1 + $0xf78] sm:$0xff]
    %v522 = vld [vmem:[%s1 + $0xf80] sm:$0xff]
    %v523 = vld [vmem:[%s1 + $0xf88] sm:$0xff]
    %v524 = vld [vmem:[%s1 + $0xf90] sm:$0xff]
    %v525 = vld [vmem:[%s1 + $0xf98] sm:$0xff]
    %v526 = vld [vmem:[%s1 + $0xfa0] sm:$0xff]
    %v527 = vld [vmem:[%s1 + $0xfa8] sm:$0xff]
    %v528 = vld [vmem:[%s1 + $0xfb0] sm:$0xff]
    %v529 = vld [vmem:[%s1 + $0xfb8] sm:$0xff]
    %v530 = vld [vmem:[%s1 + $0xfc0] sm:$0xff]
    %v531 = vld [vmem:[%s1 + $0xfc8] sm:$0xff]
    %v532 = vld [vmem:[%s1 + $0xfd0] sm:$0xff]
    %v533 = vld [vmem:[%s1 + $0xfd8] sm:$0xff]
    %v534 = vld [vmem:[%s1 + $0xfe0] sm:$0xff]
    %v535 = vld [vmem:[%s1 + $0xfe8] sm:$0xff]
    %v536 = vld [vmem:[%s1 + $0xff0] sm:$0xff]
    %v537 = vld [vmem:[%s1 + $0xff8] sm:$0xff]
    %v538 = vld [vmem:[%s1 + $0x1000] sm:$0xff]
    %v539 = vld [vmem:[%s1 + $0x1008] sm:$0xff]
    %v540 = vld [vmem:[%s1 + $0x1010] sm:$0xff]
    %v541 = vld [vmem:[%s1 + $0x1018] sm:$0xff]
    %v542 = vld [vmem:[%s1 + $0x1020] sm:$0xff]
    %v543 = vld [vmem:[%s1 + $0x1028] sm:$0xff]
    %v544 = vld [vmem:[%s1 + $0x1030] sm:$0xff]
    %v545 = vld [vmem:[%s1 + $0x1038] sm:$0xff]
    %v546 = vld [vmem:[%s1 + $0x1040] sm:$0xff]
    %v547 = vld [vmem:[%s1 + $0x1048] sm:$0xff]
    %v548 = vld [vmem:[%s1 + $0x1050] sm:$0xff]
    %v549 = vld [vmem:[%s1 + $0x1058] sm:$0xff]
    %v550 = vld [vmem:[%s1 + $0x1060] sm:$0xff]
    %v551 = vld [vmem:[%s1 + $0x1068] sm:$0xff]
    %v552 = vld [vmem:[%s1 + $0x1070] sm:$0xff]
    %v553 = vld [vmem:[%s1 + $0x1078] sm:$0xff]
    %v554 = vld [vmem:[%s1 + $0x1080] sm:$0xff]
    %v555 = vld [vmem:[%s1 + $0x1088] sm:$0xff]
    %v556 = vld [vmem:[%s1 + $0x1090] sm:$0xff]
    %v557 = vld [vmem:[%s1 + $0x1098] sm:$0xff]
    %v558 = vld [vmem:[%s1 + $0x10a0] sm:$0xff]
    %v559 = vld [vmem:[%s1 + $0x10a8] sm:$0xff]
    %v560 = vld [vmem:[%s1 + $0x10b0] sm:$0xff]
    %v561 = vld [vmem:[%s1 + $0x10b8] sm:$0xff]
    %v562 = vld [vmem:[%s1 + $0x10c0] sm:$0xff]
    %v563 = vld [vmem:[%s1 + $0x10c8] sm:$0xff]
    %v564 = vld [vmem:[%s1 + $0x10d0] sm:$0xff]
    %v565 = vld [vmem:[%s1 + $0x10d8] sm:$0xff]
    %v566 = vld [vmem:[%s1 + $0x10e0] sm:$0xff]
    %v567 = vld [vmem:[%s1 + $0x10e8] sm:$0xff]
    %v568 = vld [vmem:[%s1 + $0x10f0] sm:$0xff]
    %v569 = vld [vmem:[%s1 + $0x10f8] sm:$0xff]
    %v570 = vld [vmem:[%s1 + $0x1100] sm:$0xff]
    %v571 = vld [vmem:[%s1 + $0x1108] sm:$0xff]
    %v572 = vld [vmem:[%s1 + $0x1110] sm:$0xff]
    %v573 = vld [vmem:[%s1 + $0x1118] sm:$0xff]
    %v574 = vld [vmem:[%s1 + $0x1120] sm:$0xff]
    %v575 = vld [vmem:[%s1 + $0x1128] sm:$0xff]
    %v576 = vld [vmem:[%s1 + $0x1130] sm:$0xff]
    %v577 = vld [vmem:[%s1 + $0x1138] sm:$0xff]
    %v578 = vld [vmem:[%s1 + $0x1140] sm:$0xff]
    %v579 = vld [vmem:[%s1 + $0x1148] sm:$0xff]
    %v580 = vld [vmem:[%s1 + $0x1150] sm:$0xff]
    %v581 = vld [vmem:[%s1 + $0x1158] sm:$0xff]
    %v582 = vld [vmem:[%s1 + $0x1160] sm:$0xff]
    %v583 = vld [vmem:[%s1 + $0x1168] sm:$0xff]
    %v584 = vld [vmem:[%s1 + $0x1170] sm:$0xff]
    %v585 = vld [vmem:[%s1 + $0x1178] sm:$0xff]
    %v586 = vld [vmem:[%s1 + $0x1180] sm:$0xff]
    %v587 = vld [vmem:[%s1 + $0x1188] sm:$0xff]
    %v588 = vld [vmem:[%s1 + $0x1190] sm:$0xff]
    %v589 = vld [vmem:[%s1 + $0x1198] sm:$0xff]
    %v590 = vld [vmem:[%s1 + $0x11a0] sm:$0xff]
    %v591 = vld [vmem:[%s1 + $0x11a8] sm:$0xff]
    %v592 = vld [vmem:[%s1 + $0x11b0] sm:$0xff]
    %v593 = vld [vmem:[%s1 + $0x11b8] sm:$0xff]
    %v594 = vld [vmem:[%s1 + $0x11c0] sm:$0xff]
    %v595 = vld [vmem:[%s1 + $0x11c8] sm:$0xff]
    %v596 = vld [vmem:[%s1 + $0x11d0] sm:$0xff]
    %v597 = vld [vmem:[%s1 + $0x11d8] sm:$0xff]
    %v598 = vld [vmem:[%s1 + $0x11e0] sm:$0xff]
    %v599 = vld [vmem:[%s1 + $0x11e8] sm:$0xff]
    %v600 = vld [vmem:[%s1 + $0x11f0] sm:$0xff]
    %v601 = vld [vmem:[%s1 + $0x11f8] sm:$0xff]
    %v602 = vld [vmem:[%s1 + $0x1200] sm:$0xff]
    %v603 = vld [vmem:[%s1 + $0x1208] sm:$0xff]
    %v604 = vld [vmem:[%s1 + $0x1210] sm:$0xff]
    %v605 = vld [vmem:[%s1 + $0x1218] sm:$0xff]
    %v606 = vld [vmem:[%s1 + $0x1220] sm:$0xff]
    %v607 = vld [vmem:[%s1 + $0x1228] sm:$0xff]
    %v608 = vld [vmem:[%s1 + $0x1230] sm:$0xff]
    %v609 = vld [vmem:[%s1 + $0x1238] sm:$0xff]
    %v610 = vld [vmem:[%s1 + $0x1240] sm:$0xff]
    %v611 = vld [vmem:[%s1 + $0x1248] sm:$0xff]
    %v612 = vld [vmem:[%s1 + $0x1250] sm:$0xff]
    %v613 = vld [vmem:[%s1 + $0x1258] sm:$0xff]
    %v614 = vld [vmem:[%s1 + $0x1260] sm:$0xff]
    %v615 = vld [vmem:[%s1 + $0x1268] sm:$0xff]
    %v616 = vld [vmem:[%s1 + $0x1270] sm:$0xff]
    %v617 = vld [vmem:[%s1 + $0x1278] sm:$0xff]
    %v618 = vld [vmem:[%s1 + $0x1280] sm:$0xff]
    %v619 = vld [vmem:[%s1 + $0x1288] sm:$0xff]
    %v620 = vld [vmem:[%s1 + $0x1290] sm:$0xff]
    %v621 = vld [vmem:[%s1 + $0x1298] sm:$0xff]
    %v622 = vld [vmem:[%s1 + $0x12a0] sm:$0xff]
    %v623 = vld [vmem:[%s1 + $0x12a8] sm:$0xff]
    %v624 = vld [vmem:[%s1 + $0x12b0] sm:$0xff]
    %v625 = vld [vmem:[%s1 + $0x12b8] sm:$0xff]
    %v626 = vld [vmem:[%s1 + $0x12c0] sm:$0xff]
    %v627 = vld [vmem:[%s1 + $0x12c8] sm:$0xff]
    %v628 = vld [vmem:[%s1 + $0x12d0] sm:$0xff]
    %v629 = vld [vmem:[%s1 + $0x12d8] sm:$0xff]
    %v630 = vld [vmem:[%s1 + $0x12e0] sm:$0xff]
    %v631 = vld [vmem:[%s1 + $0x12e8] sm:$0xff]
    %v632 = vld [vmem:[%s1 + $0x12f0] sm:$0xff]
    %v633 = vld [vmem:[%s1 + $0x12f8] sm:$0xff]
    %v634 = vld [vmem:[%s1 + $0x1300] sm:$0xff]
    %v635 = vld [vmem:[%s1 + $0x1308] sm:$0xff]
    %v636 = vld [vmem:[%s1 + $0x1310] sm:$0xff]
    %v637 = vld [vmem:[%s1 + $0x1318] sm:$0xff]
    %v638 = vld [vmem:[%s1 + $0x1320] sm:$0xff]
    %v639 = vld [vmem:[%s1 + $0x1328] sm:$0xff]
    %v640 = vld [vmem:[%s1 + $0x1330] sm:$0xff]
    %v641 = vld [vmem:[%s1 + $0x1338] sm:$0xff]
    %v642 = vld [vmem:[%s1 + $0x1340] sm:$0xff]
    %v643 = vld [vmem:[%s1 + $0x1348] sm:$0xff]
    %v644 = vld [vmem:[%s1 + $0x1350] sm:$0xff]
    %v645 = vld [vmem:[%s1 + $0x1358] sm:$0xff]
    %v646 = vld [vmem:[%s1 + $0x1360] sm:$0xff]
    %v647 = vld [vmem:[%s1 + $0x1368] sm:$0xff]
    %v648 = vld [vmem:[%s1 + $0x1370] sm:$0xff]
    %v649 = vld [vmem:[%s1 + $0x1378] sm:$0xff]
    %v650 = vld [vmem:[%s1 + $0x1380] sm:$0xff]
    %v651 = vld [vmem:[%s1 + $0x1388] sm:$0xff]
    %v652 = vld [vmem:[%s1 + $0x1390] sm:$0xff]
    %v653 = vld [vmem:[%s1 + $0x1398] sm:$0xff]
    %v654 = vld [vmem:[%s1 + $0x13a0] sm:$0xff]
    %v655 = vld [vmem:[%s1 + $0x13a8] sm:$0xff]
    %v656 = vld [vmem:[%s1 + $0x13b0] sm:$0xff]
    %v657 = vld [vmem:[%s1 + $0x13b8] sm:$0xff]
    %v658 = vld [vmem:[%s1 + $0x13c0] sm:$0xff]
    %v659 = vld [vmem:[%s1 + $0x13c8] sm:$0xff]
    %v660 = vld [vmem:[%s1 + $0x13d0] sm:$0xff]
    %v661 = vld [vmem:[%s1 + $0x13d8] sm:$0xff]
    %v662 = vld [vmem:[%s1 + $0x13e0] sm:$0xff]
    %v663 = vld [vmem:[%s1 + $0x13e8] sm:$0xff]
    %v664 = vld [vmem:[%s1 + $0x13f0] sm:$0xff]
    %v665 = vld [vmem:[%s1 + $0x13f8] sm:$0xff]
    %v666 = vld [vmem:[%s1 + $0x1400] sm:$0xff]
    %v667 = vld [vmem:[%s1 + $0x1408] sm:$0xff]
    %v668 = vld [vmem:[%s1 + $0x1410] sm:$0xff]
    %v669 = vld [vmem:[%s1 + $0x1418] sm:$0xff]
    %v670 = vld [vmem:[%s1 + $0x1420] sm:$0xff]
    %v671 = vld [vmem:[%s1 + $0x1428] sm:$0xff]
    %v672 = vld [vmem:[%s1 + $0x1430] sm:$0xff]
    %v673 = vld [vmem:[%s1 + $0x1438] sm:$0xff]
    %v674 = vld [vmem:[%s1 + $0x1440] sm:$0xff]
    %v675 = vld [vmem:[%s1 + $0x1448] sm:$0xff]
    %v676 = vld [vmem:[%s1 + $0x1450] sm:$0xff]
    %v677 = vld [vmem:[%s1 + $0x1458] sm:$0xff]
    %v678 = vld [vmem:[%s1 + $0x1460] sm:$0xff]
    %v679 = vld [vmem:[%s1 + $0x1468] sm:$0xff]
    %v680 = vld [vmem:[%s1 + $0x1470] sm:$0xff]
    %v681 = vld [vmem:[%s1 + $0x1478] sm:$0xff]
    %v682 = vld [vmem:[%s1 + $0x1480] sm:$0xff]
    %v683 = vld [vmem:[%s1 + $0x1488] sm:$0xff]
    %v684 = vld [vmem:[%s1 + $0x1490] sm:$0xff]
    %v685 = vld [vmem:[%s1 + $0x1498] sm:$0xff]
    %v686 = vld [vmem:[%s1 + $0x14a0] sm:$0xff]
    %v687 = vld [vmem:[%s1 + $0x14a8] sm:$0xff]
    %v688 = vld [vmem:[%s1 + $0x14b0] sm:$0xff]
    %v689 = vld [vmem:[%s1 + $0x14b8] sm:$0xff]
    %v690 = vld [vmem:[%s1 + $0x14c0] sm:$0xff]
    %v691 = vld [vmem:[%s1 + $0x14c8] sm:$0xff]
    %v692 = vld [vmem:[%s1 + $0x14d0] sm:$0xff]
    %v693 = vld [vmem:[%s1 + $0x14d8] sm:$0xff]
    %v694 = vld [vmem:[%s1 + $0x14e0] sm:$0xff]
    %v695 = vld [vmem:[%s1 + $0x14e8] sm:$0xff]
    %v696 = vld [vmem:[%s1 + $0x14f0] sm:$0xff]
    %v697 = vld [vmem:[%s1 + $0x14f8] sm:$0xff]
    %v698 = vld [vmem:[%s1 + $0x1500] sm:$0xff]
    %v699 = vld [vmem:[%s1 + $0x1508] sm:$0xff]
    %v700 = vld [vmem:[%s1 + $0x1510] sm:$0xff]
    %v701 = vld [vmem:[%s1 + $0x1518] sm:$0xff]
    %v702 = vld [vmem:[%s1 + $0x1520] sm:$0xff]
    %v703 = vld [vmem:[%s1 + $0x1528] sm:$0xff]
    %v704 = vld [vmem:[%s1 + $0x1530] sm:$0xff]
    %v705 = vld [vmem:[%s1 + $0x1538] sm:$0xff]
    %v706 = vld [vmem:[%s1 + $0x1540] sm:$0xff]
    %v707 = vld [vmem:[%s1 + $0x1548] sm:$0xff]
    %v708 = vld [vmem:[%s1 + $0x1550] sm:$0xff]
    %v709 = vld [vmem:[%s1 + $0x1558] sm:$0xff]
    %v710 = vld [vmem:[%s1 + $0x1560] sm:$0xff]
    %v711 = vld [vmem:[%s1 + $0x1568] sm:$0xff]
    %v712 = vld [vmem:[%s1 + $0x1570] sm:$0xff]
    %v713 = vld [vmem:[%s1 + $0x1578] sm:$0xff]
    %v714 = vld [vmem:[%s1 + $0x1580] sm:$0xff]
    %v715 = vld [vmem:[%s1 + $0x1588] sm:$0xff]
    %v716 = vld [vmem:[%s1 + $0x1590] sm:$0xff]
    %v717 = vld [vmem:[%s1 + $0x1598] sm:$0xff]
    %v718 = vld [vmem:[%s1 + $0x15a0] sm:$0xff]
    %v719 = vld [vmem:[%s1 + $0x15a8] sm:$0xff]
    %v720 = vld [vmem:[%s1 + $0x15b0] sm:$0xff]
    %v721 = vld [vmem:[%s1 + $0x15b8] sm:$0xff]
    %v722 = vld [vmem:[%s1 + $0x15c0] sm:$0xff]
    %v723 = vld [vmem:[%s1 + $0x15c8] sm:$0xff]
    %v724 = vld [vmem:[%s1 + $0x15d0] sm:$0xff]
    %v725 = vld [vmem:[%s1 + $0x15d8] sm:$0xff]
    %v726 = vld [vmem:[%s1 + $0x15e0] sm:$0xff]
    %v727 = vld [vmem:[%s1 + $0x15e8] sm:$0xff]
    %v728 = vld [vmem:[%s1 + $0x15f0] sm:$0xff]
    %v729 = vld [vmem:[%s1 + $0x15f8] sm:$0xff]
    %v730 = vld [vmem:[%s1 + $0x1600] sm:$0xff]
    %v731 = vld [vmem:[%s1 + $0x1608] sm:$0xff]
    %v732 = vld [vmem:[%s1 + $0x1610] sm:$0xff]
    %v733 = vld [vmem:[%s1 + $0x1618] sm:$0xff]
    %v734 = vld [vmem:[%s1 + $0x1620] sm:$0xff]
    %v735 = vld [vmem:[%s1 + $0x1628] sm:$0xff]
    %v736 = vld [vmem:[%s1 + $0x1630] sm:$0xff]
    %v737 = vld [vmem:[%s1 + $0x1638] sm:$0xff]
    %v738 = vld [vmem:[%s1 + $0x1640] sm:$0xff]
    %v739 = vld [vmem:[%s1 + $0x1648] sm:$0xff]
    %v740 = vld [vmem:[%s1 + $0x1650] sm:$0xff]
    %v741 = vld [vmem:[%s1 + $0x1658] sm:$0xff]
    %v742 = vld [vmem:[%s1 + $0x1660] sm:$0xff]
    %v743 = vld [vmem:[%s1 + $0x1668] sm:$0xff]
    %v744 = vld [vmem:[%s1 + $0x1670] sm:$0xff]
    %v745 = vld [vmem:[%s1 + $0x1678] sm:$0xff]
    %v746 = vld [vmem:[%s1 + $0x1680] sm:$0xff]
    %v747 = vld [vmem:[%s1 + $0x1688] sm:$0xff]
    %v748 = vld [vmem:[%s1 + $0x1690] sm:$0xff]
    %v749 = vld [vmem:[%s1 + $0x1698] sm:$0xff]
    %v750 = vld [vmem:[%s1 + $0x16a0] sm:$0xff]
    %v751 = vld [vmem:[%s1 + $0x16a8] sm:$0xff]
    %v752 = vld [vmem:[%s1 + $0x16b0] sm:$0xff]
    %v753 = vld [vmem:[%s1 + $0x16b8] sm:$0xff]
    %v754 = vld [vmem:[%s1 + $0x16c0] sm:$0xff]
    %v755 = vld [vmem:[%s1 + $0x16c8] sm:$0xff]
    %v756 = vld [vmem:[%s1 + $0x16d0] sm:$0xff]
    %v757 = vld [vmem:[%s1 + $0x16d8] sm:$0xff]
    %v758 = vld [vmem:[%s1 + $0x16e0] sm:$0xff]
    %v759 = vld [vmem:[%s1 + $0x16e8] sm:$0xff]
    %v760 = vld [vmem:[%s1 + $0x16f0] sm:$0xff]
    %v761 = vld [vmem:[%s1 + $0x16f8] sm:$0xff]
    %v762 = vld [vmem:[%s1 + $0x1700] sm:$0xff]
    %v763 = vld [vmem:[%s1 + $0x1708] sm:$0xff]
    %v764 = vld [vmem:[%s1 + $0x1710] sm:$0xff]
    %v765 = vld [vmem:[%s1 + $0x1718] sm:$0xff]
    %v766 = vld [vmem:[%s1 + $0x1720] sm:$0xff]
    %v767 = vld [vmem:[%s1 + $0x1728] sm:$0xff]
    %v768 = vld [vmem:[%s1 + $0x1730] sm:$0xff]
    %v769 = vld [vmem:[%s1 + $0x1738] sm:$0xff]
    %v770 = vld [vmem:[%s1 + $0x1740] sm:$0xff]
    %v771 = vld [vmem:[%s1 + $0x1748] sm:$0xff]
    %v772 = vld [vmem:[%s1 + $0x1750] sm:$0xff]
    %v773 = vld [vmem:[%s1 + $0x1758] sm:$0xff]
    %v774 = vld [vmem:[%s1 + $0x1760] sm:$0xff]
    %v775 = vld [vmem:[%s1 + $0x1768] sm:$0xff]
    %v776 = vld [vmem:[%s1 + $0x1770] sm:$0xff]
    %v777 = vld [vmem:[%s1 + $0x1778] sm:$0xff]
    %v778 = vld [vmem:[%s1 + $0x1780] sm:$0xff]
    %v779 = vld [vmem:[%s1 + $0x1788] sm:$0xff]
    %v780 = vld [vmem:[%s1 + $0x1790] sm:$0xff]
    %v781 = vld [vmem:[%s1 + $0x1798] sm:$0xff]
    %v782 = vld [vmem:[%s1 + $0x17a0] sm:$0xff]
    %v783 = vld [vmem:[%s1 + $0x17a8] sm:$0xff]
    %v784 = vld [vmem:[%s1 + $0x17b0] sm:$0xff]
    %v785 = vld [vmem:[%s1 + $0x17b8] sm:$0xff]
    %v786 = vld [vmem:[%s1 + $0x17c0] sm:$0xff]
    %v787 = vld [vmem:[%s1 + $0x17c8] sm:$0xff]
    %v788 = vld [vmem:[%s1 + $0x17d0] sm:$0xff]
    %v789 = vld [vmem:[%s1 + $0x17d8] sm:$0xff]
    %v790 = vld [vmem:[%s1 + $0x17e0] sm:$0xff]
    %v791 = vld [vmem:[%s1 + $0x17e8] sm:$0xff]
    %v792 = vld [vmem:[%s1 + $0x17f0] sm:$0xff]
    %v793 = vld [vmem:[%s1 + $0x17f8] sm:$0xff]
    %v794 = vld [vmem:[%s1 + $0x1800] sm:$0xff]
    %v795 = vld [vmem:[%s1 + $0x1808] sm:$0xff]
    %v796 = vld [vmem:[%s1 + $0x1810] sm:$0xff]
    %v797 = vld [vmem:[%s1 + $0x1818] sm:$0xff]
    %v798 = vld [vmem:[%s1 + $0x1820] sm:$0xff]
    %v799 = vld [vmem:[%s1 + $0x1828] sm:$0xff]
    %v800 = vld [vmem:[%s1 + $0x1830] sm:$0xff]
    %v801 = vld [vmem:[%s1 + $0x1838] sm:$0xff]
    %v802 = vld [vmem:[%s1 + $0x1840] sm:$0xff]
    %v803 = vld [vmem:[%s1 + $0x1848] sm:$0xff]
    %v804 = vld [vmem:[%s1 + $0x1850] sm:$0xff]
    %v805 = vld [vmem:[%s1 + $0x1858] sm:$0xff]
    %v806 = vld [vmem:[%s1 + $0x1860] sm:$0xff]
    %v807 = vld [vmem:[%s1 + $0x1868] sm:$0xff]
    %v808 = vld [vmem:[%s1 + $0x1870] sm:$0xff]
    %v809 = vld [vmem:[%s1 + $0x1878] sm:$0xff]
    %v810 = vld [vmem:[%s1 + $0x1880] sm:$0xff]
    %v811 = vld [vmem:[%s1 + $0x1888] sm:$0xff]
    %v812 = vld [vmem:[%s1 + $0x1890] sm:$0xff]
    %v813 = vld [vmem:[%s1 + $0x1898] sm:$0xff]
    %v814 = vld [vmem:[%s1 + $0x18a0] sm:$0xff]
    %v815 = vld [vmem:[%s1 + $0x18a8] sm:$0xff]
    %v816 = vld [vmem:[%s1 + $0x18b0] sm:$0xff]
    %v817 = vld [vmem:[%s1 + $0x18b8] sm:$0xff]
    %v818 = vld [vmem:[%s1 + $0x18c0] sm:$0xff]
    %v819 = vld [vmem:[%s1 + $0x18c8] sm:$0xff]
    %v820 = vld [vmem:[%s1 + $0x18d0] sm:$0xff]
    %v821 = vld [vmem:[%s1 + $0x18d8] sm:$0xff]
    %v822 = vld [vmem:[%s1 + $0x18e0] sm:$0xff]
    %v823 = vld [vmem:[%s1 + $0x18e8] sm:$0xff]
    %v824 = vld [vmem:[%s1 + $0x18f0] sm:$0xff]
    %v825 = vld [vmem:[%s1 + $0x18f8] sm:$0xff]
    %v826 = vld [vmem:[%s1 + $0x1900] sm:$0xff]
    %v827 = vld [vmem:[%s1 + $0x1908] sm:$0xff]
    %v828 = vld [vmem:[%s1 + $0x1910] sm:$0xff]
    %v829 = vld [vmem:[%s1 + $0x1918] sm:$0xff]
    %v830 = vld [vmem:[%s1 + $0x1920] sm:$0xff]
    %v831 = vld [vmem:[%s1 + $0x1928] sm:$0xff]
    %v832 = vld [vmem:[%s1 + $0x1930] sm:$0xff]
    %v833 = vld [vmem:[%s1 + $0x1938] sm:$0xff]
    %v834 = vld [vmem:[%s1 + $0x1940] sm:$0xff]
    %v835 = vld [vmem:[%s1 + $0x1948] sm:$0xff]
    %v836 = vld [vmem:[%s1 + $0x1950] sm:$0xff]
    %v837 = vld [vmem:[%s1 + $0x1958] sm:$0xff]
    %v838 = vld [vmem:[%s1 + $0x1960] sm:$0xff]
    %v839 = vld [vmem:[%s1 + $0x1968] sm:$0xff]
    %v840 = vld [vmem:[%s1 + $0x1970] sm:$0xff]
    %v841 = vld [vmem:[%s1 + $0x1978] sm:$0xff]
    %v842 = vld [vmem:[%s1 + $0x1980] sm:$0xff]
    %v843 = vld [vmem:[%s1 + $0x1988] sm:$0xff]
    %v844 = vld [vmem:[%s1 + $0x1990] sm:$0xff]
    %v845 = vld [vmem:[%s1 + $0x1998] sm:$0xff]
    %v846 = vld [vmem:[%s1 + $0x19a0] sm:$0xff]
    %v847 = vld [vmem:[%s1 + $0x19a8] sm:$0xff]
    %v848 = vld [vmem:[%s1 + $0x19b0] sm:$0xff]
    %v849 = vld [vmem:[%s1 + $0x19b8] sm:$0xff]
    %v850 = vld [vmem:[%s1 + $0x19c0] sm:$0xff]
    %v851 = vld [vmem:[%s1 + $0x19c8] sm:$0xff]
    %v852 = vld [vmem:[%s1 + $0x19d0] sm:$0xff]
    %v853 = vld [vmem:[%s1 + $0x19d8] sm:$0xff]
    %v854 = vld [vmem:[%s1 + $0x19e0] sm:$0xff]
    %v855 = vld [vmem:[%s1 + $0x19e8] sm:$0xff]
    %v856 = vld [vmem:[%s1 + $0x19f0] sm:$0xff]
    %v857 = vld [vmem:[%s1 + $0x19f8] sm:$0xff]
    %v858 = vld [vmem:[%s1 + $0x1a00] sm:$0xff]
    %v859 = vld [vmem:[%s1 + $0x1a08] sm:$0xff]
    %v860 = vld [vmem:[%s1 + $0x1a10] sm:$0xff]
    %v861 = vld [vmem:[%s1 + $0x1a18] sm:$0xff]
    %v862 = vld [vmem:[%s1 + $0x1a20] sm:$0xff]
    %v863 = vld [vmem:[%s1 + $0x1a28] sm:$0xff]
    %v864 = vld [vmem:[%s1 + $0x1a30] sm:$0xff]
    %v865 = vld [vmem:[%s1 + $0x1a38] sm:$0xff]
    %v866 = vld [vmem:[%s1 + $0x1a40] sm:$0xff]
    %v867 = vld [vmem:[%s1 + $0x1a48] sm:$0xff]
    %v868 = vld [vmem:[%s1 + $0x1a50] sm:$0xff]
    %v869 = vld [vmem:[%s1 + $0x1a58] sm:$0xff]
    %v870 = vld [vmem:[%s1 + $0x1a60] sm:$0xff]
    %v871 = vld [vmem:[%s1 + $0x1a68] sm:$0xff]
    %v872 = vld [vmem:[%s1 + $0x1a70] sm:$0xff]
    %v873 = vld [vmem:[%s1 + $0x1a78] sm:$0xff]
    %v874 = vld [vmem:[%s1 + $0x1a80] sm:$0xff]
    %v875 = vld [vmem:[%s1 + $0x1a88] sm:$0xff]
    %v876 = vld [vmem:[%s1 + $0x1a90] sm:$0xff]
    %v877 = vld [vmem:[%s1 + $0x1a98] sm:$0xff]
    %v878 = vld [vmem:[%s1 + $0x1aa0] sm:$0xff]
    %v879 = vld [vmem:[%s1 + $0x1aa8] sm:$0xff]
    %v880 = vld [vmem:[%s1 + $0x1ab0] sm:$0xff]
    %v881 = vld [vmem:[%s1 + $0x1ab8] sm:$0xff]
    %v882 = vld [vmem:[%s1 + $0x1ac0] sm:$0xff]
    %v883 = vld [vmem:[%s1 + $0x1ac8] sm:$0xff]
    %v884 = vld [vmem:[%s1 + $0x1ad0] sm:$0xff]
    %v885 = vld [vmem:[%s1 + $0x1ad8] sm:$0xff]
    %v886 = vld [vmem:[%s1 + $0x1ae0] sm:$0xff]
    %v887 = vld [vmem:[%s1 + $0x1ae8] sm:$0xff]
    %v888 = vld [vmem:[%s1 + $0x1af0] sm:$0xff]
    %v889 = vld [vmem:[%s1 + $0x1af8] sm:$0xff]
    %v890 = vld [vmem:[%s1 + $0x1b00] sm:$0xff]
    %v891 = vld [vmem:[%s1 + $0x1b08] sm:$0xff]
    %v892 = vld [vmem:[%s1 + $0x1b10] sm:$0xff]
    %v893 = vld [vmem:[%s1 + $0x1b18] sm:$0xff]
    %v894 = vld [vmem:[%s1 + $0x1b20] sm:$0xff]
    %v895 = vld [vmem:[%s1 + $0x1b28] sm:$0xff]
    %v896 = vld [vmem:[%s1 + $0x1b30] sm:$0xff]
    %v897 = vld [vmem:[%s1 + $0x1b38] sm:$0xff]
    %v898 = vld [vmem:[%s1 + $0x1b40] sm:$0xff]
    %v899 = vld [vmem:[%s1 + $0x1b48] sm:$0xff]
    %v900 = vld [vmem:[%s1 + $0x1b50] sm:$0xff]
    %v901 = vld [vmem:[%s1 + $0x1b58] sm:$0xff]
    %v902 = vld [vmem:[%s1 + $0x1b60] sm:$0xff]
    %v903 = vld [vmem:[%s1 + $0x1b68] sm:$0xff]
    %v904 = vld [vmem:[%s1 + $0x1b70] sm:$0xff]
    %v905 = vld [vmem:[%s1 + $0x1b78] sm:$0xff]
    %v906 = vld [vmem:[%s1 + $0x1b80] sm:$0xff]
    %v907 = vld [vmem:[%s1 + $0x1b88] sm:$0xff]
    %v908 = vld [vmem:[%s1 + $0x1b90] sm:$0xff]
    %v909 = vld [vmem:[%s1 + $0x1b98] sm:$0xff]
    %v910 = vld [vmem:[%s1 + $0x1ba0] sm:$0xff]
    %v911 = vld [vmem:[%s1 + $0x1ba8] sm:$0xff]
    %v912 = vld [vmem:[%s1 + $0x1bb0] sm:$0xff]
    %v913 = vld [vmem:[%s1 + $0x1bb8] sm:$0xff]
    %v914 = vld [vmem:[%s1 + $0x1bc0] sm:$0xff]
    %v915 = vld [vmem:[%s1 + $0x1bc8] sm:$0xff]
    %v916 = vld [vmem:[%s1 + $0x1bd0] sm:$0xff]
    %v917 = vld [vmem:[%s1 + $0x1bd8] sm:$0xff]
    %v918 = vld [vmem:[%s1 + $0x1be0] sm:$0xff]
    %v919 = vld [vmem:[%s1 + $0x1be8] sm:$0xff]
    %v920 = vld [vmem:[%s1 + $0x1bf0] sm:$0xff]
    %v921 = vld [vmem:[%s1 + $0x1bf8] sm:$0xff]
    %v922 = vld [vmem:[%s1 + $0x1c00] sm:$0xff]
    %v923 = vld [vmem:[%s1 + $0x1c08] sm:$0xff]
    %v924 = vld [vmem:[%s1 + $0x1c10] sm:$0xff]
    %v925 = vld [vmem:[%s1 + $0x1c18] sm:$0xff]
    %927 = vst [vmem:[#allocation1] ss:$9 sm:$0xff] %v22
    %v928 = vld [vmem:[#allocation1] sm:$0xff]
    %v929 = vld [vmem:[#allocation1 + $0x9] sm:$0xff]
    %v930 = vld [vmem:[#allocation1 + $0x12] sm:$0xff]
    %v931 = vld [vmem:[#allocation1 + $0x1b] sm:$0xff]
    %v932 = vld [vmem:[#allocation1 + $0x24] sm:$0xff]
    %v933 = vld [vmem:[#allocation1 + $0x2d] sm:$0xff]
    %v934 = vld [vmem:[#allocation1 + $0x36] sm:$0xff]
    %v935 = vld [vmem:[#allocation1 + $0x3f] sm:$0xff]
    %937 = vst [vmem:[#allocation1] ss:$9 sm:$0xff] %v23
    %v938 = vld [vmem:[#allocation1] sm:$0xff]
    %v939 = vld [vmem:[#allocation1 + $0x9] sm:$0xff]
    %v940 = vld [vmem:[#allocation1 + $0x12] sm:$0xff]
    %v941 = vld [vmem:[#allocation1 + $0x1b] sm:$0xff]
    %v942 = vld [vmem:[#allocation1 + $0x24] sm:$0xff]
    %v943 = vld [vmem:[#allocation1 + $0x2d] sm:$0xff]
    %v944 = vld [vmem:[#allocation1 + $0x36] sm:$0xff]
    %v945 = vld [vmem:[#allocation1 + $0x3f] sm:$0xff]
    %947 = vst [vmem:[#allocation1] ss:$9 sm:$0xff] %v24
    %v948 = vld [vmem:[#allocation1] sm:$0xff]
    %v949 = vld [vmem:[#allocation1 + $0x9] sm:$0xff]
    %v950 = vld [vmem:[#allocation1 + $0x12] sm:$0xff]
    %v951 = vld [vmem:[#allocation1 + $0x1b] sm:$0xff]
    %v952 = vld [vmem:[#allocation1 + $0x24] sm:$0xff]
    %v953 = vld [vmem:[#allocation1 + $0x2d] sm:$0xff]
    %v954 = vld [vmem:[#allocation1 + $0x36] sm:$0xff]
    %v955 = vld [vmem:[#allocation1 + $0x3f] sm:$0xff]
    %957 = vst [vmem:[#allocation1] ss:$9 sm:$0xff] %v25
    %v958 = vld [vmem:[#allocation1] sm:$0xff]
    %v959 = vld [vmem:[#allocation1 + $0x9] sm:$0xff]
    %v960 = vld [vmem:[#allocation1 + $0x12] sm:$0xff]
    %v961 = vld [vmem:[#allocation1 + $0x1b] sm:$0xff]
    %v962 = vld [vmem:[#allocation1 + $0x24] sm:$0xff]
    %v1891 = vunpack.c.l.b16 %v26
    %v1892 = vunpack.c.h.b16 %v26
    %v1893 = vunpack.c.l.b16 %v27
    %v1894 = vunpack.c.h.b16 %v27
    %v1895 = vunpack.c.l.b16 %v28
    %v1896 = vunpack.c.h.b16 %v28
    %v1897 = vunpack.c.l.b16 %v29
    %v1898 = vunpack.c.h.b16 %v29
    %v1899 = vunpack.c.l.b16 %v30
    %v1900 = vunpack.c.h.b16 %v30
    %v1901 = vunpack.c.l.b16 %v31
    %v1902 = vunpack.c.h.b16 %v31
    %v1903 = vunpack.c.l.b16 %v32
    %v1904 = vunpack.c.h.b16 %v32
    %v1905 = vunpack.c.l.b16 %v33
    %v1906 = vunpack.c.h.b16 %v33
    %v1907 = vunpack.c.l.b16 %v34
    %v1908 = vunpack.c.h.b16 %v34
    %v1909 = vunpack.c.l.b16 %v35
    %v1910 = vunpack.c.h.b16 %v35
    %v1911 = vunpack.c.l.b16 %v36
    %v1912 = vunpack.c.h.b16 %v36
    %v1913 = vunpack.c.l.b16 %v37
    %v1914 = vunpack.c.h.b16 %v37
    %v1915 = vunpack.c.l.b16 %v38
    %v1916 = vunpack.c.h.b16 %v38
    %v1917 = vunpack.c.l.b16 %v39
    %v1918 = vunpack.c.h.b16 %v39
    %v1919 = vunpack.c.l.b16 %v40
    %v1920 = vunpack.c.h.b16 %v40
    %v1921 = vunpack.c.l.b16 %v41
    %v1922 = vunpack.c.h.b16 %v41
    %v1923 = vunpack.c.l.b16 %v42
    %v1924 = vunpack.c.h.b16 %v42
    %v1925 = vunpack.c.l.b16 %v43
    %v1926 = vunpack.c.h.b16 %v43
    %v1927 = vunpack.c.l.b16 %v44
    %v1928 = vunpack.c.h.b16 %v44
    %v1929 = vunpack.c.l.b16 %v45
    %v1930 = vunpack.c.h.b16 %v45
    %v1931 = vunpack.c.l.b16 %v46
    %v1932 = vunpack.c.h.b16 %v46
    %v1933 = vunpack.c.l.b16 %v47
    %v1934 = vunpack.c.h.b16 %v47
    %v1935 = vunpack.c.l.b16 %v48
    %v1936 = vunpack.c.h.b16 %v48
    %v1937 = vunpack.c.l.b16 %v49
    %v1938 = vunpack.c.h.b16 %v49
    %v1939 = vunpack.c.l.b16 %v50
    %v1940 = vunpack.c.h.b16 %v50
    %v1941 = vunpack.c.l.b16 %v51
    %v1942 = vunpack.c.h.b16 %v51
    %v1943 = vunpack.c.l.b16 %v52
    %v1944 = vunpack.c.h.b16 %v52
    %v1945 = vunpack.c.l.b16 %v53
    %v1946 = vunpack.c.h.b16 %v53
    %v1947 = vunpack.c.l.b16 %v54
    %v1948 = vunpack.c.h.b16 %v54
    %v1949 = vunpack.c.l.b16 %v55
    %v1950 = vunpack.c.h.b16 %v55
    %v1951 = vunpack.c.l.b16 %v56
    %v1952 = vunpack.c.h.b16 %v56
    %v1953 = vunpack.c.l.b16 %v57
    %v1954 = vunpack.c.h.b16 %v57
    %v1955 = vunpack.c.l.b16 %v58
    %v1956 = vunpack.c.h.b16 %v58
    %v1957 = vunpack.c.l.b16 %v59
    %v1958 = vunpack.c.h.b16 %v59
    %v1959 = vunpack.c.l.b16 %v60
    %v1960 = vunpack.c.h.b16 %v60
    %v1961 = vunpack.c.l.b16 %v61
    %v1962 = vunpack.c.h.b16 %v61
    %v1963 = vunpack.c.l.b16 %v62
    %v1964 = vunpack.c.h.b16 %v62
    %v1965 = vunpack.c.l.b16 %v63
    %v1966 = vunpack.c.h.b16 %v63
    %v1967 = vunpack.c.l.b16 %v64
    %v1968 = vunpack.c.h.b16 %v64
    %v1969 = vunpack.c.l.b16 %v65
    %v1970 = vunpack.c.h.b16 %v65
    %v1971 = vunpack.c.l.b16 %v66
    %v1972 = vunpack.c.h.b16 %v66
    %v1973 = vunpack.c.l.b16 %v67
    %v1974 = vunpack.c.h.b16 %v67
    %v1975 = vunpack.c.l.b16 %v68
    %v1976 = vunpack.c.h.b16 %v68
    %v1977 = vunpack.c.l.b16 %v69
    %v1978 = vunpack.c.h.b16 %v69
    %v1979 = vunpack.c.l.b16 %v70
    %v1980 = vunpack.c.h.b16 %v70
    %v1981 = vunpack.c.l.b16 %v71
    %v1982 = vunpack.c.h.b16 %v71
    %v1983 = vunpack.c.l.b16 %v72
    %v1984 = vunpack.c.h.b16 %v72
    %v1985 = vunpack.c.l.b16 %v73
    %v1986 = vunpack.c.h.b16 %v73
    %v1987 = vunpack.c.l.b16 %v74
    %v1988 = vunpack.c.h.b16 %v74
    %v1989 = vunpack.c.l.b16 %v75
    %v1990 = vunpack.c.h.b16 %v75
    %v1991 = vunpack.c.l.b16 %v76
    %v1992 = vunpack.c.h.b16 %v76
    %v1993 = vunpack.c.l.b16 %v77
    %v1994 = vunpack.c.h.b16 %v77
    %v1995 = vunpack.c.l.b16 %v78
    %v1996 = vunpack.c.h.b16 %v78
    %v1997 = vunpack.c.l.b16 %v79
    %v1998 = vunpack.c.h.b16 %v79
    %v1999 = vunpack.c.l.b16 %v80
    %v2000 = vunpack.c.h.b16 %v80
    %v2001 = vunpack.c.l.b16 %v81
    %v2002 = vunpack.c.h.b16 %v81
    %v2003 = vunpack.c.l.b16 %v82
    %v2004 = vunpack.c.h.b16 %v82
    %v2005 = vunpack.c.l.b16 %v83
    %v2006 = vunpack.c.h.b16 %v83
    %v2007 = vunpack.c.l.b16 %v84
    %v2008 = vunpack.c.h.b16 %v84
    %v2009 = vunpack.c.l.b16 %v85
    %v2010 = vunpack.c.h.b16 %v85
    %v2011 = vunpack.c.l.b16 %v86
    %v2012 = vunpack.c.h.b16 %v86
    %v2013 = vunpack.c.l.b16 %v87
    %v2014 = vunpack.c.h.b16 %v87
    %v2015 = vunpack.c.l.b16 %v88
    %v2016 = vunpack.c.h.b16 %v88
    %v2017 = vunpack.c.l.b16 %v89
    %v2018 = vunpack.c.h.b16 %v89
    %v2019 = vunpack.c.l.b16 %v90
    %v2020 = vunpack.c.h.b16 %v90
    %v2021 = vunpack.c.l.b16 %v91
    %v2022 = vunpack.c.h.b16 %v91
    %v2023 = vunpack.c.l.b16 %v92
    %v2024 = vunpack.c.h.b16 %v92
    %v2025 = vunpack.c.l.b16 %v93
    %v2026 = vunpack.c.h.b16 %v93
    %v2027 = vunpack.c.l.b16 %v94
    %v2028 = vunpack.c.h.b16 %v94
    %v2029 = vunpack.c.l.b16 %v95
    %v2030 = vunpack.c.h.b16 %v95
    %v2031 = vunpack.c.l.b16 %v96
    %v2032 = vunpack.c.h.b16 %v96
    %v2033 = vunpack.c.l.b16 %v97
    %v2034 = vunpack.c.h.b16 %v97
    %v2035 = vunpack.c.l.b16 %v98
    %v2036 = vunpack.c.h.b16 %v98
    %v2037 = vunpack.c.l.b16 %v99
    %v2038 = vunpack.c.h.b16 %v99
    %v2039 = vunpack.c.l.b16 %v100
    %v2040 = vunpack.c.h.b16 %v100
    %v2041 = vunpack.c.l.b16 %v101
    %v2042 = vunpack.c.h.b16 %v101
    %v2043 = vunpack.c.l.b16 %v102
    %v2044 = vunpack.c.h.b16 %v102
    %v2045 = vunpack.c.l.b16 %v103
    %v2046 = vunpack.c.h.b16 %v103
    %v2047 = vunpack.c.l.b16 %v104
    %v2048 = vunpack.c.h.b16 %v104
    %v2049 = vunpack.c.l.b16 %v105
    %v2050 = vunpack.c.h.b16 %v105
    %v2051 = vunpack.c.l.b16 %v106
    %v2052 = vunpack.c.h.b16 %v106
    %v2053 = vunpack.c.l.b16 %v107
    %v2054 = vunpack.c.h.b16 %v107
    %v2055 = vunpack.c.l.b16 %v108
    %v2056 = vunpack.c.h.b16 %v108
    %v2057 = vunpack.c.l.b16 %v109
    %v2058 = vunpack.c.h.b16 %v109
    %v2059 = vunpack.c.l.b16 %v110
    %v2060 = vunpack.c.h.b16 %v110
    %v2061 = vunpack.c.l.b16 %v111
    %v2062 = vunpack.c.h.b16 %v111
    %v2063 = vunpack.c.l.b16 %v112
    %v2064 = vunpack.c.h.b16 %v112
    %v2065 = vunpack.c.l.b16 %v113
    %v2066 = vunpack.c.h.b16 %v113
    %v2067 = vunpack.c.l.b16 %v114
    %v2068 = vunpack.c.h.b16 %v114
    %v2069 = vunpack.c.l.b16 %v115
    %v2070 = vunpack.c.h.b16 %v115
    %v2071 = vunpack.c.l.b16 %v116
    %v2072 = vunpack.c.h.b16 %v116
    %v2073 = vunpack.c.l.b16 %v117
    %v2074 = vunpack.c.h.b16 %v117
    %v2075 = vunpack.c.l.b16 %v118
    %v2076 = vunpack.c.h.b16 %v118
    %v2077 = vunpack.c.l.b16 %v119
    %v2078 = vunpack.c.h.b16 %v119
    %v2079 = vunpack.c.l.b16 %v120
    %v2080 = vunpack.c.h.b16 %v120
    %v2081 = vunpack.c.l.b16 %v121
    %v2082 = vunpack.c.h.b16 %v121
    %v2083 = vunpack.c.l.b16 %v122
    %v2084 = vunpack.c.h.b16 %v122
    %v2085 = vunpack.c.l.b16 %v123
    %v2086 = vunpack.c.h.b16 %v123
    %v2087 = vunpack.c.l.b16 %v124
    %v2088 = vunpack.c.h.b16 %v124
    %v2089 = vunpack.c.l.b16 %v125
    %v2090 = vunpack.c.h.b16 %v125
    %v2091 = vunpack.c.l.b16 %v126
    %v2092 = vunpack.c.h.b16 %v126
    %v2093 = vunpack.c.l.b16 %v127
    %v2094 = vunpack.c.h.b16 %v127
    %v2095 = vunpack.c.l.b16 %v128
    %v2096 = vunpack.c.h.b16 %v128
    %v2097 = vunpack.c.l.b16 %v129
    %v2098 = vunpack.c.h.b16 %v129
    %v2099 = vunpack.c.l.b16 %v130
    %v2100 = vunpack.c.h.b16 %v130
    %v2101 = vunpack.c.l.b16 %v131
    %v2102 = vunpack.c.h.b16 %v131
    %v2103 = vunpack.c.l.b16 %v132
    %v2104 = vunpack.c.h.b16 %v132
    %v2105 = vunpack.c.l.b16 %v133
    %v2106 = vunpack.c.h.b16 %v133
    %v2107 = vunpack.c.l.b16 %v134
    %v2108 = vunpack.c.h.b16 %v134
    %v2109 = vunpack.c.l.b16 %v135
    %v2110 = vunpack.c.h.b16 %v135
    %v2111 = vunpack.c.l.b16 %v136
    %v2112 = vunpack.c.h.b16 %v136
    %v2113 = vunpack.c.l.b16 %v137
    %v2114 = vunpack.c.h.b16 %v137
    %v2115 = vunpack.c.l.b16 %v138
    %v2116 = vunpack.c.h.b16 %v138
    %v2117 = vunpack.c.l.b16 %v139
    %v2118 = vunpack.c.h.b16 %v139
    %v2119 = vunpack.c.l.b16 %v140
    %v2120 = vunpack.c.h.b16 %v140
    %v2121 = vunpack.c.l.b16 %v141
    %v2122 = vunpack.c.h.b16 %v141
    %v2123 = vunpack.c.l.b16 %v142
    %v2124 = vunpack.c.h.b16 %v142
    %v2125 = vunpack.c.l.b16 %v143
    %v2126 = vunpack.c.h.b16 %v143
    %v2127 = vunpack.c.l.b16 %v144
    %v2128 = vunpack.c.h.b16 %v144
    %v2129 = vunpack.c.l.b16 %v145
    %v2130 = vunpack.c.h.b16 %v145
    %v2131 = vunpack.c.l.b16 %v146
    %v2132 = vunpack.c.h.b16 %v146
    %v2133 = vunpack.c.l.b16 %v147
    %v2134 = vunpack.c.h.b16 %v147
    %v2135 = vunpack.c.l.b16 %v148
    %v2136 = vunpack.c.h.b16 %v148
    %v2137 = vunpack.c.l.b16 %v149
    %v2138 = vunpack.c.h.b16 %v149
    %v2139 = vunpack.c.l.b16 %v150
    %v2140 = vunpack.c.h.b16 %v150
    %v2141 = vunpack.c.l.b16 %v151
    %v2142 = vunpack.c.h.b16 %v151
    %v2143 = vunpack.c.l.b16 %v152
    %v2144 = vunpack.c.h.b16 %v152
    %v2145 = vunpack.c.l.b16 %v153
    %v2146 = vunpack.c.h.b16 %v153
    %v2147 = vunpack.c.l.b16 %v154
    %v2148 = vunpack.c.h.b16 %v154
    %v2149 = vunpack.c.l.b16 %v155
    %v2150 = vunpack.c.h.b16 %v155
    %v2151 = vunpack.c.l.b16 %v156
    %v2152 = vunpack.c.h.b16 %v156
    %v2153 = vunpack.c.l.b16 %v157
    %v2154 = vunpack.c.h.b16 %v157
    %v2155 = vunpack.c.l.b16 %v158
    %v2156 = vunpack.c.h.b16 %v158
    %v2157 = vunpack.c.l.b16 %v159
    %v2158 = vunpack.c.h.b16 %v159
    %v2159 = vunpack.c.l.b16 %v160
    %v2160 = vunpack.c.h.b16 %v160
    %v2161 = vunpack.c.l.b16 %v161
    %v2162 = vunpack.c.h.b16 %v161
    %v2163 = vunpack.c.l.b16 %v162
    %v2164 = vunpack.c.h.b16 %v162
    %v2165 = vunpack.c.l.b16 %v163
    %v2166 = vunpack.c.h.b16 %v163
    %v2167 = vunpack.c.l.b16 %v164
    %v2168 = vunpack.c.h.b16 %v164
    %v2169 = vunpack.c.l.b16 %v165
    %v2170 = vunpack.c.h.b16 %v165
    %v2171 = vunpack.c.l.b16 %v166
    %v2172 = vunpack.c.h.b16 %v166
    %v2173 = vunpack.c.l.b16 %v167
    %v2174 = vunpack.c.h.b16 %v167
    %v2175 = vunpack.c.l.b16 %v168
    %v2176 = vunpack.c.h.b16 %v168
    %v2177 = vunpack.c.l.b16 %v169
    %v2178 = vunpack.c.h.b16 %v169
    %v2179 = vunpack.c.l.b16 %v170
    %v2180 = vunpack.c.h.b16 %v170
    %v2181 = vunpack.c.l.b16 %v171
    %v2182 = vunpack.c.h.b16 %v171
    %v2183 = vunpack.c.l.b16 %v172
    %v2184 = vunpack.c.h.b16 %v172
    %v2185 = vunpack.c.l.b16 %v173
    %v2186 = vunpack.c.h.b16 %v173
    %v2187 = vunpack.c.l.b16 %v174
    %v2188 = vunpack.c.h.b16 %v174
    %v2189 = vunpack.c.l.b16 %v175
    %v2190 = vunpack.c.h.b16 %v175
    %v2191 = vunpack.c.l.b16 %v176
    %v2192 = vunpack.c.h.b16 %v176
    %v2193 = vunpack.c.l.b16 %v177
    %v2194 = vunpack.c.h.b16 %v177
    %v2195 = vunpack.c.l.b16 %v178
    %v2196 = vunpack.c.h.b16 %v178
    %v2197 = vunpack.c.l.b16 %v179
    %v2198 = vunpack.c.h.b16 %v179
    %v2199 = vunpack.c.l.b16 %v180
    %v2200 = vunpack.c.h.b16 %v180
    %v2201 = vunpack.c.l.b16 %v181
    %v2202 = vunpack.c.h.b16 %v181
    %v2203 = vunpack.c.l.b16 %v182
    %v2204 = vunpack.c.h.b16 %v182
    %v2205 = vunpack.c.l.b16 %v183
    %v2206 = vunpack.c.h.b16 %v183
    %v2207 = vunpack.c.l.b16 %v184
    %v2208 = vunpack.c.h.b16 %v184
    %v2209 = vunpack.c.l.b16 %v185
    %v2210 = vunpack.c.h.b16 %v185
    %v2211 = vunpack.c.l.b16 %v186
    %v2212 = vunpack.c.h.b16 %v186
    %v2213 = vunpack.c.l.b16 %v187
    %v2214 = vunpack.c.h.b16 %v187
    %v2215 = vunpack.c.l.b16 %v188
    %v2216 = vunpack.c.h.b16 %v188
    %v2217 = vunpack.c.l.b16 %v189
    %v2218 = vunpack.c.h.b16 %v189
    %v2219 = vunpack.c.l.b16 %v190
    %v2220 = vunpack.c.h.b16 %v190
    %v2221 = vunpack.c.l.b16 %v191
    %v2222 = vunpack.c.h.b16 %v191
    %v2223 = vunpack.c.l.b16 %v192
    %v2224 = vunpack.c.h.b16 %v192
    %v2225 = vunpack.c.l.b16 %v193
    %v2226 = vunpack.c.h.b16 %v193
    %v2227 = vunpack.c.l.b16 %v194
    %v2228 = vunpack.c.h.b16 %v194
    %v2229 = vunpack.c.l.b16 %v195
    %v2230 = vunpack.c.h.b16 %v195
    %v2231 = vunpack.c.l.b16 %v196
    %v2232 = vunpack.c.h.b16 %v196
    %v2233 = vunpack.c.l.b16 %v197
    %v2234 = vunpack.c.h.b16 %v197
    %v2235 = vunpack.c.l.b16 %v198
    %v2236 = vunpack.c.h.b16 %v198
    %v2237 = vunpack.c.l.b16 %v199
    %v2238 = vunpack.c.h.b16 %v199
    %v2239 = vunpack.c.l.b16 %v200
    %v2240 = vunpack.c.h.b16 %v200
    %v2241 = vunpack.c.l.b16 %v201
    %v2242 = vunpack.c.h.b16 %v201
    %v2243 = vunpack.c.l.b16 %v202
    %v2244 = vunpack.c.h.b16 %v202
    %v2245 = vunpack.c.l.b16 %v203
    %v2246 = vunpack.c.h.b16 %v203
    %v2247 = vunpack.c.l.b16 %v204
    %v2248 = vunpack.c.h.b16 %v204
    %v2249 = vunpack.c.l.b16 %v205
    %v2250 = vunpack.c.h.b16 %v205
    %v2251 = vunpack.c.l.b16 %v206
    %v2252 = vunpack.c.h.b16 %v206
    %v2253 = vunpack.c.l.b16 %v207
    %v2254 = vunpack.c.h.b16 %v207
    %v2255 = vunpack.c.l.b16 %v208
    %v2256 = vunpack.c.h.b16 %v208
    %v2257 = vunpack.c.l.b16 %v209
    %v2258 = vunpack.c.h.b16 %v209
    %v2259 = vunpack.c.l.b16 %v210
    %v2260 = vunpack.c.h.b16 %v210
    %v2261 = vunpack.c.l.b16 %v211
    %v2262 = vunpack.c.h.b16 %v211
    %v2263 = vunpack.c.l.b16 %v212
    %v2264 = vunpack.c.h.b16 %v212
    %v2265 = vunpack.c.l.b16 %v213
    %v2266 = vunpack.c.h.b16 %v213
    %v2267 = vunpack.c.l.b16 %v214
    %v2268 = vunpack.c.h.b16 %v214
    %v2269 = vunpack.c.l.b16 %v215
    %v2270 = vunpack.c.h.b16 %v215
    %v2271 = vunpack.c.l.b16 %v216
    %v2272 = vunpack.c.h.b16 %v216
    %v2273 = vunpack.c.l.b16 %v217
    %v2274 = vunpack.c.h.b16 %v217
    %v2275 = vunpack.c.l.b16 %v218
    %v2276 = vunpack.c.h.b16 %v218
    %v2277 = vunpack.c.l.b16 %v219
    %v2278 = vunpack.c.h.b16 %v219
    %v2279 = vunpack.c.l.b16 %v220
    %v2280 = vunpack.c.h.b16 %v220
    %v2281 = vunpack.c.l.b16 %v221
    %v2282 = vunpack.c.h.b16 %v221
    %v2283 = vunpack.c.l.b16 %v222
    %v2284 = vunpack.c.h.b16 %v222
    %v2285 = vunpack.c.l.b16 %v223
    %v2286 = vunpack.c.h.b16 %v223
    %v2287 = vunpack.c.l.b16 %v224
    %v2288 = vunpack.c.h.b16 %v224
    %v2289 = vunpack.c.l.b16 %v225
    %v2290 = vunpack.c.h.b16 %v225
    %v2291 = vunpack.c.l.b16 %v226
    %v2292 = vunpack.c.h.b16 %v226
    %v2293 = vunpack.c.l.b16 %v227
    %v2294 = vunpack.c.h.b16 %v227
    %v2295 = vunpack.c.l.b16 %v228
    %v2296 = vunpack.c.h.b16 %v228
    %v2297 = vunpack.c.l.b16 %v229
    %v2298 = vunpack.c.h.b16 %v229
    %v2299 = vunpack.c.l.b16 %v230
    %v2300 = vunpack.c.h.b16 %v230
    %v2301 = vunpack.c.l.b16 %v231
    %v2302 = vunpack.c.h.b16 %v231
    %v2303 = vunpack.c.l.b16 %v232
    %v2304 = vunpack.c.h.b16 %v232
    %v2305 = vunpack.c.l.b16 %v233
    %v2306 = vunpack.c.h.b16 %v233
    %v2307 = vunpack.c.l.b16 %v234
    %v2308 = vunpack.c.h.b16 %v234
    %v2309 = vunpack.c.l.b16 %v235
    %v2310 = vunpack.c.h.b16 %v235
    %v2311 = vunpack.c.l.b16 %v236
    %v2312 = vunpack.c.h.b16 %v236
    %v2313 = vunpack.c.l.b16 %v237
    %v2314 = vunpack.c.h.b16 %v237
    %v2315 = vunpack.c.l.b16 %v238
    %v2316 = vunpack.c.h.b16 %v238
    %v2317 = vunpack.c.l.b16 %v239
    %v2318 = vunpack.c.h.b16 %v239
    %v2319 = vunpack.c.l.b16 %v240
    %v2320 = vunpack.c.h.b16 %v240
    %v2321 = vunpack.c.l.b16 %v241
    %v2322 = vunpack.c.h.b16 %v241
    %v2323 = vunpack.c.l.b16 %v242
    %v2324 = vunpack.c.h.b16 %v242
    %v2325 = vunpack.c.l.b16 %v243
    %v2326 = vunpack.c.h.b16 %v243
    %v2327 = vunpack.c.l.b16 %v244
    %v2328 = vunpack.c.h.b16 %v244
    %v2329 = vunpack.c.l.b16 %v245
    %v2330 = vunpack.c.h.b16 %v245
    %v2331 = vunpack.c.l.b16 %v246
    %v2332 = vunpack.c.h.b16 %v246
    %v2333 = vunpack.c.l.b16 %v247
    %v2334 = vunpack.c.h.b16 %v247
    %v2335 = vunpack.c.l.b16 %v248
    %v2336 = vunpack.c.h.b16 %v248
    %v2337 = vunpack.c.l.b16 %v249
    %v2338 = vunpack.c.h.b16 %v249
    %v2339 = vunpack.c.l.b16 %v250
    %v2340 = vunpack.c.h.b16 %v250
    %v2341 = vunpack.c.l.b16 %v251
    %v2342 = vunpack.c.h.b16 %v251
    %v2343 = vunpack.c.l.b16 %v252
    %v2344 = vunpack.c.h.b16 %v252
    %v2345 = vunpack.c.l.b16 %v253
    %v2346 = vunpack.c.h.b16 %v253
    %v2347 = vunpack.c.l.b16 %v254
    %v2348 = vunpack.c.h.b16 %v254
    %v2349 = vunpack.c.l.b16 %v255
    %v2350 = vunpack.c.h.b16 %v255
    %v2351 = vunpack.c.l.b16 %v256
    %v2352 = vunpack.c.h.b16 %v256
    %v2353 = vunpack.c.l.b16 %v257
    %v2354 = vunpack.c.h.b16 %v257
    %v2355 = vunpack.c.l.b16 %v258
    %v2356 = vunpack.c.h.b16 %v258
    %v2357 = vunpack.c.l.b16 %v259
    %v2358 = vunpack.c.h.b16 %v259
    %v2359 = vunpack.c.l.b16 %v260
    %v2360 = vunpack.c.h.b16 %v260
    %v2361 = vunpack.c.l.b16 %v261
    %v2362 = vunpack.c.h.b16 %v261
    %v2363 = vunpack.c.l.b16 %v262
    %v2364 = vunpack.c.h.b16 %v262
    %v2365 = vunpack.c.l.b16 %v263
    %v2366 = vunpack.c.h.b16 %v263
    %v2367 = vunpack.c.l.b16 %v264
    %v2368 = vunpack.c.h.b16 %v264
    %v2369 = vunpack.c.l.b16 %v265
    %v2370 = vunpack.c.h.b16 %v265
    %v2371 = vunpack.c.l.b16 %v266
    %v2372 = vunpack.c.h.b16 %v266
    %v2373 = vunpack.c.l.b16 %v267
    %v2374 = vunpack.c.h.b16 %v267
    %v2375 = vunpack.c.l.b16 %v268
    %v2376 = vunpack.c.h.b16 %v268
    %v2377 = vunpack.c.l.b16 %v269
    %v2378 = vunpack.c.h.b16 %v269
    %v2379 = vunpack.c.l.b16 %v270
    %v2380 = vunpack.c.h.b16 %v270
    %v2381 = vunpack.c.l.b16 %v271
    %v2382 = vunpack.c.h.b16 %v271
    %v2383 = vunpack.c.l.b16 %v272
    %v2384 = vunpack.c.h.b16 %v272
    %v2385 = vunpack.c.l.b16 %v273
    %v2386 = vunpack.c.h.b16 %v273
    %v2387 = vunpack.c.l.b16 %v274
    %v2388 = vunpack.c.h.b16 %v274
    %v2389 = vunpack.c.l.b16 %v275
    %v2390 = vunpack.c.h.b16 %v275
    %v2391 = vunpack.c.l.b16 %v276
    %v2392 = vunpack.c.h.b16 %v276
    %v2393 = vunpack.c.l.b16 %v277
    %v2394 = vunpack.c.h.b16 %v277
    %v2395 = vunpack.c.l.b16 %v278
    %v2396 = vunpack.c.h.b16 %v278
    %v2397 = vunpack.c.l.b16 %v279
    %v2398 = vunpack.c.h.b16 %v279
    %v2399 = vunpack.c.l.b16 %v280
    %v2400 = vunpack.c.h.b16 %v280
    %v2401 = vunpack.c.l.b16 %v281
    %v2402 = vunpack.c.h.b16 %v281
    %v2403 = vunpack.c.l.b16 %v282
    %v2404 = vunpack.c.h.b16 %v282
    %v2405 = vunpack.c.l.b16 %v283
    %v2406 = vunpack.c.h.b16 %v283
    %v2407 = vunpack.c.l.b16 %v284
    %v2408 = vunpack.c.h.b16 %v284
    %v2409 = vunpack.c.l.b16 %v285
    %v2410 = vunpack.c.h.b16 %v285
    %v2411 = vunpack.c.l.b16 %v286
    %v2412 = vunpack.c.h.b16 %v286
    %v2413 = vunpack.c.l.b16 %v287
    %v2414 = vunpack.c.h.b16 %v287
    %v2415 = vunpack.c.l.b16 %v288
    %v2416 = vunpack.c.h.b16 %v288
    %v2417 = vunpack.c.l.b16 %v289
    %v2418 = vunpack.c.h.b16 %v289
    %v2419 = vunpack.c.l.b16 %v290
    %v2420 = vunpack.c.h.b16 %v290
    %v2421 = vunpack.c.l.b16 %v291
    %v2422 = vunpack.c.h.b16 %v291
    %v2423 = vunpack.c.l.b16 %v292
    %v2424 = vunpack.c.h.b16 %v292
    %v2425 = vunpack.c.l.b16 %v293
    %v2426 = vunpack.c.h.b16 %v293
    %v2427 = vunpack.c.l.b16 %v294
    %v2428 = vunpack.c.h.b16 %v294
    %v2429 = vunpack.c.l.b16 %v295
    %v2430 = vunpack.c.h.b16 %v295
    %v2431 = vunpack.c.l.b16 %v296
    %v2432 = vunpack.c.h.b16 %v296
    %v2433 = vunpack.c.l.b16 %v297
    %v2434 = vunpack.c.h.b16 %v297
    %v2435 = vunpack.c.l.b16 %v298
    %v2436 = vunpack.c.h.b16 %v298
    %v2437 = vunpack.c.l.b16 %v299
    %v2438 = vunpack.c.h.b16 %v299
    %v2439 = vunpack.c.l.b16 %v300
    %v2440 = vunpack.c.h.b16 %v300
    %v2441 = vunpack.c.l.b16 %v301
    %v2442 = vunpack.c.h.b16 %v301
    %v2443 = vunpack.c.l.b16 %v302
    %v2444 = vunpack.c.h.b16 %v302
    %v2445 = vunpack.c.l.b16 %v303
    %v2446 = vunpack.c.h.b16 %v303
    %v2447 = vunpack.c.l.b16 %v304
    %v2448 = vunpack.c.h.b16 %v304
    %v2449 = vunpack.c.l.b16 %v305
    %v2450 = vunpack.c.h.b16 %v305
    %v2451 = vunpack.c.l.b16 %v306
    %v2452 = vunpack.c.h.b16 %v306
    %v2453 = vunpack.c.l.b16 %v307
    %v2454 = vunpack.c.h.b16 %v307
    %v2455 = vunpack.c.l.b16 %v308
    %v2456 = vunpack.c.h.b16 %v308
    %v2457 = vunpack.c.l.b16 %v309
    %v2458 = vunpack.c.h.b16 %v309
    %v2459 = vunpack.c.l.b16 %v310
    %v2460 = vunpack.c.h.b16 %v310
    %v2461 = vunpack.c.l.b16 %v311
    %v2462 = vunpack.c.h.b16 %v311
    %v2463 = vunpack.c.l.b16 %v312
    %v2464 = vunpack.c.h.b16 %v312
    %v2465 = vunpack.c.l.b16 %v313
    %v2466 = vunpack.c.h.b16 %v313
    %v2467 = vunpack.c.l.b16 %v314
    %v2468 = vunpack.c.h.b16 %v314
    %v2469 = vunpack.c.l.b16 %v315
    %v2470 = vunpack.c.h.b16 %v315
    %v2471 = vunpack.c.l.b16 %v316
    %v2472 = vunpack.c.h.b16 %v316
    %v2473 = vunpack.c.l.b16 %v317
    %v2474 = vunpack.c.h.b16 %v317
    %v2475 = vunpack.c.l.b16 %v318
    %v2476 = vunpack.c.h.b16 %v318
    %v2477 = vunpack.c.l.b16 %v319
    %v2478 = vunpack.c.h.b16 %v319
    %v2479 = vunpack.c.l.b16 %v320
    %v2480 = vunpack.c.h.b16 %v320
    %v2481 = vunpack.c.l.b16 %v321
    %v2482 = vunpack.c.h.b16 %v321
    %v2483 = vunpack.c.l.b16 %v322
    %v2484 = vunpack.c.h.b16 %v322
    %v2485 = vunpack.c.l.b16 %v323
    %v2486 = vunpack.c.h.b16 %v323
    %v2487 = vunpack.c.l.b16 %v324
    %v2488 = vunpack.c.h.b16 %v324
    %v2489 = vunpack.c.l.b16 %v325
    %v2490 = vunpack.c.h.b16 %v325
    %v2491 = vunpack.c.l.b16 %v326
    %v2492 = vunpack.c.h.b16 %v326
    %v2493 = vunpack.c.l.b16 %v327
    %v2494 = vunpack.c.h.b16 %v327
    %v2495 = vunpack.c.l.b16 %v328
    %v2496 = vunpack.c.h.b16 %v328
    %v2497 = vunpack.c.l.b16 %v329
    %v2498 = vunpack.c.h.b16 %v329
    %v2499 = vunpack.c.l.b16 %v330
    %v2500 = vunpack.c.h.b16 %v330
    %v2501 = vunpack.c.l.b16 %v331
    %v2502 = vunpack.c.h.b16 %v331
    %v2503 = vunpack.c.l.b16 %v332
    %v2504 = vunpack.c.h.b16 %v332
    %v2505 = vunpack.c.l.b16 %v333
    %v2506 = vunpack.c.h.b16 %v333
    %v2507 = vunpack.c.l.b16 %v334
    %v2508 = vunpack.c.h.b16 %v334
    %v2509 = vunpack.c.l.b16 %v335
    %v2510 = vunpack.c.h.b16 %v335
    %v2511 = vunpack.c.l.b16 %v336
    %v2512 = vunpack.c.h.b16 %v336
    %v2513 = vunpack.c.l.b16 %v337
    %v2514 = vunpack.c.h.b16 %v337
    %v2515 = vunpack.c.l.b16 %v338
    %v2516 = vunpack.c.h.b16 %v338
    %v2517 = vunpack.c.l.b16 %v339
    %v2518 = vunpack.c.h.b16 %v339
    %v2519 = vunpack.c.l.b16 %v340
    %v2520 = vunpack.c.h.b16 %v340
    %v2521 = vunpack.c.l.b16 %v341
    %v2522 = vunpack.c.h.b16 %v341
    %v2523 = vunpack.c.l.b16 %v342
    %v2524 = vunpack.c.h.b16 %v342
    %v2525 = vunpack.c.l.b16 %v343
    %v2526 = vunpack.c.h.b16 %v343
    %v2527 = vunpack.c.l.b16 %v344
    %v2528 = vunpack.c.h.b16 %v344
    %v2529 = vunpack.c.l.b16 %v345
    %v2530 = vunpack.c.h.b16 %v345
    %v2531 = vunpack.c.l.b16 %v346
    %v2532 = vunpack.c.h.b16 %v346
    %v2533 = vunpack.c.l.b16 %v347
    %v2534 = vunpack.c.h.b16 %v347
    %v2535 = vunpack.c.l.b16 %v348
    %v2536 = vunpack.c.h.b16 %v348
    %v2537 = vunpack.c.l.b16 %v349
    %v2538 = vunpack.c.h.b16 %v349
    %v2539 = vunpack.c.l.b16 %v350
    %v2540 = vunpack.c.h.b16 %v350
    %v2541 = vunpack.c.l.b16 %v351
    %v2542 = vunpack.c.h.b16 %v351
    %v2543 = vunpack.c.l.b16 %v352
    %v2544 = vunpack.c.h.b16 %v352
    %v2545 = vunpack.c.l.b16 %v353
    %v2546 = vunpack.c.h.b16 %v353
    %v2547 = vunpack.c.l.b16 %v354
    %v2548 = vunpack.c.h.b16 %v354
    %v2549 = vunpack.c.l.b16 %v355
    %v2550 = vunpack.c.h.b16 %v355
    %v2551 = vunpack.c.l.b16 %v356
    %v2552 = vunpack.c.h.b16 %v356
    %v2553 = vunpack.c.l.b16 %v357
    %v2554 = vunpack.c.h.b16 %v357
    %v2555 = vunpack.c.l.b16 %v358
    %v2556 = vunpack.c.h.b16 %v358
    %v2557 = vunpack.c.l.b16 %v359
    %v2558 = vunpack.c.h.b16 %v359
    %v2559 = vunpack.c.l.b16 %v360
    %v2560 = vunpack.c.h.b16 %v360
    %v2561 = vunpack.c.l.b16 %v361
    %v2562 = vunpack.c.h.b16 %v361
    %v2563 = vunpack.c.l.b16 %v362
    %v2564 = vunpack.c.h.b16 %v362
    %v2565 = vunpack.c.l.b16 %v363
    %v2566 = vunpack.c.h.b16 %v363
    %v2567 = vunpack.c.l.b16 %v364
    %v2568 = vunpack.c.h.b16 %v364
    %v2569 = vunpack.c.l.b16 %v365
    %v2570 = vunpack.c.h.b16 %v365
    %v2571 = vunpack.c.l.b16 %v366
    %v2572 = vunpack.c.h.b16 %v366
    %v2573 = vunpack.c.l.b16 %v367
    %v2574 = vunpack.c.h.b16 %v367
    %v2575 = vunpack.c.l.b16 %v368
    %v2576 = vunpack.c.h.b16 %v368
    %v2577 = vunpack.c.l.b16 %v369
    %v2578 = vunpack.c.h.b16 %v369
    %v2579 = vunpack.c.l.b16 %v370
    %v2580 = vunpack.c.h.b16 %v370
    %v2581 = vunpack.c.l.b16 %v371
    %v2582 = vunpack.c.h.b16 %v371
    %v2583 = vunpack.c.l.b16 %v372
    %v2584 = vunpack.c.h.b16 %v372
    %v2585 = vunpack.c.l.b16 %v373
    %v2586 = vunpack.c.h.b16 %v373
    %v2587 = vunpack.c.l.b16 %v374
    %v2588 = vunpack.c.h.b16 %v374
    %v2589 = vunpack.c.l.b16 %v375
    %v2590 = vunpack.c.h.b16 %v375
    %v2591 = vunpack.c.l.b16 %v376
    %v2592 = vunpack.c.h.b16 %v376
    %v2593 = vunpack.c.l.b16 %v377
    %v2594 = vunpack.c.h.b16 %v377
    %v2595 = vunpack.c.l.b16 %v378
    %v2596 = vunpack.c.h.b16 %v378
    %v2597 = vunpack.c.l.b16 %v379
    %v2598 = vunpack.c.h.b16 %v379
    %v2599 = vunpack.c.l.b16 %v380
    %v2600 = vunpack.c.h.b16 %v380
    %v2601 = vunpack.c.l.b16 %v381
    %v2602 = vunpack.c.h.b16 %v381
    %v2603 = vunpack.c.l.b16 %v382
    %v2604 = vunpack.c.h.b16 %v382
    %v2605 = vunpack.c.l.b16 %v383
    %v2606 = vunpack.c.h.b16 %v383
    %v2607 = vunpack.c.l.b16 %v384
    %v2608 = vunpack.c.h.b16 %v384
    %v2609 = vunpack.c.l.b16 %v385
    %v2610 = vunpack.c.h.b16 %v385
    %v2611 = vunpack.c.l.b16 %v386
    %v2612 = vunpack.c.h.b16 %v386
    %v2613 = vunpack.c.l.b16 %v387
    %v2614 = vunpack.c.h.b16 %v387
    %v2615 = vunpack.c.l.b16 %v388
    %v2616 = vunpack.c.h.b16 %v388
    %v2617 = vunpack.c.l.b16 %v389
    %v2618 = vunpack.c.h.b16 %v389
    %v2619 = vunpack.c.l.b16 %v390
    %v2620 = vunpack.c.h.b16 %v390
    %v2621 = vunpack.c.l.b16 %v391
    %v2622 = vunpack.c.h.b16 %v391
    %v2623 = vunpack.c.l.b16 %v392
    %v2624 = vunpack.c.h.b16 %v392
    %v2625 = vunpack.c.l.b16 %v393
    %v2626 = vunpack.c.h.b16 %v393
    %v2627 = vunpack.c.l.b16 %v394
    %v2628 = vunpack.c.h.b16 %v394
    %v2629 = vunpack.c.l.b16 %v395
    %v2630 = vunpack.c.h.b16 %v395
    %v2631 = vunpack.c.l.b16 %v396
    %v2632 = vunpack.c.h.b16 %v396
    %v2633 = vunpack.c.l.b16 %v397
    %v2634 = vunpack.c.h.b16 %v397
    %v2635 = vunpack.c.l.b16 %v398
    %v2636 = vunpack.c.h.b16 %v398
    %v2637 = vunpack.c.l.b16 %v399
    %v2638 = vunpack.c.h.b16 %v399
    %v2639 = vunpack.c.l.b16 %v400
    %v2640 = vunpack.c.h.b16 %v400
    %v2641 = vunpack.c.l.b16 %v401
    %v2642 = vunpack.c.h.b16 %v401
    %v2643 = vunpack.c.l.b16 %v402
    %v2644 = vunpack.c.h.b16 %v402
    %v2645 = vunpack.c.l.b16 %v403
    %v2646 = vunpack.c.h.b16 %v403
    %v2647 = vunpack.c.l.b16 %v404
    %v2648 = vunpack.c.h.b16 %v404
    %v2649 = vunpack.c.l.b16 %v405
    %v2650 = vunpack.c.h.b16 %v405
    %v2651 = vunpack.c.l.b16 %v406
    %v2652 = vunpack.c.h.b16 %v406
    %v2653 = vunpack.c.l.b16 %v407
    %v2654 = vunpack.c.h.b16 %v407
    %v2655 = vunpack.c.l.b16 %v408
    %v2656 = vunpack.c.h.b16 %v408
    %v2657 = vunpack.c.l.b16 %v409
    %v2658 = vunpack.c.h.b16 %v409
    %v2659 = vunpack.c.l.b16 %v410
    %v2660 = vunpack.c.h.b16 %v410
    %v2661 = vunpack.c.l.b16 %v411
    %v2662 = vunpack.c.h.b16 %v411
    %v2663 = vunpack.c.l.b16 %v412
    %v2664 = vunpack.c.h.b16 %v412
    %v2665 = vunpack.c.l.b16 %v413
    %v2666 = vunpack.c.h.b16 %v413
    %v2667 = vunpack.c.l.b16 %v414
    %v2668 = vunpack.c.h.b16 %v414
    %v2669 = vunpack.c.l.b16 %v415
    %v2670 = vunpack.c.h.b16 %v415
    %v2671 = vunpack.c.l.b16 %v416
    %v2672 = vunpack.c.h.b16 %v416
    %v2673 = vunpack.c.l.b16 %v417
    %v2674 = vunpack.c.h.b16 %v417
    %v2675 = vunpack.c.l.b16 %v418
    %v2676 = vunpack.c.h.b16 %v418
    %v2677 = vunpack.c.l.b16 %v419
    %v2678 = vunpack.c.h.b16 %v419
    %v2679 = vunpack.c.l.b16 %v420
    %v2680 = vunpack.c.h.b16 %v420
    %v2681 = vunpack.c.l.b16 %v421
    %v2682 = vunpack.c.h.b16 %v421
    %v2683 = vunpack.c.l.b16 %v422
    %v2684 = vunpack.c.h.b16 %v422
    %v2685 = vunpack.c.l.b16 %v423
    %v2686 = vunpack.c.h.b16 %v423
    %v2687 = vunpack.c.l.b16 %v424
    %v2688 = vunpack.c.h.b16 %v424
    %v2689 = vunpack.c.l.b16 %v425
    %v2690 = vunpack.c.h.b16 %v425
    %v2691 = vunpack.c.l.b16 %v426
    %v2692 = vunpack.c.h.b16 %v426
    %v2693 = vunpack.c.l.b16 %v427
    %v2694 = vunpack.c.h.b16 %v427
    %v2695 = vunpack.c.l.b16 %v428
    %v2696 = vunpack.c.h.b16 %v428
    %v2697 = vunpack.c.l.b16 %v429
    %v2698 = vunpack.c.h.b16 %v429
    %v2699 = vunpack.c.l.b16 %v430
    %v2700 = vunpack.c.h.b16 %v430
    %v2701 = vunpack.c.l.b16 %v431
    %v2702 = vunpack.c.h.b16 %v431
    %v2703 = vunpack.c.l.b16 %v432
    %v2704 = vunpack.c.h.b16 %v432
    %v2705 = vunpack.c.l.b16 %v433
    %v2706 = vunpack.c.h.b16 %v433
    %v2707 = vunpack.c.l.b16 %v434
    %v2708 = vunpack.c.h.b16 %v434
    %v2709 = vunpack.c.l.b16 %v435
    %v2710 = vunpack.c.h.b16 %v435
    %v2711 = vunpack.c.l.b16 %v436
    %v2712 = vunpack.c.h.b16 %v436
    %v2713 = vunpack.c.l.b16 %v437
    %v2714 = vunpack.c.h.b16 %v437
    %v2715 = vunpack.c.l.b16 %v438
    %v2716 = vunpack.c.h.b16 %v438
    %v2717 = vunpack.c.l.b16 %v439
    %v2718 = vunpack.c.h.b16 %v439
    %v2719 = vunpack.c.l.b16 %v440
    %v2720 = vunpack.c.h.b16 %v440
    %v2721 = vunpack.c.l.b16 %v441
    %v2722 = vunpack.c.h.b16 %v441
    %v2723 = vunpack.c.l.b16 %v442
    %v2724 = vunpack.c.h.b16 %v442
    %v2725 = vunpack.c.l.b16 %v443
    %v2726 = vunpack.c.h.b16 %v443
    %v2727 = vunpack.c.l.b16 %v444
    %v2728 = vunpack.c.h.b16 %v444
    %v2729 = vunpack.c.l.b16 %v445
    %v2730 = vunpack.c.h.b16 %v445
    %v2731 = vunpack.c.l.b16 %v446
    %v2732 = vunpack.c.h.b16 %v446
    %v2733 = vunpack.c.l.b16 %v447
    %v2734 = vunpack.c.h.b16 %v447
    %v2735 = vunpack.c.l.b16 %v448
    %v2736 = vunpack.c.h.b16 %v448
    %v2737 = vunpack.c.l.b16 %v449
    %v2738 = vunpack.c.h.b16 %v449
    %v2739 = vunpack.c.l.b16 %v450
    %v2740 = vunpack.c.h.b16 %v450
    %v2741 = vunpack.c.l.b16 %v451
    %v2742 = vunpack.c.h.b16 %v451
    %v2743 = vunpack.c.l.b16 %v452
    %v2744 = vunpack.c.h.b16 %v452
    %v2745 = vunpack.c.l.b16 %v453
    %v2746 = vunpack.c.h.b16 %v453
    %v2747 = vunpack.c.l.b16 %v454
    %v2748 = vunpack.c.h.b16 %v454
    %v2749 = vunpack.c.l.b16 %v455
    %v2750 = vunpack.c.h.b16 %v455
    %v2751 = vunpack.c.l.b16 %v456
    %v2752 = vunpack.c.h.b16 %v456
    %v2753 = vunpack.c.l.b16 %v457
    %v2754 = vunpack.c.h.b16 %v457
    %v2755 = vunpack.c.l.b16 %v458
    %v2756 = vunpack.c.h.b16 %v458
    %v2757 = vunpack.c.l.b16 %v459
    %v2758 = vunpack.c.h.b16 %v459
    %v2759 = vunpack.c.l.b16 %v460
    %v2760 = vunpack.c.h.b16 %v460
    %v2761 = vunpack.c.l.b16 %v461
    %v2762 = vunpack.c.h.b16 %v461
    %v2763 = vunpack.c.l.b16 %v462
    %v2764 = vunpack.c.h.b16 %v462
    %v2765 = vunpack.c.l.b16 %v463
    %v2766 = vunpack.c.h.b16 %v463
    %v2767 = vunpack.c.l.b16 %v464
    %v2768 = vunpack.c.h.b16 %v464
    %v2769 = vunpack.c.l.b16 %v465
    %v2770 = vunpack.c.h.b16 %v465
    %v2771 = vunpack.c.l.b16 %v466
    %v2772 = vunpack.c.h.b16 %v466
    %v2773 = vunpack.c.l.b16 %v467
    %v2774 = vunpack.c.h.b16 %v467
    %v2775 = vunpack.c.l.b16 %v468
    %v2776 = vunpack.c.h.b16 %v468
    %v2777 = vunpack.c.l.b16 %v469
    %v2778 = vunpack.c.h.b16 %v469
    %v2779 = vunpack.c.l.b16 %v470
    %v2780 = vunpack.c.h.b16 %v470
    %v2781 = vunpack.c.l.b16 %v471
    %v2782 = vunpack.c.h.b16 %v471
    %v2783 = vunpack.c.l.b16 %v472
    %v2784 = vunpack.c.h.b16 %v472
    %v2785 = vunpack.c.l.b16 %v473
    %v2786 = vunpack.c.h.b16 %v473
    %v2787 = vunpack.c.l.b16 %v474
    %v2788 = vunpack.c.h.b16 %v474
    %v2789 = vunpack.c.l.b16 %v475
    %v2790 = vunpack.c.h.b16 %v475
    %v2791 = vunpack.c.l.b16 %v476
    %v2792 = vunpack.c.h.b16 %v476
    %v2793 = vunpack.c.l.b16 %v477
    %v2794 = vunpack.c.h.b16 %v477
    %v2795 = vunpack.c.l.b16 %v478
    %v2796 = vunpack.c.h.b16 %v478
    %v2797 = vunpack.c.l.b16 %v479
    %v2798 = vunpack.c.h.b16 %v479
    %v2799 = vunpack.c.l.b16 %v480
    %v2800 = vunpack.c.h.b16 %v480
    %v2801 = vunpack.c.l.b16 %v481
    %v2802 = vunpack.c.h.b16 %v481
    %v2803 = vunpack.c.l.b16 %v482
    %v2804 = vunpack.c.h.b16 %v482
    %v2805 = vunpack.c.l.b16 %v483
    %v2806 = vunpack.c.h.b16 %v483
    %v2807 = vunpack.c.l.b16 %v484
    %v2808 = vunpack.c.h.b16 %v484
    %v2809 = vunpack.c.l.b16 %v485
    %v2810 = vunpack.c.h.b16 %v485
    %v2811 = vunpack.c.l.b16 %v486
    %v2812 = vunpack.c.h.b16 %v486
    %v2813 = vunpack.c.l.b16 %v487
    %v2814 = vunpack.c.h.b16 %v487
    %v2815 = vunpack.c.l.b16 %v488
    %v2816 = vunpack.c.h.b16 %v488
    %v2817 = vunpack.c.l.b16 %v489
    %v2818 = vunpack.c.h.b16 %v489
    %v2819 = vunpack.c.l.b16 %v490
    %v2820 = vunpack.c.h.b16 %v490
    %v2821 = vunpack.c.l.b16 %v491
    %v2822 = vunpack.c.h.b16 %v491
    %v2823 = vunpack.c.l.b16 %v492
    %v2824 = vunpack.c.h.b16 %v492
    %v2825 = vunpack.c.l.b16 %v493
    %v2826 = vunpack.c.h.b16 %v493
    %v2827 = vunpack.c.l.b16 %v494
    %v2828 = vunpack.c.h.b16 %v494
    %v2829 = vunpack.c.l.b16 %v495
    %v2830 = vunpack.c.h.b16 %v495
    %v2831 = vunpack.c.l.b16 %v496
    %v2832 = vunpack.c.h.b16 %v496
    %v2833 = vunpack.c.l.b16 %v497
    %v2834 = vunpack.c.h.b16 %v497
    %v2835 = vunpack.c.l.b16 %v498
    %v2836 = vunpack.c.h.b16 %v498
    %v2837 = vunpack.c.l.b16 %v499
    %v2838 = vunpack.c.h.b16 %v499
    %v2839 = vunpack.c.l.b16 %v500
    %v2840 = vunpack.c.h.b16 %v500
    %v2841 = vunpack.c.l.b16 %v501
    %v2842 = vunpack.c.h.b16 %v501
    %v2843 = vunpack.c.l.b16 %v502
    %v2844 = vunpack.c.h.b16 %v502
    %v2845 = vunpack.c.l.b16 %v503
    %v2846 = vunpack.c.h.b16 %v503
    %v2847 = vunpack.c.l.b16 %v504
    %v2848 = vunpack.c.h.b16 %v504
    %v2849 = vunpack.c.l.b16 %v505
    %v2850 = vunpack.c.h.b16 %v505
    %v2851 = vunpack.c.l.b16 %v506
    %v2852 = vunpack.c.h.b16 %v506
    %v2853 = vunpack.c.l.b16 %v507
    %v2854 = vunpack.c.h.b16 %v507
    %v2855 = vunpack.c.l.b16 %v508
    %v2856 = vunpack.c.h.b16 %v508
    %v2857 = vunpack.c.l.b16 %v509
    %v2858 = vunpack.c.h.b16 %v509
    %v2859 = vunpack.c.l.b16 %v510
    %v2860 = vunpack.c.h.b16 %v510
    %v2861 = vunpack.c.l.b16 %v511
    %v2862 = vunpack.c.h.b16 %v511
    %v2863 = vunpack.c.l.b16 %v512
    %v2864 = vunpack.c.h.b16 %v512
    %v2865 = vunpack.c.l.b16 %v513
    %v2866 = vunpack.c.h.b16 %v513
    %v2867 = vunpack.c.l.b16 %v514
    %v2868 = vunpack.c.h.b16 %v514
    %v2869 = vunpack.c.l.b16 %v515
    %v2870 = vunpack.c.h.b16 %v515
    %v2871 = vunpack.c.l.b16 %v516
    %v2872 = vunpack.c.h.b16 %v516
    %v2873 = vunpack.c.l.b16 %v517
    %v2874 = vunpack.c.h.b16 %v517
    %v2875 = vunpack.c.l.b16 %v518
    %v2876 = vunpack.c.h.b16 %v518
    %v2877 = vunpack.c.l.b16 %v519
    %v2878 = vunpack.c.h.b16 %v519
    %v2879 = vunpack.c.l.b16 %v520
    %v2880 = vunpack.c.h.b16 %v520
    %v2881 = vunpack.c.l.b16 %v521
    %v2882 = vunpack.c.h.b16 %v521
    %v2883 = vunpack.c.l.b16 %v522
    %v2884 = vunpack.c.h.b16 %v522
    %v2885 = vunpack.c.l.b16 %v523
    %v2886 = vunpack.c.h.b16 %v523
    %v2887 = vunpack.c.l.b16 %v524
    %v2888 = vunpack.c.h.b16 %v524
    %v2889 = vunpack.c.l.b16 %v525
    %v2890 = vunpack.c.h.b16 %v525
    %v2891 = vunpack.c.l.b16 %v526
    %v2892 = vunpack.c.h.b16 %v526
    %v2893 = vunpack.c.l.b16 %v527
    %v2894 = vunpack.c.h.b16 %v527
    %v2895 = vunpack.c.l.b16 %v528
    %v2896 = vunpack.c.h.b16 %v528
    %v2897 = vunpack.c.l.b16 %v529
    %v2898 = vunpack.c.h.b16 %v529
    %v2899 = vunpack.c.l.b16 %v530
    %v2900 = vunpack.c.h.b16 %v530
    %v2901 = vunpack.c.l.b16 %v531
    %v2902 = vunpack.c.h.b16 %v531
    %v2903 = vunpack.c.l.b16 %v532
    %v2904 = vunpack.c.h.b16 %v532
    %v2905 = vunpack.c.l.b16 %v533
    %v2906 = vunpack.c.h.b16 %v533
    %v2907 = vunpack.c.l.b16 %v534
    %v2908 = vunpack.c.h.b16 %v534
    %v2909 = vunpack.c.l.b16 %v535
    %v2910 = vunpack.c.h.b16 %v535
    %v2911 = vunpack.c.l.b16 %v536
    %v2912 = vunpack.c.h.b16 %v536
    %v2913 = vunpack.c.l.b16 %v537
    %v2914 = vunpack.c.h.b16 %v537
    %v2915 = vunpack.c.l.b16 %v538
    %v2916 = vunpack.c.h.b16 %v538
    %v2917 = vunpack.c.l.b16 %v539
    %v2918 = vunpack.c.h.b16 %v539
    %v2919 = vunpack.c.l.b16 %v540
    %v2920 = vunpack.c.h.b16 %v540
    %v2921 = vunpack.c.l.b16 %v541
    %v2922 = vunpack.c.h.b16 %v541
    %v2923 = vunpack.c.l.b16 %v542
    %v2924 = vunpack.c.h.b16 %v542
    %v2925 = vunpack.c.l.b16 %v543
    %v2926 = vunpack.c.h.b16 %v543
    %v2927 = vunpack.c.l.b16 %v544
    %v2928 = vunpack.c.h.b16 %v544
    %v2929 = vunpack.c.l.b16 %v545
    %v2930 = vunpack.c.h.b16 %v545
    %v2931 = vunpack.c.l.b16 %v546
    %v2932 = vunpack.c.h.b16 %v546
    %v2933 = vunpack.c.l.b16 %v547
    %v2934 = vunpack.c.h.b16 %v547
    %v2935 = vunpack.c.l.b16 %v548
    %v2936 = vunpack.c.h.b16 %v548
    %v2937 = vunpack.c.l.b16 %v549
    %v2938 = vunpack.c.h.b16 %v549
    %v2939 = vunpack.c.l.b16 %v550
    %v2940 = vunpack.c.h.b16 %v550
    %v2941 = vunpack.c.l.b16 %v551
    %v2942 = vunpack.c.h.b16 %v551
    %v2943 = vunpack.c.l.b16 %v552
    %v2944 = vunpack.c.h.b16 %v552
    %v2945 = vunpack.c.l.b16 %v553
    %v2946 = vunpack.c.h.b16 %v553
    %v2947 = vunpack.c.l.b16 %v554
    %v2948 = vunpack.c.h.b16 %v554
    %v2949 = vunpack.c.l.b16 %v555
    %v2950 = vunpack.c.h.b16 %v555
    %v2951 = vunpack.c.l.b16 %v556
    %v2952 = vunpack.c.h.b16 %v556
    %v2953 = vunpack.c.l.b16 %v557
    %v2954 = vunpack.c.h.b16 %v557
    %v2955 = vunpack.c.l.b16 %v558
    %v2956 = vunpack.c.h.b16 %v558
    %v2957 = vunpack.c.l.b16 %v559
    %v2958 = vunpack.c.h.b16 %v559
    %v2959 = vunpack.c.l.b16 %v560
    %v2960 = vunpack.c.h.b16 %v560
    %v2961 = vunpack.c.l.b16 %v561
    %v2962 = vunpack.c.h.b16 %v561
    %v2963 = vunpack.c.l.b16 %v562
    %v2964 = vunpack.c.h.b16 %v562
    %v2965 = vunpack.c.l.b16 %v563
    %v2966 = vunpack.c.h.b16 %v563
    %v2967 = vunpack.c.l.b16 %v564
    %v2968 = vunpack.c.h.b16 %v564
    %v2969 = vunpack.c.l.b16 %v565
    %v2970 = vunpack.c.h.b16 %v565
    %v2971 = vunpack.c.l.b16 %v566
    %v2972 = vunpack.c.h.b16 %v566
    %v2973 = vunpack.c.l.b16 %v567
    %v2974 = vunpack.c.h.b16 %v567
    %v2975 = vunpack.c.l.b16 %v568
    %v2976 = vunpack.c.h.b16 %v568
    %v2977 = vunpack.c.l.b16 %v569
    %v2978 = vunpack.c.h.b16 %v569
    %v2979 = vunpack.c.l.b16 %v570
    %v2980 = vunpack.c.h.b16 %v570
    %v2981 = vunpack.c.l.b16 %v571
    %v2982 = vunpack.c.h.b16 %v571
    %v2983 = vunpack.c.l.b16 %v572
    %v2984 = vunpack.c.h.b16 %v572
    %v2985 = vunpack.c.l.b16 %v573
    %v2986 = vunpack.c.h.b16 %v573
    %v2987 = vunpack.c.l.b16 %v574
    %v2988 = vunpack.c.h.b16 %v574
    %v2989 = vunpack.c.l.b16 %v575
    %v2990 = vunpack.c.h.b16 %v575
    %v2991 = vunpack.c.l.b16 %v576
    %v2992 = vunpack.c.h.b16 %v576
    %v2993 = vunpack.c.l.b16 %v577
    %v2994 = vunpack.c.h.b16 %v577
    %v2995 = vunpack.c.l.b16 %v578
    %v2996 = vunpack.c.h.b16 %v578
    %v2997 = vunpack.c.l.b16 %v579
    %v2998 = vunpack.c.h.b16 %v579
    %v2999 = vunpack.c.l.b16 %v580
    %v3000 = vunpack.c.h.b16 %v580
    %v3001 = vunpack.c.l.b16 %v581
    %v3002 = vunpack.c.h.b16 %v581
    %v3003 = vunpack.c.l.b16 %v582
    %v3004 = vunpack.c.h.b16 %v582
    %v3005 = vunpack.c.l.b16 %v583
    %v3006 = vunpack.c.h.b16 %v583
    %v3007 = vunpack.c.l.b16 %v584
    %v3008 = vunpack.c.h.b16 %v584
    %v3009 = vunpack.c.l.b16 %v585
    %v3010 = vunpack.c.h.b16 %v585
    %v3011 = vunpack.c.l.b16 %v586
    %v3012 = vunpack.c.h.b16 %v586
    %v3013 = vunpack.c.l.b16 %v587
    %v3014 = vunpack.c.h.b16 %v587
    %v3015 = vunpack.c.l.b16 %v588
    %v3016 = vunpack.c.h.b16 %v588
    %v3017 = vunpack.c.l.b16 %v589
    %v3018 = vunpack.c.h.b16 %v589
    %v3019 = vunpack.c.l.b16 %v590
    %v3020 = vunpack.c.h.b16 %v590
    %v3021 = vunpack.c.l.b16 %v591
    %v3022 = vunpack.c.h.b16 %v591
    %v3023 = vunpack.c.l.b16 %v592
    %v3024 = vunpack.c.h.b16 %v592
    %v3025 = vunpack.c.l.b16 %v593
    %v3026 = vunpack.c.h.b16 %v593
    %v3027 = vunpack.c.l.b16 %v594
    %v3028 = vunpack.c.h.b16 %v594
    %v3029 = vunpack.c.l.b16 %v595
    %v3030 = vunpack.c.h.b16 %v595
    %v3031 = vunpack.c.l.b16 %v596
    %v3032 = vunpack.c.h.b16 %v596
    %v3033 = vunpack.c.l.b16 %v597
    %v3034 = vunpack.c.h.b16 %v597
    %v3035 = vunpack.c.l.b16 %v598
    %v3036 = vunpack.c.h.b16 %v598
    %v3037 = vunpack.c.l.b16 %v599
    %v3038 = vunpack.c.h.b16 %v599
    %v3039 = vunpack.c.l.b16 %v600
    %v3040 = vunpack.c.h.b16 %v600
    %v3041 = vunpack.c.l.b16 %v601
    %v3042 = vunpack.c.h.b16 %v601
    %v3043 = vunpack.c.l.b16 %v602
    %v3044 = vunpack.c.h.b16 %v602
    %v3045 = vunpack.c.l.b16 %v603
    %v3046 = vunpack.c.h.b16 %v603
    %v3047 = vunpack.c.l.b16 %v604
    %v3048 = vunpack.c.h.b16 %v604
    %v3049 = vunpack.c.l.b16 %v605
    %v3050 = vunpack.c.h.b16 %v605
    %v3051 = vunpack.c.l.b16 %v606
    %v3052 = vunpack.c.h.b16 %v606
    %v3053 = vunpack.c.l.b16 %v607
    %v3054 = vunpack.c.h.b16 %v607
    %v3055 = vunpack.c.l.b16 %v608
    %v3056 = vunpack.c.h.b16 %v608
    %v3057 = vunpack.c.l.b16 %v609
    %v3058 = vunpack.c.h.b16 %v609
    %v3059 = vunpack.c.l.b16 %v610
    %v3060 = vunpack.c.h.b16 %v610
    %v3061 = vunpack.c.l.b16 %v611
    %v3062 = vunpack.c.h.b16 %v611
    %v3063 = vunpack.c.l.b16 %v612
    %v3064 = vunpack.c.h.b16 %v612
    %v3065 = vunpack.c.l.b16 %v613
    %v3066 = vunpack.c.h.b16 %v613
    %v3067 = vunpack.c.l.b16 %v614
    %v3068 = vunpack.c.h.b16 %v614
    %v3069 = vunpack.c.l.b16 %v615
    %v3070 = vunpack.c.h.b16 %v615
    %v3071 = vunpack.c.l.b16 %v616
    %v3072 = vunpack.c.h.b16 %v616
    %v3073 = vunpack.c.l.b16 %v617
    %v3074 = vunpack.c.h.b16 %v617
    %v3075 = vunpack.c.l.b16 %v618
    %v3076 = vunpack.c.h.b16 %v618
    %v3077 = vunpack.c.l.b16 %v619
    %v3078 = vunpack.c.h.b16 %v619
    %v3079 = vunpack.c.l.b16 %v620
    %v3080 = vunpack.c.h.b16 %v620
    %v3081 = vunpack.c.l.b16 %v621
    %v3082 = vunpack.c.h.b16 %v621
    %v3083 = vunpack.c.l.b16 %v622
    %v3084 = vunpack.c.h.b16 %v622
    %v3085 = vunpack.c.l.b16 %v623
    %v3086 = vunpack.c.h.b16 %v623
    %v3087 = vunpack.c.l.b16 %v624
    %v3088 = vunpack.c.h.b16 %v624
    %v3089 = vunpack.c.l.b16 %v625
    %v3090 = vunpack.c.h.b16 %v625
    %v3091 = vunpack.c.l.b16 %v626
    %v3092 = vunpack.c.h.b16 %v626
    %v3093 = vunpack.c.l.b16 %v627
    %v3094 = vunpack.c.h.b16 %v627
    %v3095 = vunpack.c.l.b16 %v628
    %v3096 = vunpack.c.h.b16 %v628
    %v3097 = vunpack.c.l.b16 %v629
    %v3098 = vunpack.c.h.b16 %v629
    %v3099 = vunpack.c.l.b16 %v630
    %v3100 = vunpack.c.h.b16 %v630
    %v3101 = vunpack.c.l.b16 %v631
    %v3102 = vunpack.c.h.b16 %v631
    %v3103 = vunpack.c.l.b16 %v632
    %v3104 = vunpack.c.h.b16 %v632
    %v3105 = vunpack.c.l.b16 %v633
    %v3106 = vunpack.c.h.b16 %v633
    %v3107 = vunpack.c.l.b16 %v634
    %v3108 = vunpack.c.h.b16 %v634
    %v3109 = vunpack.c.l.b16 %v635
    %v3110 = vunpack.c.h.b16 %v635
    %v3111 = vunpack.c.l.b16 %v636
    %v3112 = vunpack.c.h.b16 %v636
    %v3113 = vunpack.c.l.b16 %v637
    %v3114 = vunpack.c.h.b16 %v637
    %v3115 = vunpack.c.l.b16 %v638
    %v3116 = vunpack.c.h.b16 %v638
    %v3117 = vunpack.c.l.b16 %v639
    %v3118 = vunpack.c.h.b16 %v639
    %v3119 = vunpack.c.l.b16 %v640
    %v3120 = vunpack.c.h.b16 %v640
    %v3121 = vunpack.c.l.b16 %v641
    %v3122 = vunpack.c.h.b16 %v641
    %v3123 = vunpack.c.l.b16 %v642
    %v3124 = vunpack.c.h.b16 %v642
    %v3125 = vunpack.c.l.b16 %v643
    %v3126 = vunpack.c.h.b16 %v643
    %v3127 = vunpack.c.l.b16 %v644
    %v3128 = vunpack.c.h.b16 %v644
    %v3129 = vunpack.c.l.b16 %v645
    %v3130 = vunpack.c.h.b16 %v645
    %v3131 = vunpack.c.l.b16 %v646
    %v3132 = vunpack.c.h.b16 %v646
    %v3133 = vunpack.c.l.b16 %v647
    %v3134 = vunpack.c.h.b16 %v647
    %v3135 = vunpack.c.l.b16 %v648
    %v3136 = vunpack.c.h.b16 %v648
    %v3137 = vunpack.c.l.b16 %v649
    %v3138 = vunpack.c.h.b16 %v649
    %v3139 = vunpack.c.l.b16 %v650
    %v3140 = vunpack.c.h.b16 %v650
    %v3141 = vunpack.c.l.b16 %v651
    %v3142 = vunpack.c.h.b16 %v651
    %v3143 = vunpack.c.l.b16 %v652
    %v3144 = vunpack.c.h.b16 %v652
    %v3145 = vunpack.c.l.b16 %v653
    %v3146 = vunpack.c.h.b16 %v653
    %v3147 = vunpack.c.l.b16 %v654
    %v3148 = vunpack.c.h.b16 %v654
    %v3149 = vunpack.c.l.b16 %v655
    %v3150 = vunpack.c.h.b16 %v655
    %v3151 = vunpack.c.l.b16 %v656
    %v3152 = vunpack.c.h.b16 %v656
    %v3153 = vunpack.c.l.b16 %v657
    %v3154 = vunpack.c.h.b16 %v657
    %v3155 = vunpack.c.l.b16 %v658
    %v3156 = vunpack.c.h.b16 %v658
    %v3157 = vunpack.c.l.b16 %v659
    %v3158 = vunpack.c.h.b16 %v659
    %v3159 = vunpack.c.l.b16 %v660
    %v3160 = vunpack.c.h.b16 %v660
    %v3161 = vunpack.c.l.b16 %v661
    %v3162 = vunpack.c.h.b16 %v661
    %v3163 = vunpack.c.l.b16 %v662
    %v3164 = vunpack.c.h.b16 %v662
    %v3165 = vunpack.c.l.b16 %v663
    %v3166 = vunpack.c.h.b16 %v663
    %v3167 = vunpack.c.l.b16 %v664
    %v3168 = vunpack.c.h.b16 %v664
    %v3169 = vunpack.c.l.b16 %v665
    %v3170 = vunpack.c.h.b16 %v665
    %v3171 = vunpack.c.l.b16 %v666
    %v3172 = vunpack.c.h.b16 %v666
    %v3173 = vunpack.c.l.b16 %v667
    %v3174 = vunpack.c.h.b16 %v667
    %v3175 = vunpack.c.l.b16 %v668
    %v3176 = vunpack.c.h.b16 %v668
    %v3177 = vunpack.c.l.b16 %v669
    %v3178 = vunpack.c.h.b16 %v669
    %v3179 = vunpack.c.l.b16 %v670
    %v3180 = vunpack.c.h.b16 %v670
    %v3181 = vunpack.c.l.b16 %v671
    %v3182 = vunpack.c.h.b16 %v671
    %v3183 = vunpack.c.l.b16 %v672
    %v3184 = vunpack.c.h.b16 %v672
    %v3185 = vunpack.c.l.b16 %v673
    %v3186 = vunpack.c.h.b16 %v673
    %v3187 = vunpack.c.l.b16 %v674
    %v3188 = vunpack.c.h.b16 %v674
    %v3189 = vunpack.c.l.b16 %v675
    %v3190 = vunpack.c.h.b16 %v675
    %v3191 = vunpack.c.l.b16 %v676
    %v3192 = vunpack.c.h.b16 %v676
    %v3193 = vunpack.c.l.b16 %v677
    %v3194 = vunpack.c.h.b16 %v677
    %v3195 = vunpack.c.l.b16 %v678
    %v3196 = vunpack.c.h.b16 %v678
    %v3197 = vunpack.c.l.b16 %v679
    %v3198 = vunpack.c.h.b16 %v679
    %v3199 = vunpack.c.l.b16 %v680
    %v3200 = vunpack.c.h.b16 %v680
    %v3201 = vunpack.c.l.b16 %v681
    %v3202 = vunpack.c.h.b16 %v681
    %v3203 = vunpack.c.l.b16 %v682
    %v3204 = vunpack.c.h.b16 %v682
    %v3205 = vunpack.c.l.b16 %v683
    %v3206 = vunpack.c.h.b16 %v683
    %v3207 = vunpack.c.l.b16 %v684
    %v3208 = vunpack.c.h.b16 %v684
    %v3209 = vunpack.c.l.b16 %v685
    %v3210 = vunpack.c.h.b16 %v685
    %v3211 = vunpack.c.l.b16 %v686
    %v3212 = vunpack.c.h.b16 %v686
    %v3213 = vunpack.c.l.b16 %v687
    %v3214 = vunpack.c.h.b16 %v687
    %v3215 = vunpack.c.l.b16 %v688
    %v3216 = vunpack.c.h.b16 %v688
    %v3217 = vunpack.c.l.b16 %v689
    %v3218 = vunpack.c.h.b16 %v689
    %v3219 = vunpack.c.l.b16 %v690
    %v3220 = vunpack.c.h.b16 %v690
    %v3221 = vunpack.c.l.b16 %v691
    %v3222 = vunpack.c.h.b16 %v691
    %v3223 = vunpack.c.l.b16 %v692
    %v3224 = vunpack.c.h.b16 %v692
    %v3225 = vunpack.c.l.b16 %v693
    %v3226 = vunpack.c.h.b16 %v693
    %v3227 = vunpack.c.l.b16 %v694
    %v3228 = vunpack.c.h.b16 %v694
    %v3229 = vunpack.c.l.b16 %v695
    %v3230 = vunpack.c.h.b16 %v695
    %v3231 = vunpack.c.l.b16 %v696
    %v3232 = vunpack.c.h.b16 %v696
    %v3233 = vunpack.c.l.b16 %v697
    %v3234 = vunpack.c.h.b16 %v697
    %v3235 = vunpack.c.l.b16 %v698
    %v3236 = vunpack.c.h.b16 %v698
    %v3237 = vunpack.c.l.b16 %v699
    %v3238 = vunpack.c.h.b16 %v699
    %v3239 = vunpack.c.l.b16 %v700
    %v3240 = vunpack.c.h.b16 %v700
    %v3241 = vunpack.c.l.b16 %v701
    %v3242 = vunpack.c.h.b16 %v701
    %v3243 = vunpack.c.l.b16 %v702
    %v3244 = vunpack.c.h.b16 %v702
    %v3245 = vunpack.c.l.b16 %v703
    %v3246 = vunpack.c.h.b16 %v703
    %v3247 = vunpack.c.l.b16 %v704
    %v3248 = vunpack.c.h.b16 %v704
    %v3249 = vunpack.c.l.b16 %v705
    %v3250 = vunpack.c.h.b16 %v705
    %v3251 = vunpack.c.l.b16 %v706
    %v3252 = vunpack.c.h.b16 %v706
    %v3253 = vunpack.c.l.b16 %v707
    %v3254 = vunpack.c.h.b16 %v707
    %v3255 = vunpack.c.l.b16 %v708
    %v3256 = vunpack.c.h.b16 %v708
    %v3257 = vunpack.c.l.b16 %v709
    %v3258 = vunpack.c.h.b16 %v709
    %v3259 = vunpack.c.l.b16 %v710
    %v3260 = vunpack.c.h.b16 %v710
    %v3261 = vunpack.c.l.b16 %v711
    %v3262 = vunpack.c.h.b16 %v711
    %v3263 = vunpack.c.l.b16 %v712
    %v3264 = vunpack.c.h.b16 %v712
    %v3265 = vunpack.c.l.b16 %v713
    %v3266 = vunpack.c.h.b16 %v713
    %v3267 = vunpack.c.l.b16 %v714
    %v3268 = vunpack.c.h.b16 %v714
    %v3269 = vunpack.c.l.b16 %v715
    %v3270 = vunpack.c.h.b16 %v715
    %v3271 = vunpack.c.l.b16 %v716
    %v3272 = vunpack.c.h.b16 %v716
    %v3273 = vunpack.c.l.b16 %v717
    %v3274 = vunpack.c.h.b16 %v717
    %v3275 = vunpack.c.l.b16 %v718
    %v3276 = vunpack.c.h.b16 %v718
    %v3277 = vunpack.c.l.b16 %v719
    %v3278 = vunpack.c.h.b16 %v719
    %v3279 = vunpack.c.l.b16 %v720
    %v3280 = vunpack.c.h.b16 %v720
    %v3281 = vunpack.c.l.b16 %v721
    %v3282 = vunpack.c.h.b16 %v721
    %v3283 = vunpack.c.l.b16 %v722
    %v3284 = vunpack.c.h.b16 %v722
    %v3285 = vunpack.c.l.b16 %v723
    %v3286 = vunpack.c.h.b16 %v723
    %v3287 = vunpack.c.l.b16 %v724
    %v3288 = vunpack.c.h.b16 %v724
    %v3289 = vunpack.c.l.b16 %v725
    %v3290 = vunpack.c.h.b16 %v725
    %v3291 = vunpack.c.l.b16 %v726
    %v3292 = vunpack.c.h.b16 %v726
    %v3293 = vunpack.c.l.b16 %v727
    %v3294 = vunpack.c.h.b16 %v727
    %v3295 = vunpack.c.l.b16 %v728
    %v3296 = vunpack.c.h.b16 %v728
    %v3297 = vunpack.c.l.b16 %v729
    %v3298 = vunpack.c.h.b16 %v729
    %v3299 = vunpack.c.l.b16 %v730
    %v3300 = vunpack.c.h.b16 %v730
    %v3301 = vunpack.c.l.b16 %v731
    %v3302 = vunpack.c.h.b16 %v731
    %v3303 = vunpack.c.l.b16 %v732
    %v3304 = vunpack.c.h.b16 %v732
    %v3305 = vunpack.c.l.b16 %v733
    %v3306 = vunpack.c.h.b16 %v733
    %v3307 = vunpack.c.l.b16 %v734
    %v3308 = vunpack.c.h.b16 %v734
    %v3309 = vunpack.c.l.b16 %v735
    %v3310 = vunpack.c.h.b16 %v735
    %v3311 = vunpack.c.l.b16 %v736
    %v3312 = vunpack.c.h.b16 %v736
    %v3313 = vunpack.c.l.b16 %v737
    %v3314 = vunpack.c.h.b16 %v737
    %v3315 = vunpack.c.l.b16 %v738
    %v3316 = vunpack.c.h.b16 %v738
    %v3317 = vunpack.c.l.b16 %v739
    %v3318 = vunpack.c.h.b16 %v739
    %v3319 = vunpack.c.l.b16 %v740
    %v3320 = vunpack.c.h.b16 %v740
    %v3321 = vunpack.c.l.b16 %v741
    %v3322 = vunpack.c.h.b16 %v741
    %v3323 = vunpack.c.l.b16 %v742
    %v3324 = vunpack.c.h.b16 %v742
    %v3325 = vunpack.c.l.b16 %v743
    %v3326 = vunpack.c.h.b16 %v743
    %v3327 = vunpack.c.l.b16 %v744
    %v3328 = vunpack.c.h.b16 %v744
    %v3329 = vunpack.c.l.b16 %v745
    %v3330 = vunpack.c.h.b16 %v745
    %v3331 = vunpack.c.l.b16 %v746
    %v3332 = vunpack.c.h.b16 %v746
    %v3333 = vunpack.c.l.b16 %v747
    %v3334 = vunpack.c.h.b16 %v747
    %v3335 = vunpack.c.l.b16 %v748
    %v3336 = vunpack.c.h.b16 %v748
    %v3337 = vunpack.c.l.b16 %v749
    %v3338 = vunpack.c.h.b16 %v749
    %v3339 = vunpack.c.l.b16 %v750
    %v3340 = vunpack.c.h.b16 %v750
    %v3341 = vunpack.c.l.b16 %v751
    %v3342 = vunpack.c.h.b16 %v751
    %v3343 = vunpack.c.l.b16 %v752
    %v3344 = vunpack.c.h.b16 %v752
    %v3345 = vunpack.c.l.b16 %v753
    %v3346 = vunpack.c.h.b16 %v753
    %v3347 = vunpack.c.l.b16 %v754
    %v3348 = vunpack.c.h.b16 %v754
    %v3349 = vunpack.c.l.b16 %v755
    %v3350 = vunpack.c.h.b16 %v755
    %v3351 = vunpack.c.l.b16 %v756
    %v3352 = vunpack.c.h.b16 %v756
    %v3353 = vunpack.c.l.b16 %v757
    %v3354 = vunpack.c.h.b16 %v757
    %v3355 = vunpack.c.l.b16 %v758
    %v3356 = vunpack.c.h.b16 %v758
    %v3357 = vunpack.c.l.b16 %v759
    %v3358 = vunpack.c.h.b16 %v759
    %v3359 = vunpack.c.l.b16 %v760
    %v3360 = vunpack.c.h.b16 %v760
    %v3361 = vunpack.c.l.b16 %v761
    %v3362 = vunpack.c.h.b16 %v761
    %v3363 = vunpack.c.l.b16 %v762
    %v3364 = vunpack.c.h.b16 %v762
    %v3365 = vunpack.c.l.b16 %v763
    %v3366 = vunpack.c.h.b16 %v763
    %v3367 = vunpack.c.l.b16 %v764
    %v3368 = vunpack.c.h.b16 %v764
    %v3369 = vunpack.c.l.b16 %v765
    %v3370 = vunpack.c.h.b16 %v765
    %v3371 = vunpack.c.l.b16 %v766
    %v3372 = vunpack.c.h.b16 %v766
    %v3373 = vunpack.c.l.b16 %v767
    %v3374 = vunpack.c.h.b16 %v767
    %v3375 = vunpack.c.l.b16 %v768
    %v3376 = vunpack.c.h.b16 %v768
    %v3377 = vunpack.c.l.b16 %v769
    %v3378 = vunpack.c.h.b16 %v769
    %v3379 = vunpack.c.l.b16 %v770
    %v3380 = vunpack.c.h.b16 %v770
    %v3381 = vunpack.c.l.b16 %v771
    %v3382 = vunpack.c.h.b16 %v771
    %v3383 = vunpack.c.l.b16 %v772
    %v3384 = vunpack.c.h.b16 %v772
    %v3385 = vunpack.c.l.b16 %v773
    %v3386 = vunpack.c.h.b16 %v773
    %v3387 = vunpack.c.l.b16 %v774
    %v3388 = vunpack.c.h.b16 %v774
    %v3389 = vunpack.c.l.b16 %v775
    %v3390 = vunpack.c.h.b16 %v775
    %v3391 = vunpack.c.l.b16 %v776
    %v3392 = vunpack.c.h.b16 %v776
    %v3393 = vunpack.c.l.b16 %v777
    %v3394 = vunpack.c.h.b16 %v777
    %v3395 = vunpack.c.l.b16 %v778
    %v3396 = vunpack.c.h.b16 %v778
    %v3397 = vunpack.c.l.b16 %v779
    %v3398 = vunpack.c.h.b16 %v779
    %v3399 = vunpack.c.l.b16 %v780
    %v3400 = vunpack.c.h.b16 %v780
    %v3401 = vunpack.c.l.b16 %v781
    %v3402 = vunpack.c.h.b16 %v781
    %v3403 = vunpack.c.l.b16 %v782
    %v3404 = vunpack.c.h.b16 %v782
    %v3405 = vunpack.c.l.b16 %v783
    %v3406 = vunpack.c.h.b16 %v783
    %v3407 = vunpack.c.l.b16 %v784
    %v3408 = vunpack.c.h.b16 %v784
    %v3409 = vunpack.c.l.b16 %v785
    %v3410 = vunpack.c.h.b16 %v785
    %v3411 = vunpack.c.l.b16 %v786
    %v3412 = vunpack.c.h.b16 %v786
    %v3413 = vunpack.c.l.b16 %v787
    %v3414 = vunpack.c.h.b16 %v787
    %v3415 = vunpack.c.l.b16 %v788
    %v3416 = vunpack.c.h.b16 %v788
    %v3417 = vunpack.c.l.b16 %v789
    %v3418 = vunpack.c.h.b16 %v789
    %v3419 = vunpack.c.l.b16 %v790
    %v3420 = vunpack.c.h.b16 %v790
    %v3421 = vunpack.c.l.b16 %v791
    %v3422 = vunpack.c.h.b16 %v791
    %v3423 = vunpack.c.l.b16 %v792
    %v3424 = vunpack.c.h.b16 %v792
    %v3425 = vunpack.c.l.b16 %v793
    %v3426 = vunpack.c.h.b16 %v793
    %v3427 = vunpack.c.l.b16 %v794
    %v3428 = vunpack.c.h.b16 %v794
    %v3429 = vunpack.c.l.b16 %v795
    %v3430 = vunpack.c.h.b16 %v795
    %v3431 = vunpack.c.l.b16 %v796
    %v3432 = vunpack.c.h.b16 %v796
    %v3433 = vunpack.c.l.b16 %v797
    %v3434 = vunpack.c.h.b16 %v797
    %v3435 = vunpack.c.l.b16 %v798
    %v3436 = vunpack.c.h.b16 %v798
    %v3437 = vunpack.c.l.b16 %v799
    %v3438 = vunpack.c.h.b16 %v799
    %v3439 = vunpack.c.l.b16 %v800
    %v3440 = vunpack.c.h.b16 %v800
    %v3441 = vunpack.c.l.b16 %v801
    %v3442 = vunpack.c.h.b16 %v801
    %v3443 = vunpack.c.l.b16 %v802
    %v3444 = vunpack.c.h.b16 %v802
    %v3445 = vunpack.c.l.b16 %v803
    %v3446 = vunpack.c.h.b16 %v803
    %v3447 = vunpack.c.l.b16 %v804
    %v3448 = vunpack.c.h.b16 %v804
    %v3449 = vunpack.c.l.b16 %v805
    %v3450 = vunpack.c.h.b16 %v805
    %v3451 = vunpack.c.l.b16 %v806
    %v3452 = vunpack.c.h.b16 %v806
    %v3453 = vunpack.c.l.b16 %v807
    %v3454 = vunpack.c.h.b16 %v807
    %v3455 = vunpack.c.l.b16 %v808
    %v3456 = vunpack.c.h.b16 %v808
    %v3457 = vunpack.c.l.b16 %v809
    %v3458 = vunpack.c.h.b16 %v809
    %v3459 = vunpack.c.l.b16 %v810
    %v3460 = vunpack.c.h.b16 %v810
    %v3461 = vunpack.c.l.b16 %v811
    %v3462 = vunpack.c.h.b16 %v811
    %v3463 = vunpack.c.l.b16 %v812
    %v3464 = vunpack.c.h.b16 %v812
    %v3465 = vunpack.c.l.b16 %v813
    %v3466 = vunpack.c.h.b16 %v813
    %v3467 = vunpack.c.l.b16 %v814
    %v3468 = vunpack.c.h.b16 %v814
    %v3469 = vunpack.c.l.b16 %v815
    %v3470 = vunpack.c.h.b16 %v815
    %v3471 = vunpack.c.l.b16 %v816
    %v3472 = vunpack.c.h.b16 %v816
    %v3473 = vunpack.c.l.b16 %v817
    %v3474 = vunpack.c.h.b16 %v817
    %v3475 = vunpack.c.l.b16 %v818
    %v3476 = vunpack.c.h.b16 %v818
    %v3477 = vunpack.c.l.b16 %v819
    %v3478 = vunpack.c.h.b16 %v819
    %v3479 = vunpack.c.l.b16 %v820
    %v3480 = vunpack.c.h.b16 %v820
    %v3481 = vunpack.c.l.b16 %v821
    %v3482 = vunpack.c.h.b16 %v821
    %v3483 = vunpack.c.l.b16 %v822
    %v3484 = vunpack.c.h.b16 %v822
    %v3485 = vunpack.c.l.b16 %v823
    %v3486 = vunpack.c.h.b16 %v823
    %v3487 = vunpack.c.l.b16 %v824
    %v3488 = vunpack.c.h.b16 %v824
    %v3489 = vunpack.c.l.b16 %v825
    %v3490 = vunpack.c.h.b16 %v825
    %v3491 = vunpack.c.l.b16 %v826
    %v3492 = vunpack.c.h.b16 %v826
    %v3493 = vunpack.c.l.b16 %v827
    %v3494 = vunpack.c.h.b16 %v827
    %v3495 = vunpack.c.l.b16 %v828
    %v3496 = vunpack.c.h.b16 %v828
    %v3497 = vunpack.c.l.b16 %v829
    %v3498 = vunpack.c.h.b16 %v829
    %v3499 = vunpack.c.l.b16 %v830
    %v3500 = vunpack.c.h.b16 %v830
    %v3501 = vunpack.c.l.b16 %v831
    %v3502 = vunpack.c.h.b16 %v831
    %v3503 = vunpack.c.l.b16 %v832
    %v3504 = vunpack.c.h.b16 %v832
    %v3505 = vunpack.c.l.b16 %v833
    %v3506 = vunpack.c.h.b16 %v833
    %v3507 = vunpack.c.l.b16 %v834
    %v3508 = vunpack.c.h.b16 %v834
    %v3509 = vunpack.c.l.b16 %v835
    %v3510 = vunpack.c.h.b16 %v835
    %v3511 = vunpack.c.l.b16 %v836
    %v3512 = vunpack.c.h.b16 %v836
    %v3513 = vunpack.c.l.b16 %v837
    %v3514 = vunpack.c.h.b16 %v837
    %v3515 = vunpack.c.l.b16 %v838
    %v3516 = vunpack.c.h.b16 %v838
    %v3517 = vunpack.c.l.b16 %v839
    %v3518 = vunpack.c.h.b16 %v839
    %v3519 = vunpack.c.l.b16 %v840
    %v3520 = vunpack.c.h.b16 %v840
    %v3521 = vunpack.c.l.b16 %v841
    %v3522 = vunpack.c.h.b16 %v841
    %v3523 = vunpack.c.l.b16 %v842
    %v3524 = vunpack.c.h.b16 %v842
    %v3525 = vunpack.c.l.b16 %v843
    %v3526 = vunpack.c.h.b16 %v843
    %v3527 = vunpack.c.l.b16 %v844
    %v3528 = vunpack.c.h.b16 %v844
    %v3529 = vunpack.c.l.b16 %v845
    %v3530 = vunpack.c.h.b16 %v845
    %v3531 = vunpack.c.l.b16 %v846
    %v3532 = vunpack.c.h.b16 %v846
    %v3533 = vunpack.c.l.b16 %v847
    %v3534 = vunpack.c.h.b16 %v847
    %v3535 = vunpack.c.l.b16 %v848
    %v3536 = vunpack.c.h.b16 %v848
    %v3537 = vunpack.c.l.b16 %v849
    %v3538 = vunpack.c.h.b16 %v849
    %v3539 = vunpack.c.l.b16 %v850
    %v3540 = vunpack.c.h.b16 %v850
    %v3541 = vunpack.c.l.b16 %v851
    %v3542 = vunpack.c.h.b16 %v851
    %v3543 = vunpack.c.l.b16 %v852
    %v3544 = vunpack.c.h.b16 %v852
    %v3545 = vunpack.c.l.b16 %v853
    %v3546 = vunpack.c.h.b16 %v853
    %v3547 = vunpack.c.l.b16 %v854
    %v3548 = vunpack.c.h.b16 %v854
    %v3549 = vunpack.c.l.b16 %v855
    %v3550 = vunpack.c.h.b16 %v855
    %v3551 = vunpack.c.l.b16 %v856
    %v3552 = vunpack.c.h.b16 %v856
    %v3553 = vunpack.c.l.b16 %v857
    %v3554 = vunpack.c.h.b16 %v857
    %v3555 = vunpack.c.l.b16 %v858
    %v3556 = vunpack.c.h.b16 %v858
    %v3557 = vunpack.c.l.b16 %v859
    %v3558 = vunpack.c.h.b16 %v859
    %v3559 = vunpack.c.l.b16 %v860
    %v3560 = vunpack.c.h.b16 %v860
    %v3561 = vunpack.c.l.b16 %v861
    %v3562 = vunpack.c.h.b16 %v861
    %v3563 = vunpack.c.l.b16 %v862
    %v3564 = vunpack.c.h.b16 %v862
    %v3565 = vunpack.c.l.b16 %v863
    %v3566 = vunpack.c.h.b16 %v863
    %v3567 = vunpack.c.l.b16 %v864
    %v3568 = vunpack.c.h.b16 %v864
    %v3569 = vunpack.c.l.b16 %v865
    %v3570 = vunpack.c.h.b16 %v865
    %v3571 = vunpack.c.l.b16 %v866
    %v3572 = vunpack.c.h.b16 %v866
    %v3573 = vunpack.c.l.b16 %v867
    %v3574 = vunpack.c.h.b16 %v867
    %v3575 = vunpack.c.l.b16 %v868
    %v3576 = vunpack.c.h.b16 %v868
    %v3577 = vunpack.c.l.b16 %v869
    %v3578 = vunpack.c.h.b16 %v869
    %v3579 = vunpack.c.l.b16 %v870
    %v3580 = vunpack.c.h.b16 %v870
    %v3581 = vunpack.c.l.b16 %v871
    %v3582 = vunpack.c.h.b16 %v871
    %v3583 = vunpack.c.l.b16 %v872
    %v3584 = vunpack.c.h.b16 %v872
    %v3585 = vunpack.c.l.b16 %v873
    %v3586 = vunpack.c.h.b16 %v873
    %v3587 = vunpack.c.l.b16 %v874
    %v3588 = vunpack.c.h.b16 %v874
    %v3589 = vunpack.c.l.b16 %v875
    %v3590 = vunpack.c.h.b16 %v875
    %v3591 = vunpack.c.l.b16 %v876
    %v3592 = vunpack.c.h.b16 %v876
    %v3593 = vunpack.c.l.b16 %v877
    %v3594 = vunpack.c.h.b16 %v877
    %v3595 = vunpack.c.l.b16 %v878
    %v3596 = vunpack.c.h.b16 %v878
    %v3597 = vunpack.c.l.b16 %v879
    %v3598 = vunpack.c.h.b16 %v879
    %v3599 = vunpack.c.l.b16 %v880
    %v3600 = vunpack.c.h.b16 %v880
    %v3601 = vunpack.c.l.b16 %v881
    %v3602 = vunpack.c.h.b16 %v881
    %v3603 = vunpack.c.l.b16 %v882
    %v3604 = vunpack.c.h.b16 %v882
    %v3605 = vunpack.c.l.b16 %v883
    %v3606 = vunpack.c.h.b16 %v883
    %v3607 = vunpack.c.l.b16 %v884
    %v3608 = vunpack.c.h.b16 %v884
    %v3609 = vunpack.c.l.b16 %v885
    %v3610 = vunpack.c.h.b16 %v885
    %v3611 = vunpack.c.l.b16 %v886
    %v3612 = vunpack.c.h.b16 %v886
    %v3613 = vunpack.c.l.b16 %v887
    %v3614 = vunpack.c.h.b16 %v887
    %v3615 = vunpack.c.l.b16 %v888
    %v3616 = vunpack.c.h.b16 %v888
    %v3617 = vunpack.c.l.b16 %v889
    %v3618 = vunpack.c.h.b16 %v889
    %v3619 = vunpack.c.l.b16 %v890
    %v3620 = vunpack.c.h.b16 %v890
    %v3621 = vunpack.c.l.b16 %v891
    %v3622 = vunpack.c.h.b16 %v891
    %v3623 = vunpack.c.l.b16 %v892
    %v3624 = vunpack.c.h.b16 %v892
    %v3625 = vunpack.c.l.b16 %v893
    %v3626 = vunpack.c.h.b16 %v893
    %v3627 = vunpack.c.l.b16 %v894
    %v3628 = vunpack.c.h.b16 %v894
    %v3629 = vunpack.c.l.b16 %v895
    %v3630 = vunpack.c.h.b16 %v895
    %v3631 = vunpack.c.l.b16 %v896
    %v3632 = vunpack.c.h.b16 %v896
    %v3633 = vunpack.c.l.b16 %v897
    %v3634 = vunpack.c.h.b16 %v897
    %v3635 = vunpack.c.l.b16 %v898
    %v3636 = vunpack.c.h.b16 %v898
    %v3637 = vunpack.c.l.b16 %v899
    %v3638 = vunpack.c.h.b16 %v899
    %v3639 = vunpack.c.l.b16 %v900
    %v3640 = vunpack.c.h.b16 %v900
    %v3641 = vunpack.c.l.b16 %v901
    %v3642 = vunpack.c.h.b16 %v901
    %v3643 = vunpack.c.l.b16 %v902
    %v3644 = vunpack.c.h.b16 %v902
    %v3645 = vunpack.c.l.b16 %v903
    %v3646 = vunpack.c.h.b16 %v903
    %v3647 = vunpack.c.l.b16 %v904
    %v3648 = vunpack.c.h.b16 %v904
    %v3649 = vunpack.c.l.b16 %v905
    %v3650 = vunpack.c.h.b16 %v905
    %v3651 = vunpack.c.l.b16 %v906
    %v3652 = vunpack.c.h.b16 %v906
    %v3653 = vunpack.c.l.b16 %v907
    %v3654 = vunpack.c.h.b16 %v907
    %v3655 = vunpack.c.l.b16 %v908
    %v3656 = vunpack.c.h.b16 %v908
    %v3657 = vunpack.c.l.b16 %v909
    %v3658 = vunpack.c.h.b16 %v909
    %v3659 = vunpack.c.l.b16 %v910
    %v3660 = vunpack.c.h.b16 %v910
    %v3661 = vunpack.c.l.b16 %v911
    %v3662 = vunpack.c.h.b16 %v911
    %v3663 = vunpack.c.l.b16 %v912
    %v3664 = vunpack.c.h.b16 %v912
    %v3665 = vunpack.c.l.b16 %v913
    %v3666 = vunpack.c.h.b16 %v913
    %v3667 = vunpack.c.l.b16 %v914
    %v3668 = vunpack.c.h.b16 %v914
    %v3669 = vunpack.c.l.b16 %v915
    %v3670 = vunpack.c.h.b16 %v915
    %v3671 = vunpack.c.l.b16 %v916
    %v3672 = vunpack.c.h.b16 %v916
    %v3673 = vunpack.c.l.b16 %v917
    %v3674 = vunpack.c.h.b16 %v917
    %v3675 = vunpack.c.l.b16 %v918
    %v3676 = vunpack.c.h.b16 %v918
    %v3677 = vunpack.c.l.b16 %v919
    %v3678 = vunpack.c.h.b16 %v919
    %v3679 = vunpack.c.l.b16 %v920
    %v3680 = vunpack.c.h.b16 %v920
    %v3681 = vunpack.c.l.b16 %v921
    %v3682 = vunpack.c.h.b16 %v921
    %v3683 = vunpack.c.l.b16 %v922
    %v3684 = vunpack.c.h.b16 %v922
    %v3685 = vunpack.c.l.b16 %v923
    %v3686 = vunpack.c.h.b16 %v923
    %v3687 = vunpack.c.l.b16 %v924
    %v3688 = vunpack.c.h.b16 %v924
    %v3689 = vunpack.c.l.b16 %v925
    %v3690 = vunpack.c.h.b16 %v925
    %v3691 = vpack.c.b16 %v1895, %v1891
    %v3692 = vpack.c.b16 %v1896, %v1892
    %v3693 = vpack.c.b16 %v1897, %v1893
    %v3694 = vpack.c.b16 %v1898, %v1894
    %v3695 = vpack.c.b16 %v1903, %v1899
    %v3696 = vpack.c.b16 %v1904, %v1900
    %v3697 = vpack.c.b16 %v1905, %v1901
    %v3698 = vpack.c.b16 %v1906, %v1902
    %v3699 = vpack.c.b16 %v1911, %v1907
    %v3700 = vpack.c.b16 %v1912, %v1908
    %v3701 = vpack.c.b16 %v1913, %v1909
    %v3702 = vpack.c.b16 %v1914, %v1910
    %v3703 = vpack.c.b16 %v1919, %v1915
    %v3704 = vpack.c.b16 %v1920, %v1916
    %v3705 = vpack.c.b16 %v1921, %v1917
    %v3706 = vpack.c.b16 %v1922, %v1918
    %v3707 = vpack.c.b16 %v1927, %v1923
    %v3708 = vpack.c.b16 %v1928, %v1924
    %v3709 = vpack.c.b16 %v1929, %v1925
    %v3710 = vpack.c.b16 %v1930, %v1926
    %v3711 = vpack.c.b16 %v1935, %v1931
    %v3712 = vpack.c.b16 %v1936, %v1932
    %v3713 = vpack.c.b16 %v1937, %v1933
    %v3714 = vpack.c.b16 %v1938, %v1934
    %v3715 = vpack.c.b16 %v1943, %v1939
    %v3716 = vpack.c.b16 %v1944, %v1940
    %v3717 = vpack.c.b16 %v1945, %v1941
    %v3718 = vpack.c.b16 %v1946, %v1942
    %v3719 = vpack.c.b16 %v1951, %v1947
    %v3720 = vpack.c.b16 %v1952, %v1948
    %v3721 = vpack.c.b16 %v1953, %v1949
    %v3722 = vpack.c.b16 %v1954, %v1950
    %v3723 = vpack.c.b16 %v1959, %v1955
    %v3724 = vpack.c.b16 %v1960, %v1956
    %v3725 = vpack.c.b16 %v1961, %v1957
    %v3726 = vpack.c.b16 %v1962, %v1958
    %v3727 = vpack.c.b16 %v1967, %v1963
    %v3728 = vpack.c.b16 %v1968, %v1964
    %v3729 = vpack.c.b16 %v1969, %v1965
    %v3730 = vpack.c.b16 %v1970, %v1966
    %v3731 = vpack.c.b16 %v1975, %v1971
    %v3732 = vpack.c.b16 %v1976, %v1972
    %v3733 = vpack.c.b16 %v1977, %v1973
    %v3734 = vpack.c.b16 %v1978, %v1974
    %v3735 = vpack.c.b16 %v1983, %v1979
    %v3736 = vpack.c.b16 %v1984, %v1980
    %v3737 = vpack.c.b16 %v1985, %v1981
    %v3738 = vpack.c.b16 %v1986, %v1982
    %v3739 = vpack.c.b16 %v1991, %v1987
    %v3740 = vpack.c.b16 %v1992, %v1988
    %v3741 = vpack.c.b16 %v1993, %v1989
    %v3742 = vpack.c.b16 %v1994, %v1990
    %v3743 = vpack.c.b16 %v1999, %v1995
    %v3744 = vpack.c.b16 %v2000, %v1996
    %v3745 = vpack.c.b16 %v2001, %v1997
    %v3746 = vpack.c.b16 %v2002, %v1998
    %v3747 = vpack.c.b16 %v2007, %v2003
    %v3748 = vpack.c.b16 %v2008, %v2004
    %v3749 = vpack.c.b16 %v2009, %v2005
    %v3750 = vpack.c.b16 %v2010, %v2006
    %v3751 = vpack.c.b16 %v2015, %v2011
    %v3752 = vpack.c.b16 %v2016, %v2012
    %v3753 = vpack.c.b16 %v2017, %v2013
    %v3754 = vpack.c.b16 %v2018, %v2014
    %v3755 = vpack.c.b16 %v2023, %v2019
    %v3756 = vpack.c.b16 %v2024, %v2020
    %v3757 = vpack.c.b16 %v2025, %v2021
    %v3758 = vpack.c.b16 %v2026, %v2022
    %v3759 = vpack.c.b16 %v2031, %v2027
    %v3760 = vpack.c.b16 %v2032, %v2028
    %v3761 = vpack.c.b16 %v2033, %v2029
    %v3762 = vpack.c.b16 %v2034, %v2030
    %v3763 = vpack.c.b16 %v2039, %v2035
    %v3764 = vpack.c.b16 %v2040, %v2036
    %v3765 = vpack.c.b16 %v2041, %v2037
    %v3766 = vpack.c.b16 %v2042, %v2038
    %v3767 = vpack.c.b16 %v2047, %v2043
    %v3768 = vpack.c.b16 %v2048, %v2044
    %v3769 = vpack.c.b16 %v2049, %v2045
    %v3770 = vpack.c.b16 %v2050, %v2046
    %v3771 = vpack.c.b16 %v2055, %v2051
    %v3772 = vpack.c.b16 %v2056, %v2052
    %v3773 = vpack.c.b16 %v2057, %v2053
    %v3774 = vpack.c.b16 %v2058, %v2054
    %v3775 = vpack.c.b16 %v2063, %v2059
    %v3776 = vpack.c.b16 %v2064, %v2060
    %v3777 = vpack.c.b16 %v2065, %v2061
    %v3778 = vpack.c.b16 %v2066, %v2062
    %v3779 = vpack.c.b16 %v2071, %v2067
    %v3780 = vpack.c.b16 %v2072, %v2068
    %v3781 = vpack.c.b16 %v2073, %v2069
    %v3782 = vpack.c.b16 %v2074, %v2070
    %v3783 = vpack.c.b16 %v2079, %v2075
    %v3784 = vpack.c.b16 %v2080, %v2076
    %v3785 = vpack.c.b16 %v2081, %v2077
    %v3786 = vpack.c.b16 %v2082, %v2078
    %v3787 = vpack.c.b16 %v2087, %v2083
    %v3788 = vpack.c.b16 %v2088, %v2084
    %v3789 = vpack.c.b16 %v2089, %v2085
    %v3790 = vpack.c.b16 %v2090, %v2086
    %v3791 = vpack.c.b16 %v2095, %v2091
    %v3792 = vpack.c.b16 %v2096, %v2092
    %v3793 = vpack.c.b16 %v2097, %v2093
    %v3794 = vpack.c.b16 %v2098, %v2094
    %v3795 = vpack.c.b16 %v2103, %v2099
    %v3796 = vpack.c.b16 %v2104, %v2100
    %v3797 = vpack.c.b16 %v2105, %v2101
    %v3798 = vpack.c.b16 %v2106, %v2102
    %v3799 = vpack.c.b16 %v2111, %v2107
    %v3800 = vpack.c.b16 %v2112, %v2108
    %v3801 = vpack.c.b16 %v2113, %v2109
    %v3802 = vpack.c.b16 %v2114, %v2110
    %v3803 = vpack.c.b16 %v2119, %v2115
    %v3804 = vpack.c.b16 %v2120, %v2116
    %v3805 = vpack.c.b16 %v2121, %v2117
    %v3806 = vpack.c.b16 %v2122, %v2118
    %v3807 = vpack.c.b16 %v2127, %v2123
    %v3808 = vpack.c.b16 %v2128, %v2124
    %v3809 = vpack.c.b16 %v2129, %v2125
    %v3810 = vpack.c.b16 %v2130, %v2126
    %v3811 = vpack.c.b16 %v2135, %v2131
    %v3812 = vpack.c.b16 %v2136, %v2132
    %v3813 = vpack.c.b16 %v2137, %v2133
    %v3814 = vpack.c.b16 %v2138, %v2134
    %v3815 = vpack.c.b16 %v2143, %v2139
    %v3816 = vpack.c.b16 %v2144, %v2140
    %v3817 = vpack.c.b16 %v2145, %v2141
    %v3818 = vpack.c.b16 %v2146, %v2142
    %v3819 = vpack.c.b16 %v2151, %v2147
    %v3820 = vpack.c.b16 %v2152, %v2148
    %v3821 = vpack.c.b16 %v2153, %v2149
    %v3822 = vpack.c.b16 %v2154, %v2150
    %v3823 = vpack.c.b16 %v2159, %v2155
    %v3824 = vpack.c.b16 %v2160, %v2156
    %v3825 = vpack.c.b16 %v2161, %v2157
    %v3826 = vpack.c.b16 %v2162, %v2158
    %v3827 = vpack.c.b16 %v2167, %v2163
    %v3828 = vpack.c.b16 %v2168, %v2164
    %v3829 = vpack.c.b16 %v2169, %v2165
    %v3830 = vpack.c.b16 %v2170, %v2166
    %v3831 = vpack.c.b16 %v2175, %v2171
    %v3832 = vpack.c.b16 %v2176, %v2172
    %v3833 = vpack.c.b16 %v2177, %v2173
    %v3834 = vpack.c.b16 %v2178, %v2174
    %v3835 = vpack.c.b16 %v2183, %v2179
    %v3836 = vpack.c.b16 %v2184, %v2180
    %v3837 = vpack.c.b16 %v2185, %v2181
    %v3838 = vpack.c.b16 %v2186, %v2182
    %v3839 = vpack.c.b16 %v2191, %v2187
    %v3840 = vpack.c.b16 %v2192, %v2188
    %v3841 = vpack.c.b16 %v2193, %v2189
    %v3842 = vpack.c.b16 %v2194, %v2190
    %v3843 = vpack.c.b16 %v2199, %v2195
    %v3844 = vpack.c.b16 %v2200, %v2196
    %v3845 = vpack.c.b16 %v2201, %v2197
    %v3846 = vpack.c.b16 %v2202, %v2198
    %v3847 = vpack.c.b16 %v2207, %v2203
    %v3848 = vpack.c.b16 %v2208, %v2204
    %v3849 = vpack.c.b16 %v2209, %v2205
    %v3850 = vpack.c.b16 %v2210, %v2206
    %v3851 = vpack.c.b16 %v2215, %v2211
    %v3852 = vpack.c.b16 %v2216, %v2212
    %v3853 = vpack.c.b16 %v2217, %v2213
    %v3854 = vpack.c.b16 %v2218, %v2214
    %v3855 = vpack.c.b16 %v2223, %v2219
    %v3856 = vpack.c.b16 %v2224, %v2220
    %v3857 = vpack.c.b16 %v2225, %v2221
    %v3858 = vpack.c.b16 %v2226, %v2222
    %v3859 = vpack.c.b16 %v2231, %v2227
    %v3860 = vpack.c.b16 %v2232, %v2228
    %v3861 = vpack.c.b16 %v2233, %v2229
    %v3862 = vpack.c.b16 %v2234, %v2230
    %v3863 = vpack.c.b16 %v2239, %v2235
    %v3864 = vpack.c.b16 %v2240, %v2236
    %v3865 = vpack.c.b16 %v2241, %v2237
    %v3866 = vpack.c.b16 %v2242, %v2238
    %v3867 = vpack.c.b16 %v2247, %v2243
    %v3868 = vpack.c.b16 %v2248, %v2244
    %v3869 = vpack.c.b16 %v2249, %v2245
    %v3870 = vpack.c.b16 %v2250, %v2246
    %v3871 = vpack.c.b16 %v2255, %v2251
    %v3872 = vpack.c.b16 %v2256, %v2252
    %v3873 = vpack.c.b16 %v2257, %v2253
    %v3874 = vpack.c.b16 %v2258, %v2254
    %v3875 = vpack.c.b16 %v2263, %v2259
    %v3876 = vpack.c.b16 %v2264, %v2260
    %v3877 = vpack.c.b16 %v2265, %v2261
    %v3878 = vpack.c.b16 %v2266, %v2262
    %v3879 = vpack.c.b16 %v2271, %v2267
    %v3880 = vpack.c.b16 %v2272, %v2268
    %v3881 = vpack.c.b16 %v2273, %v2269
    %v3882 = vpack.c.b16 %v2274, %v2270
    %v3883 = vpack.c.b16 %v2279, %v2275
    %v3884 = vpack.c.b16 %v2280, %v2276
    %v3885 = vpack.c.b16 %v2281, %v2277
    %v3886 = vpack.c.b16 %v2282, %v2278
    %v3887 = vpack.c.b16 %v2287, %v2283
    %v3888 = vpack.c.b16 %v2288, %v2284
    %v3889 = vpack.c.b16 %v2289, %v2285
    %v3890 = vpack.c.b16 %v2290, %v2286
    %v3891 = vpack.c.b16 %v2295, %v2291
    %v3892 = vpack.c.b16 %v2296, %v2292
    %v3893 = vpack.c.b16 %v2297, %v2293
    %v3894 = vpack.c.b16 %v2298, %v2294
    %v3895 = vpack.c.b16 %v2303, %v2299
    %v3896 = vpack.c.b16 %v2304, %v2300
    %v3897 = vpack.c.b16 %v2305, %v2301
    %v3898 = vpack.c.b16 %v2306, %v2302
    %v3899 = vpack.c.b16 %v2311, %v2307
    %v3900 = vpack.c.b16 %v2312, %v2308
    %v3901 = vpack.c.b16 %v2313, %v2309
    %v3902 = vpack.c.b16 %v2314, %v2310
    %v3903 = vpack.c.b16 %v2319, %v2315
    %v3904 = vpack.c.b16 %v2320, %v2316
    %v3905 = vpack.c.b16 %v2321, %v2317
    %v3906 = vpack.c.b16 %v2322, %v2318
    %v3907 = vpack.c.b16 %v2327, %v2323
    %v3908 = vpack.c.b16 %v2328, %v2324
    %v3909 = vpack.c.b16 %v2329, %v2325
    %v3910 = vpack.c.b16 %v2330, %v2326
    %v3911 = vpack.c.b16 %v2335, %v2331
    %v3912 = vpack.c.b16 %v2336, %v2332
    %v3913 = vpack.c.b16 %v2337, %v2333
    %v3914 = vpack.c.b16 %v2338, %v2334
    %v3915 = vpack.c.b16 %v2343, %v2339
    %v3916 = vpack.c.b16 %v2344, %v2340
    %v3917 = vpack.c.b16 %v2345, %v2341
    %v3918 = vpack.c.b16 %v2346, %v2342
    %v3919 = vpack.c.b16 %v2351, %v2347
    %v3920 = vpack.c.b16 %v2352, %v2348
    %v3921 = vpack.c.b16 %v2353, %v2349
    %v3922 = vpack.c.b16 %v2354, %v2350
    %v3923 = vpack.c.b16 %v2359, %v2355
    %v3924 = vpack.c.b16 %v2360, %v2356
    %v3925 = vpack.c.b16 %v2361, %v2357
    %v3926 = vpack.c.b16 %v2362, %v2358
    %v3927 = vpack.c.b16 %v2367, %v2363
    %v3928 = vpack.c.b16 %v2368, %v2364
    %v3929 = vpack.c.b16 %v2369, %v2365
    %v3930 = vpack.c.b16 %v2370, %v2366
    %v3931 = vpack.c.b16 %v2375, %v2371
    %v3932 = vpack.c.b16 %v2376, %v2372
    %v3933 = vpack.c.b16 %v2377, %v2373
    %v3934 = vpack.c.b16 %v2378, %v2374
    %v3935 = vpack.c.b16 %v2383, %v2379
    %v3936 = vpack.c.b16 %v2384, %v2380
    %v3937 = vpack.c.b16 %v2385, %v2381
    %v3938 = vpack.c.b16 %v2386, %v2382
    %v3939 = vpack.c.b16 %v2391, %v2387
    %v3940 = vpack.c.b16 %v2392, %v2388
    %v3941 = vpack.c.b16 %v2393, %v2389
    %v3942 = vpack.c.b16 %v2394, %v2390
    %v3943 = vpack.c.b16 %v2399, %v2395
    %v3944 = vpack.c.b16 %v2400, %v2396
    %v3945 = vpack.c.b16 %v2401, %v2397
    %v3946 = vpack.c.b16 %v2402, %v2398
    %v3947 = vpack.c.b16 %v2407, %v2403
    %v3948 = vpack.c.b16 %v2408, %v2404
    %v3949 = vpack.c.b16 %v2409, %v2405
    %v3950 = vpack.c.b16 %v2410, %v2406
    %v3951 = vpack.c.b16 %v2415, %v2411
    %v3952 = vpack.c.b16 %v2416, %v2412
    %v3953 = vpack.c.b16 %v2417, %v2413
    %v3954 = vpack.c.b16 %v2418, %v2414
    %v3955 = vpack.c.b16 %v2423, %v2419
    %v3956 = vpack.c.b16 %v2424, %v2420
    %v3957 = vpack.c.b16 %v2425, %v2421
    %v3958 = vpack.c.b16 %v2426, %v2422
    %v3959 = vpack.c.b16 %v2431, %v2427
    %v3960 = vpack.c.b16 %v2432, %v2428
    %v3961 = vpack.c.b16 %v2433, %v2429
    %v3962 = vpack.c.b16 %v2434, %v2430
    %v3963 = vpack.c.b16 %v2439, %v2435
    %v3964 = vpack.c.b16 %v2440, %v2436
    %v3965 = vpack.c.b16 %v2441, %v2437
    %v3966 = vpack.c.b16 %v2442, %v2438
    %v3967 = vpack.c.b16 %v2447, %v2443
    %v3968 = vpack.c.b16 %v2448, %v2444
    %v3969 = vpack.c.b16 %v2449, %v2445
    %v3970 = vpack.c.b16 %v2450, %v2446
    %v3971 = vpack.c.b16 %v2455, %v2451
    %v3972 = vpack.c.b16 %v2456, %v2452
    %v3973 = vpack.c.b16 %v2457, %v2453
    %v3974 = vpack.c.b16 %v2458, %v2454
    %v3975 = vpack.c.b16 %v2463, %v2459
    %v3976 = vpack.c.b16 %v2464, %v2460
    %v3977 = vpack.c.b16 %v2465, %v2461
    %v3978 = vpack.c.b16 %v2466, %v2462
    %v3979 = vpack.c.b16 %v2471, %v2467
    %v3980 = vpack.c.b16 %v2472, %v2468
    %v3981 = vpack.c.b16 %v2473, %v2469
    %v3982 = vpack.c.b16 %v2474, %v2470
    %v3983 = vpack.c.b16 %v2479, %v2475
    %v3984 = vpack.c.b16 %v2480, %v2476
    %v3985 = vpack.c.b16 %v2481, %v2477
    %v3986 = vpack.c.b16 %v2482, %v2478
    %v3987 = vpack.c.b16 %v2487, %v2483
    %v3988 = vpack.c.b16 %v2488, %v2484
    %v3989 = vpack.c.b16 %v2489, %v2485
    %v3990 = vpack.c.b16 %v2490, %v2486
    %v3991 = vpack.c.b16 %v2495, %v2491
    %v3992 = vpack.c.b16 %v2496, %v2492
    %v3993 = vpack.c.b16 %v2497, %v2493
    %v3994 = vpack.c.b16 %v2498, %v2494
    %v3995 = vpack.c.b16 %v2503, %v2499
    %v3996 = vpack.c.b16 %v2504, %v2500
    %v3997 = vpack.c.b16 %v2505, %v2501
    %v3998 = vpack.c.b16 %v2506, %v2502
    %v3999 = vpack.c.b16 %v2511, %v2507
    %v4000 = vpack.c.b16 %v2512, %v2508
    %v4001 = vpack.c.b16 %v2513, %v2509
    %v4002 = vpack.c.b16 %v2514, %v2510
    %v4003 = vpack.c.b16 %v2519, %v2515
    %v4004 = vpack.c.b16 %v2520, %v2516
    %v4005 = vpack.c.b16 %v2521, %v2517
    %v4006 = vpack.c.b16 %v2522, %v2518
    %v4007 = vpack.c.b16 %v2527, %v2523
    %v4008 = vpack.c.b16 %v2528, %v2524
    %v4009 = vpack.c.b16 %v2529, %v2525
    %v4010 = vpack.c.b16 %v2530, %v2526
    %v4011 = vpack.c.b16 %v2535, %v2531
    %v4012 = vpack.c.b16 %v2536, %v2532
    %v4013 = vpack.c.b16 %v2537, %v2533
    %v4014 = vpack.c.b16 %v2538, %v2534
    %v4015 = vpack.c.b16 %v2543, %v2539
    %v4016 = vpack.c.b16 %v2544, %v2540
    %v4017 = vpack.c.b16 %v2545, %v2541
    %v4018 = vpack.c.b16 %v2546, %v2542
    %v4019 = vpack.c.b16 %v2551, %v2547
    %v4020 = vpack.c.b16 %v2552, %v2548
    %v4021 = vpack.c.b16 %v2553, %v2549
    %v4022 = vpack.c.b16 %v2554, %v2550
    %v4023 = vpack.c.b16 %v2559, %v2555
    %v4024 = vpack.c.b16 %v2560, %v2556
    %v4025 = vpack.c.b16 %v2561, %v2557
    %v4026 = vpack.c.b16 %v2562, %v2558
    %v4027 = vpack.c.b16 %v2567, %v2563
    %v4028 = vpack.c.b16 %v2568, %v2564
    %v4029 = vpack.c.b16 %v2569, %v2565
    %v4030 = vpack.c.b16 %v2570, %v2566
    %v4031 = vpack.c.b16 %v2575, %v2571
    %v4032 = vpack.c.b16 %v2576, %v2572
    %v4033 = vpack.c.b16 %v2577, %v2573
    %v4034 = vpack.c.b16 %v2578, %v2574
    %v4035 = vpack.c.b16 %v2583, %v2579
    %v4036 = vpack.c.b16 %v2584, %v2580
    %v4037 = vpack.c.b16 %v2585, %v2581
    %v4038 = vpack.c.b16 %v2586, %v2582
    %v4039 = vpack.c.b16 %v2591, %v2587
    %v4040 = vpack.c.b16 %v2592, %v2588
    %v4041 = vpack.c.b16 %v2593, %v2589
    %v4042 = vpack.c.b16 %v2594, %v2590
    %v4043 = vpack.c.b16 %v2599, %v2595
    %v4044 = vpack.c.b16 %v2600, %v2596
    %v4045 = vpack.c.b16 %v2601, %v2597
    %v4046 = vpack.c.b16 %v2602, %v2598
    %v4047 = vpack.c.b16 %v2607, %v2603
    %v4048 = vpack.c.b16 %v2608, %v2604
    %v4049 = vpack.c.b16 %v2609, %v2605
    %v4050 = vpack.c.b16 %v2610, %v2606
    %v4051 = vpack.c.b16 %v2615, %v2611
    %v4052 = vpack.c.b16 %v2616, %v2612
    %v4053 = vpack.c.b16 %v2617, %v2613
    %v4054 = vpack.c.b16 %v2618, %v2614
    %v4055 = vpack.c.b16 %v2623, %v2619
    %v4056 = vpack.c.b16 %v2624, %v2620
    %v4057 = vpack.c.b16 %v2625, %v2621
    %v4058 = vpack.c.b16 %v2626, %v2622
    %v4059 = vpack.c.b16 %v2631, %v2627
    %v4060 = vpack.c.b16 %v2632, %v2628
    %v4061 = vpack.c.b16 %v2633, %v2629
    %v4062 = vpack.c.b16 %v2634, %v2630
    %v4063 = vpack.c.b16 %v2639, %v2635
    %v4064 = vpack.c.b16 %v2640, %v2636
    %v4065 = vpack.c.b16 %v2641, %v2637
    %v4066 = vpack.c.b16 %v2642, %v2638
    %v4067 = vpack.c.b16 %v2647, %v2643
    %v4068 = vpack.c.b16 %v2648, %v2644
    %v4069 = vpack.c.b16 %v2649, %v2645
    %v4070 = vpack.c.b16 %v2650, %v2646
    %v4071 = vpack.c.b16 %v2655, %v2651
    %v4072 = vpack.c.b16 %v2656, %v2652
    %v4073 = vpack.c.b16 %v2657, %v2653
    %v4074 = vpack.c.b16 %v2658, %v2654
    %v4075 = vpack.c.b16 %v2663, %v2659
    %v4076 = vpack.c.b16 %v2664, %v2660
    %v4077 = vpack.c.b16 %v2665, %v2661
    %v4078 = vpack.c.b16 %v2666, %v2662
    %v4079 = vpack.c.b16 %v2671, %v2667
    %v4080 = vpack.c.b16 %v2672, %v2668
    %v4081 = vpack.c.b16 %v2673, %v2669
    %v4082 = vpack.c.b16 %v2674, %v2670
    %v4083 = vpack.c.b16 %v2679, %v2675
    %v4084 = vpack.c.b16 %v2680, %v2676
    %v4085 = vpack.c.b16 %v2681, %v2677
    %v4086 = vpack.c.b16 %v2682, %v2678
    %v4087 = vpack.c.b16 %v2687, %v2683
    %v4088 = vpack.c.b16 %v2688, %v2684
    %v4089 = vpack.c.b16 %v2689, %v2685
    %v4090 = vpack.c.b16 %v2690, %v2686
    %v4091 = vpack.c.b16 %v2695, %v2691
    %v4092 = vpack.c.b16 %v2696, %v2692
    %v4093 = vpack.c.b16 %v2697, %v2693
    %v4094 = vpack.c.b16 %v2698, %v2694
    %v4095 = vpack.c.b16 %v2703, %v2699
    %v4096 = vpack.c.b16 %v2704, %v2700
    %v4097 = vpack.c.b16 %v2705, %v2701
    %v4098 = vpack.c.b16 %v2706, %v2702
    %v4099 = vpack.c.b16 %v2711, %v2707
    %v4100 = vpack.c.b16 %v2712, %v2708
    %v4101 = vpack.c.b16 %v2713, %v2709
    %v4102 = vpack.c.b16 %v2714, %v2710
    %v4103 = vpack.c.b16 %v2719, %v2715
    %v4104 = vpack.c.b16 %v2720, %v2716
    %v4105 = vpack.c.b16 %v2721, %v2717
    %v4106 = vpack.c.b16 %v2722, %v2718
    %v4107 = vpack.c.b16 %v2727, %v2723
    %v4108 = vpack.c.b16 %v2728, %v2724
    %v4109 = vpack.c.b16 %v2729, %v2725
    %v4110 = vpack.c.b16 %v2730, %v2726
    %v4111 = vpack.c.b16 %v2735, %v2731
    %v4112 = vpack.c.b16 %v2736, %v2732
    %v4113 = vpack.c.b16 %v2737, %v2733
    %v4114 = vpack.c.b16 %v2738, %v2734
    %v4115 = vpack.c.b16 %v2743, %v2739
    %v4116 = vpack.c.b16 %v2744, %v2740
    %v4117 = vpack.c.b16 %v2745, %v2741
    %v4118 = vpack.c.b16 %v2746, %v2742
    %v4119 = vpack.c.b16 %v2751, %v2747
    %v4120 = vpack.c.b16 %v2752, %v2748
    %v4121 = vpack.c.b16 %v2753, %v2749
    %v4122 = vpack.c.b16 %v2754, %v2750
    %v4123 = vpack.c.b16 %v2759, %v2755
    %v4124 = vpack.c.b16 %v2760, %v2756
    %v4125 = vpack.c.b16 %v2761, %v2757
    %v4126 = vpack.c.b16 %v2762, %v2758
    %v4127 = vpack.c.b16 %v2767, %v2763
    %v4128 = vpack.c.b16 %v2768, %v2764
    %v4129 = vpack.c.b16 %v2769, %v2765
    %v4130 = vpack.c.b16 %v2770, %v2766
    %v4131 = vpack.c.b16 %v2775, %v2771
    %v4132 = vpack.c.b16 %v2776, %v2772
    %v4133 = vpack.c.b16 %v2777, %v2773
    %v4134 = vpack.c.b16 %v2778, %v2774
    %v4135 = vpack.c.b16 %v2783, %v2779
    %v4136 = vpack.c.b16 %v2784, %v2780
    %v4137 = vpack.c.b16 %v2785, %v2781
    %v4138 = vpack.c.b16 %v2786, %v2782
    %v4139 = vpack.c.b16 %v2791, %v2787
    %v4140 = vpack.c.b16 %v2792, %v2788
    %v4141 = vpack.c.b16 %v2793, %v2789
    %v4142 = vpack.c.b16 %v2794, %v2790
    %v4143 = vpack.c.b16 %v2799, %v2795
    %v4144 = vpack.c.b16 %v2800, %v2796
    %v4145 = vpack.c.b16 %v2801, %v2797
    %v4146 = vpack.c.b16 %v2802, %v2798
    %v4147 = vpack.c.b16 %v2807, %v2803
    %v4148 = vpack.c.b16 %v2808, %v2804
    %v4149 = vpack.c.b16 %v2809, %v2805
    %v4150 = vpack.c.b16 %v2810, %v2806
    %v4151 = vpack.c.b16 %v2815, %v2811
    %v4152 = vpack.c.b16 %v2816, %v2812
    %v4153 = vpack.c.b16 %v2817, %v2813
    %v4154 = vpack.c.b16 %v2818, %v2814
    %v4155 = vpack.c.b16 %v2823, %v2819
    %v4156 = vpack.c.b16 %v2824, %v2820
    %v4157 = vpack.c.b16 %v2825, %v2821
    %v4158 = vpack.c.b16 %v2826, %v2822
    %v4159 = vpack.c.b16 %v2831, %v2827
    %v4160 = vpack.c.b16 %v2832, %v2828
    %v4161 = vpack.c.b16 %v2833, %v2829
    %v4162 = vpack.c.b16 %v2834, %v2830
    %v4163 = vpack.c.b16 %v2839, %v2835
    %v4164 = vpack.c.b16 %v2840, %v2836
    %v4165 = vpack.c.b16 %v2841, %v2837
    %v4166 = vpack.c.b16 %v2842, %v2838
    %v4167 = vpack.c.b16 %v2847, %v2843
    %v4168 = vpack.c.b16 %v2848, %v2844
    %v4169 = vpack.c.b16 %v2849, %v2845
    %v4170 = vpack.c.b16 %v2850, %v2846
    %v4171 = vpack.c.b16 %v2855, %v2851
    %v4172 = vpack.c.b16 %v2856, %v2852
    %v4173 = vpack.c.b16 %v2857, %v2853
    %v4174 = vpack.c.b16 %v2858, %v2854
    %v4175 = vpack.c.b16 %v2863, %v2859
    %v4176 = vpack.c.b16 %v2864, %v2860
    %v4177 = vpack.c.b16 %v2865, %v2861
    %v4178 = vpack.c.b16 %v2866, %v2862
    %v4179 = vpack.c.b16 %v2871, %v2867
    %v4180 = vpack.c.b16 %v2872, %v2868
    %v4181 = vpack.c.b16 %v2873, %v2869
    %v4182 = vpack.c.b16 %v2874, %v2870
    %v4183 = vpack.c.b16 %v2879, %v2875
    %v4184 = vpack.c.b16 %v2880, %v2876
    %v4185 = vpack.c.b16 %v2881, %v2877
    %v4186 = vpack.c.b16 %v2882, %v2878
    %v4187 = vpack.c.b16 %v2887, %v2883
    %v4188 = vpack.c.b16 %v2888, %v2884
    %v4189 = vpack.c.b16 %v2889, %v2885
    %v4190 = vpack.c.b16 %v2890, %v2886
    %v4191 = vpack.c.b16 %v2895, %v2891
    %v4192 = vpack.c.b16 %v2896, %v2892
    %v4193 = vpack.c.b16 %v2897, %v2893
    %v4194 = vpack.c.b16 %v2898, %v2894
    %v4195 = vpack.c.b16 %v2903, %v2899
    %v4196 = vpack.c.b16 %v2904, %v2900
    %v4197 = vpack.c.b16 %v2905, %v2901
    %v4198 = vpack.c.b16 %v2906, %v2902
    %v4199 = vpack.c.b16 %v2911, %v2907
    %v4200 = vpack.c.b16 %v2912, %v2908
    %v4201 = vpack.c.b16 %v2913, %v2909
    %v4202 = vpack.c.b16 %v2914, %v2910
    %v4203 = vpack.c.b16 %v2919, %v2915
    %v4204 = vpack.c.b16 %v2920, %v2916
    %v4205 = vpack.c.b16 %v2921, %v2917
    %v4206 = vpack.c.b16 %v2922, %v2918
    %v4207 = vpack.c.b16 %v2927, %v2923
    %v4208 = vpack.c.b16 %v2928, %v2924
    %v4209 = vpack.c.b16 %v2929, %v2925
    %v4210 = vpack.c.b16 %v2930, %v2926
    %v4211 = vpack.c.b16 %v2935, %v2931
    %v4212 = vpack.c.b16 %v2936, %v2932
    %v4213 = vpack.c.b16 %v2937, %v2933
    %v4214 = vpack.c.b16 %v2938, %v2934
    %v4215 = vpack.c.b16 %v2943, %v2939
    %v4216 = vpack.c.b16 %v2944, %v2940
    %v4217 = vpack.c.b16 %v2945, %v2941
    %v4218 = vpack.c.b16 %v2946, %v2942
    %v4219 = vpack.c.b16 %v2951, %v2947
    %v4220 = vpack.c.b16 %v2952, %v2948
    %v4221 = vpack.c.b16 %v2953, %v2949
    %v4222 = vpack.c.b16 %v2954, %v2950
    %v4223 = vpack.c.b16 %v2959, %v2955
    %v4224 = vpack.c.b16 %v2960, %v2956
    %v4225 = vpack.c.b16 %v2961, %v2957
    %v4226 = vpack.c.b16 %v2962, %v2958
    %v4227 = vpack.c.b16 %v2967, %v2963
    %v4228 = vpack.c.b16 %v2968, %v2964
    %v4229 = vpack.c.b16 %v2969, %v2965
    %v4230 = vpack.c.b16 %v2970, %v2966
    %v4231 = vpack.c.b16 %v2975, %v2971
    %v4232 = vpack.c.b16 %v2976, %v2972
    %v4233 = vpack.c.b16 %v2977, %v2973
    %v4234 = vpack.c.b16 %v2978, %v2974
    %v4235 = vpack.c.b16 %v2983, %v2979
    %v4236 = vpack.c.b16 %v2984, %v2980
    %v4237 = vpack.c.b16 %v2985, %v2981
    %v4238 = vpack.c.b16 %v2986, %v2982
    %v4239 = vpack.c.b16 %v2991, %v2987
    %v4240 = vpack.c.b16 %v2992, %v2988
    %v4241 = vpack.c.b16 %v2993, %v2989
    %v4242 = vpack.c.b16 %v2994, %v2990
    %v4243 = vpack.c.b16 %v2999, %v2995
    %v4244 = vpack.c.b16 %v3000, %v2996
    %v4245 = vpack.c.b16 %v3001, %v2997
    %v4246 = vpack.c.b16 %v3002, %v2998
    %v4247 = vpack.c.b16 %v3007, %v3003
    %v4248 = vpack.c.b16 %v3008, %v3004
    %v4249 = vpack.c.b16 %v3009, %v3005
    %v4250 = vpack.c.b16 %v3010, %v3006
    %v4251 = vpack.c.b16 %v3015, %v3011
    %v4252 = vpack.c.b16 %v3016, %v3012
    %v4253 = vpack.c.b16 %v3017, %v3013
    %v4254 = vpack.c.b16 %v3018, %v3014
    %v4255 = vpack.c.b16 %v3023, %v3019
    %v4256 = vpack.c.b16 %v3024, %v3020
    %v4257 = vpack.c.b16 %v3025, %v3021
    %v4258 = vpack.c.b16 %v3026, %v3022
    %v4259 = vpack.c.b16 %v3031, %v3027
    %v4260 = vpack.c.b16 %v3032, %v3028
    %v4261 = vpack.c.b16 %v3033, %v3029
    %v4262 = vpack.c.b16 %v3034, %v3030
    %v4263 = vpack.c.b16 %v3039, %v3035
    %v4264 = vpack.c.b16 %v3040, %v3036
    %v4265 = vpack.c.b16 %v3041, %v3037
    %v4266 = vpack.c.b16 %v3042, %v3038
    %v4267 = vpack.c.b16 %v3047, %v3043
    %v4268 = vpack.c.b16 %v3048, %v3044
    %v4269 = vpack.c.b16 %v3049, %v3045
    %v4270 = vpack.c.b16 %v3050, %v3046
    %v4271 = vpack.c.b16 %v3055, %v3051
    %v4272 = vpack.c.b16 %v3056, %v3052
    %v4273 = vpack.c.b16 %v3057, %v3053
    %v4274 = vpack.c.b16 %v3058, %v3054
    %v4275 = vpack.c.b16 %v3063, %v3059
    %v4276 = vpack.c.b16 %v3064, %v3060
    %v4277 = vpack.c.b16 %v3065, %v3061
    %v4278 = vpack.c.b16 %v3066, %v3062
    %v4279 = vpack.c.b16 %v3071, %v3067
    %v4280 = vpack.c.b16 %v3072, %v3068
    %v4281 = vpack.c.b16 %v3073, %v3069
    %v4282 = vpack.c.b16 %v3074, %v3070
    %v4283 = vpack.c.b16 %v3079, %v3075
    %v4284 = vpack.c.b16 %v3080, %v3076
    %v4285 = vpack.c.b16 %v3081, %v3077
    %v4286 = vpack.c.b16 %v3082, %v3078
    %v4287 = vpack.c.b16 %v3087, %v3083
    %v4288 = vpack.c.b16 %v3088, %v3084
    %v4289 = vpack.c.b16 %v3089, %v3085
    %v4290 = vpack.c.b16 %v3090, %v3086
    %v4291 = vpack.c.b16 %v3095, %v3091
    %v4292 = vpack.c.b16 %v3096, %v3092
    %v4293 = vpack.c.b16 %v3097, %v3093
    %v4294 = vpack.c.b16 %v3098, %v3094
    %v4295 = vpack.c.b16 %v3103, %v3099
    %v4296 = vpack.c.b16 %v3104, %v3100
    %v4297 = vpack.c.b16 %v3105, %v3101
    %v4298 = vpack.c.b16 %v3106, %v3102
    %v4299 = vpack.c.b16 %v3111, %v3107
    %v4300 = vpack.c.b16 %v3112, %v3108
    %v4301 = vpack.c.b16 %v3113, %v3109
    %v4302 = vpack.c.b16 %v3114, %v3110
    %v4303 = vpack.c.b16 %v3119, %v3115
    %v4304 = vpack.c.b16 %v3120, %v3116
    %v4305 = vpack.c.b16 %v3121, %v3117
    %v4306 = vpack.c.b16 %v3122, %v3118
    %v4307 = vpack.c.b16 %v3127, %v3123
    %v4308 = vpack.c.b16 %v3128, %v3124
    %v4309 = vpack.c.b16 %v3129, %v3125
    %v4310 = vpack.c.b16 %v3130, %v3126
    %v4311 = vpack.c.b16 %v3135, %v3131
    %v4312 = vpack.c.b16 %v3136, %v3132
    %v4313 = vpack.c.b16 %v3137, %v3133
    %v4314 = vpack.c.b16 %v3138, %v3134
    %v4315 = vpack.c.b16 %v3143, %v3139
    %v4316 = vpack.c.b16 %v3144, %v3140
    %v4317 = vpack.c.b16 %v3145, %v3141
    %v4318 = vpack.c.b16 %v3146, %v3142
    %v4319 = vpack.c.b16 %v3151, %v3147
    %v4320 = vpack.c.b16 %v3152, %v3148
    %v4321 = vpack.c.b16 %v3153, %v3149
    %v4322 = vpack.c.b16 %v3154, %v3150
    %v4323 = vpack.c.b16 %v3159, %v3155
    %v4324 = vpack.c.b16 %v3160, %v3156
    %v4325 = vpack.c.b16 %v3161, %v3157
    %v4326 = vpack.c.b16 %v3162, %v3158
    %v4327 = vpack.c.b16 %v3167, %v3163
    %v4328 = vpack.c.b16 %v3168, %v3164
    %v4329 = vpack.c.b16 %v3169, %v3165
    %v4330 = vpack.c.b16 %v3170, %v3166
    %v4331 = vpack.c.b16 %v3175, %v3171
    %v4332 = vpack.c.b16 %v3176, %v3172
    %v4333 = vpack.c.b16 %v3177, %v3173
    %v4334 = vpack.c.b16 %v3178, %v3174
    %v4335 = vpack.c.b16 %v3183, %v3179
    %v4336 = vpack.c.b16 %v3184, %v3180
    %v4337 = vpack.c.b16 %v3185, %v3181
    %v4338 = vpack.c.b16 %v3186, %v3182
    %v4339 = vpack.c.b16 %v3191, %v3187
    %v4340 = vpack.c.b16 %v3192, %v3188
    %v4341 = vpack.c.b16 %v3193, %v3189
    %v4342 = vpack.c.b16 %v3194, %v3190
    %v4343 = vpack.c.b16 %v3199, %v3195
    %v4344 = vpack.c.b16 %v3200, %v3196
    %v4345 = vpack.c.b16 %v3201, %v3197
    %v4346 = vpack.c.b16 %v3202, %v3198
    %v4347 = vpack.c.b16 %v3207, %v3203
    %v4348 = vpack.c.b16 %v3208, %v3204
    %v4349 = vpack.c.b16 %v3209, %v3205
    %v4350 = vpack.c.b16 %v3210, %v3206
    %v4351 = vpack.c.b16 %v3215, %v3211
    %v4352 = vpack.c.b16 %v3216, %v3212
    %v4353 = vpack.c.b16 %v3217, %v3213
    %v4354 = vpack.c.b16 %v3218, %v3214
    %v4355 = vpack.c.b16 %v3223, %v3219
    %v4356 = vpack.c.b16 %v3224, %v3220
    %v4357 = vpack.c.b16 %v3225, %v3221
    %v4358 = vpack.c.b16 %v3226, %v3222
    %v4359 = vpack.c.b16 %v3231, %v3227
    %v4360 = vpack.c.b16 %v3232, %v3228
    %v4361 = vpack.c.b16 %v3233, %v3229
    %v4362 = vpack.c.b16 %v3234, %v3230
    %v4363 = vpack.c.b16 %v3239, %v3235
    %v4364 = vpack.c.b16 %v3240, %v3236
    %v4365 = vpack.c.b16 %v3241, %v3237
    %v4366 = vpack.c.b16 %v3242, %v3238
    %v4367 = vpack.c.b16 %v3247, %v3243
    %v4368 = vpack.c.b16 %v3248, %v3244
    %v4369 = vpack.c.b16 %v3249, %v3245
    %v4370 = vpack.c.b16 %v3250, %v3246
    %v4371 = vpack.c.b16 %v3255, %v3251
    %v4372 = vpack.c.b16 %v3256, %v3252
    %v4373 = vpack.c.b16 %v3257, %v3253
    %v4374 = vpack.c.b16 %v3258, %v3254
    %v4375 = vpack.c.b16 %v3263, %v3259
    %v4376 = vpack.c.b16 %v3264, %v3260
    %v4377 = vpack.c.b16 %v3265, %v3261
    %v4378 = vpack.c.b16 %v3266, %v3262
    %v4379 = vpack.c.b16 %v3271, %v3267
    %v4380 = vpack.c.b16 %v3272, %v3268
    %v4381 = vpack.c.b16 %v3273, %v3269
    %v4382 = vpack.c.b16 %v3274, %v3270
    %v4383 = vpack.c.b16 %v3279, %v3275
    %v4384 = vpack.c.b16 %v3280, %v3276
    %v4385 = vpack.c.b16 %v3281, %v3277
    %v4386 = vpack.c.b16 %v3282, %v3278
    %v4387 = vpack.c.b16 %v3287, %v3283
    %v4388 = vpack.c.b16 %v3288, %v3284
    %v4389 = vpack.c.b16 %v3289, %v3285
    %v4390 = vpack.c.b16 %v3290, %v3286
    %v4391 = vpack.c.b16 %v3295, %v3291
    %v4392 = vpack.c.b16 %v3296, %v3292
    %v4393 = vpack.c.b16 %v3297, %v3293
    %v4394 = vpack.c.b16 %v3298, %v3294
    %v4395 = vpack.c.b16 %v3303, %v3299
    %v4396 = vpack.c.b16 %v3304, %v3300
    %v4397 = vpack.c.b16 %v3305, %v3301
    %v4398 = vpack.c.b16 %v3306, %v3302
    %v4399 = vpack.c.b16 %v3311, %v3307
    %v4400 = vpack.c.b16 %v3312, %v3308
    %v4401 = vpack.c.b16 %v3313, %v3309
    %v4402 = vpack.c.b16 %v3314, %v3310
    %v4403 = vpack.c.b16 %v3319, %v3315
    %v4404 = vpack.c.b16 %v3320, %v3316
    %v4405 = vpack.c.b16 %v3321, %v3317
    %v4406 = vpack.c.b16 %v3322, %v3318
    %v4407 = vpack.c.b16 %v3327, %v3323
    %v4408 = vpack.c.b16 %v3328, %v3324
    %v4409 = vpack.c.b16 %v3329, %v3325
    %v4410 = vpack.c.b16 %v3330, %v3326
    %v4411 = vpack.c.b16 %v3335, %v3331
    %v4412 = vpack.c.b16 %v3336, %v3332
    %v4413 = vpack.c.b16 %v3337, %v3333
    %v4414 = vpack.c.b16 %v3338, %v3334
    %v4415 = vpack.c.b16 %v3343, %v3339
    %v4416 = vpack.c.b16 %v3344, %v3340
    %v4417 = vpack.c.b16 %v3345, %v3341
    %v4418 = vpack.c.b16 %v3346, %v3342
    %v4419 = vpack.c.b16 %v3351, %v3347
    %v4420 = vpack.c.b16 %v3352, %v3348
    %v4421 = vpack.c.b16 %v3353, %v3349
    %v4422 = vpack.c.b16 %v3354, %v3350
    %v4423 = vpack.c.b16 %v3359, %v3355
    %v4424 = vpack.c.b16 %v3360, %v3356
    %v4425 = vpack.c.b16 %v3361, %v3357
    %v4426 = vpack.c.b16 %v3362, %v3358
    %v4427 = vpack.c.b16 %v3367, %v3363
    %v4428 = vpack.c.b16 %v3368, %v3364
    %v4429 = vpack.c.b16 %v3369, %v3365
    %v4430 = vpack.c.b16 %v3370, %v3366
    %v4431 = vpack.c.b16 %v3375, %v3371
    %v4432 = vpack.c.b16 %v3376, %v3372
    %v4433 = vpack.c.b16 %v3377, %v3373
    %v4434 = vpack.c.b16 %v3378, %v3374
    %v4435 = vpack.c.b16 %v3383, %v3379
    %v4436 = vpack.c.b16 %v3384, %v3380
    %v4437 = vpack.c.b16 %v3385, %v3381
    %v4438 = vpack.c.b16 %v3386, %v3382
    %v4439 = vpack.c.b16 %v3391, %v3387
    %v4440 = vpack.c.b16 %v3392, %v3388
    %v4441 = vpack.c.b16 %v3393, %v3389
    %v4442 = vpack.c.b16 %v3394, %v3390
    %v4443 = vpack.c.b16 %v3399, %v3395
    %v4444 = vpack.c.b16 %v3400, %v3396
    %v4445 = vpack.c.b16 %v3401, %v3397
    %v4446 = vpack.c.b16 %v3402, %v3398
    %v4447 = vpack.c.b16 %v3407, %v3403
    %v4448 = vpack.c.b16 %v3408, %v3404
    %v4449 = vpack.c.b16 %v3409, %v3405
    %v4450 = vpack.c.b16 %v3410, %v3406
    %v4451 = vpack.c.b16 %v3415, %v3411
    %v4452 = vpack.c.b16 %v3416, %v3412
    %v4453 = vpack.c.b16 %v3417, %v3413
    %v4454 = vpack.c.b16 %v3418, %v3414
    %v4455 = vpack.c.b16 %v3423, %v3419
    %v4456 = vpack.c.b16 %v3424, %v3420
    %v4457 = vpack.c.b16 %v3425, %v3421
    %v4458 = vpack.c.b16 %v3426, %v3422
    %v4459 = vpack.c.b16 %v3431, %v3427
    %v4460 = vpack.c.b16 %v3432, %v3428
    %v4461 = vpack.c.b16 %v3433, %v3429
    %v4462 = vpack.c.b16 %v3434, %v3430
    %v4463 = vpack.c.b16 %v3439, %v3435
    %v4464 = vpack.c.b16 %v3440, %v3436
    %v4465 = vpack.c.b16 %v3441, %v3437
    %v4466 = vpack.c.b16 %v3442, %v3438
    %v4467 = vpack.c.b16 %v3447, %v3443
    %v4468 = vpack.c.b16 %v3448, %v3444
    %v4469 = vpack.c.b16 %v3449, %v3445
    %v4470 = vpack.c.b16 %v3450, %v3446
    %v4471 = vpack.c.b16 %v3455, %v3451
    %v4472 = vpack.c.b16 %v3456, %v3452
    %v4473 = vpack.c.b16 %v3457, %v3453
    %v4474 = vpack.c.b16 %v3458, %v3454
    %v4475 = vpack.c.b16 %v3463, %v3459
    %v4476 = vpack.c.b16 %v3464, %v3460
    %v4477 = vpack.c.b16 %v3465, %v3461
    %v4478 = vpack.c.b16 %v3466, %v3462
    %v4479 = vpack.c.b16 %v3471, %v3467
    %v4480 = vpack.c.b16 %v3472, %v3468
    %v4481 = vpack.c.b16 %v3473, %v3469
    %v4482 = vpack.c.b16 %v3474, %v3470
    %v4483 = vpack.c.b16 %v3479, %v3475
    %v4484 = vpack.c.b16 %v3480, %v3476
    %v4485 = vpack.c.b16 %v3481, %v3477
    %v4486 = vpack.c.b16 %v3482, %v3478
    %v4487 = vpack.c.b16 %v3487, %v3483
    %v4488 = vpack.c.b16 %v3488, %v3484
    %v4489 = vpack.c.b16 %v3489, %v3485
    %v4490 = vpack.c.b16 %v3490, %v3486
    %v4491 = vpack.c.b16 %v3495, %v3491
    %v4492 = vpack.c.b16 %v3496, %v3492
    %v4493 = vpack.c.b16 %v3497, %v3493
    %v4494 = vpack.c.b16 %v3498, %v3494
    %v4495 = vpack.c.b16 %v3503, %v3499
    %v4496 = vpack.c.b16 %v3504, %v3500
    %v4497 = vpack.c.b16 %v3505, %v3501
    %v4498 = vpack.c.b16 %v3506, %v3502
    %v4499 = vpack.c.b16 %v3511, %v3507
    %v4500 = vpack.c.b16 %v3512, %v3508
    %v4501 = vpack.c.b16 %v3513, %v3509
    %v4502 = vpack.c.b16 %v3514, %v3510
    %v4503 = vpack.c.b16 %v3519, %v3515
    %v4504 = vpack.c.b16 %v3520, %v3516
    %v4505 = vpack.c.b16 %v3521, %v3517
    %v4506 = vpack.c.b16 %v3522, %v3518
    %v4507 = vpack.c.b16 %v3527, %v3523
    %v4508 = vpack.c.b16 %v3528, %v3524
    %v4509 = vpack.c.b16 %v3529, %v3525
    %v4510 = vpack.c.b16 %v3530, %v3526
    %v4511 = vpack.c.b16 %v3535, %v3531
    %v4512 = vpack.c.b16 %v3536, %v3532
    %v4513 = vpack.c.b16 %v3537, %v3533
    %v4514 = vpack.c.b16 %v3538, %v3534
    %v4515 = vpack.c.b16 %v3543, %v3539
    %v4516 = vpack.c.b16 %v3544, %v3540
    %v4517 = vpack.c.b16 %v3545, %v3541
    %v4518 = vpack.c.b16 %v3546, %v3542
    %v4519 = vpack.c.b16 %v3551, %v3547
    %v4520 = vpack.c.b16 %v3552, %v3548
    %v4521 = vpack.c.b16 %v3553, %v3549
    %v4522 = vpack.c.b16 %v3554, %v3550
    %v4523 = vpack.c.b16 %v3559, %v3555
    %v4524 = vpack.c.b16 %v3560, %v3556
    %v4525 = vpack.c.b16 %v3561, %v3557
    %v4526 = vpack.c.b16 %v3562, %v3558
    %v4527 = vpack.c.b16 %v3567, %v3563
    %v4528 = vpack.c.b16 %v3568, %v3564
    %v4529 = vpack.c.b16 %v3569, %v3565
    %v4530 = vpack.c.b16 %v3570, %v3566
    %v4531 = vpack.c.b16 %v3575, %v3571
    %v4532 = vpack.c.b16 %v3576, %v3572
    %v4533 = vpack.c.b16 %v3577, %v3573
    %v4534 = vpack.c.b16 %v3578, %v3574
    %v4535 = vpack.c.b16 %v3583, %v3579
    %v4536 = vpack.c.b16 %v3584, %v3580
    %v4537 = vpack.c.b16 %v3585, %v3581
    %v4538 = vpack.c.b16 %v3586, %v3582
    %v4539 = vpack.c.b16 %v3591, %v3587
    %v4540 = vpack.c.b16 %v3592, %v3588
    %v4541 = vpack.c.b16 %v3593, %v3589
    %v4542 = vpack.c.b16 %v3594, %v3590
    %v4543 = vpack.c.b16 %v3599, %v3595
    %v4544 = vpack.c.b16 %v3600, %v3596
    %v4545 = vpack.c.b16 %v3601, %v3597
    %v4546 = vpack.c.b16 %v3602, %v3598
    %v4547 = vpack.c.b16 %v3607, %v3603
    %v4548 = vpack.c.b16 %v3608, %v3604
    %v4549 = vpack.c.b16 %v3609, %v3605
    %v4550 = vpack.c.b16 %v3610, %v3606
    %v4551 = vpack.c.b16 %v3615, %v3611
    %v4552 = vpack.c.b16 %v3616, %v3612
    %v4553 = vpack.c.b16 %v3617, %v3613
    %v4554 = vpack.c.b16 %v3618, %v3614
    %v4555 = vpack.c.b16 %v3623, %v3619
    %v4556 = vpack.c.b16 %v3624, %v3620
    %v4557 = vpack.c.b16 %v3625, %v3621
    %v4558 = vpack.c.b16 %v3626, %v3622
    %v4559 = vpack.c.b16 %v3631, %v3627
    %v4560 = vpack.c.b16 %v3632, %v3628
    %v4561 = vpack.c.b16 %v3633, %v3629
    %v4562 = vpack.c.b16 %v3634, %v3630
    %v4563 = vpack.c.b16 %v3639, %v3635
    %v4564 = vpack.c.b16 %v3640, %v3636
    %v4565 = vpack.c.b16 %v3641, %v3637
    %v4566 = vpack.c.b16 %v3642, %v3638
    %v4567 = vpack.c.b16 %v3647, %v3643
    %v4568 = vpack.c.b16 %v3648, %v3644
    %v4569 = vpack.c.b16 %v3649, %v3645
    %v4570 = vpack.c.b16 %v3650, %v3646
    %v4571 = vpack.c.b16 %v3655, %v3651
    %v4572 = vpack.c.b16 %v3656, %v3652
    %v4573 = vpack.c.b16 %v3657, %v3653
    %v4574 = vpack.c.b16 %v3658, %v3654
    %v4575 = vpack.c.b16 %v3663, %v3659
    %v4576 = vpack.c.b16 %v3664, %v3660
    %v4577 = vpack.c.b16 %v3665, %v3661
    %v4578 = vpack.c.b16 %v3666, %v3662
    %v4579 = vpack.c.b16 %v3671, %v3667
    %v4580 = vpack.c.b16 %v3672, %v3668
    %v4581 = vpack.c.b16 %v3673, %v3669
    %v4582 = vpack.c.b16 %v3674, %v3670
    %v4583 = vpack.c.b16 %v3679, %v3675
    %v4584 = vpack.c.b16 %v3680, %v3676
    %v4585 = vpack.c.b16 %v3681, %v3677
    %v4586 = vpack.c.b16 %v3682, %v3678
    %v4587 = vpack.c.b16 %v3687, %v3683
    %v4588 = vpack.c.b16 %v3688, %v3684
    %v4589 = vpack.c.b16 %v3689, %v3685
    %v4590 = vpack.c.b16 %v3690, %v3686
    %vm5491 = vcmask 130048
    %v5492 = vsel %vm5491, %v962, 0
    %5494 = vmatpush.bf16.msra.mxu0 %v3719
    %5495 = vmatpush.bf16.msra.mxu0 %v3715
    %5496 = vmatpush.bf16.msra.mxu0 %v3711
    %5497 = vmatpush.bf16.msra.mxu0 %v3707
    %5498 = vmatpush.bf16.msra.mxu0 %v3703
    %5499 = vmatpush.bf16.msra.mxu0 %v3699
    %5500 = vmatpush.bf16.msra.mxu0 %v3695
    %5501 = vmatpush.bf16.msra.mxu0 %v3691
    %5502 = vmatmul.bf16.gmra.mxu0 %v928
    %v5503 = vpop.f32.mrf.mxu0
    %v5504 = vadd.f32 0.0, %v5503
    %v5505 = vpop.f32.mrf.mxu0
    %5506 = vdwg.mxu0
    %5507 = vmatpush.bf16.msra.mxu0 %v3751
    %5508 = vmatpush.bf16.msra.mxu0 %v3747
    %5509 = vmatpush.bf16.msra.mxu0 %v3743
    %5510 = vmatpush.bf16.msra.mxu0 %v3739
    %5511 = vmatpush.bf16.msra.mxu0 %v3735
    %5512 = vmatpush.bf16.msra.mxu0 %v3731
    %5513 = vmatpush.bf16.msra.mxu0 %v3727
    %5514 = vmatpush.bf16.msra.mxu0 %v3723
    %5515 = vmatmul.bf16.gmra.mxu0 %v929
    %v5516 = vpop.f32.mrf.mxu0
    %v5517 = vadd.f32 %v5504, %v5516
    %v5518 = vpop.f32.mrf.mxu0
    %5519 = vdwg.mxu0
    %5520 = vmatpush.bf16.msra.mxu0 %v3783
    %5521 = vmatpush.bf16.msra.mxu0 %v3779
    %5522 = vmatpush.bf16.msra.mxu0 %v3775
    %5523 = vmatpush.bf16.msra.mxu0 %v3771
    %5524 = vmatpush.bf16.msra.mxu0 %v3767
    %5525 = vmatpush.bf16.msra.mxu0 %v3763
    %5526 = vmatpush.bf16.msra.mxu0 %v3759
    %5527 = vmatpush.bf16.msra.mxu0 %v3755
    %5528 = vmatmul.bf16.gmra.mxu0 %v930
    %v5529 = vpop.f32.mrf.mxu0
    %v5530 = vadd.f32 %v5517, %v5529
    %v5531 = vpop.f32.mrf.mxu0
    %5532 = vdwg.mxu0
    %5533 = vmatpush.bf16.msra.mxu0 %v3815
    %5534 = vmatpush.bf16.msra.mxu0 %v3811
    %5535 = vmatpush.bf16.msra.mxu0 %v3807
    %5536 = vmatpush.bf16.msra.mxu0 %v3803
    %5537 = vmatpush.bf16.msra.mxu0 %v3799
    %5538 = vmatpush.bf16.msra.mxu0 %v3795
    %5539 = vmatpush.bf16.msra.mxu0 %v3791
    %5540 = vmatpush.bf16.msra.mxu0 %v3787
    %5541 = vmatmul.bf16.gmra.mxu0 %v931
    %v5542 = vpop.f32.mrf.mxu0
    %v5543 = vadd.f32 %v5530, %v5542
    %v5544 = vpop.f32.mrf.mxu0
    %5545 = vdwg.mxu0
    %5546 = vmatpush.bf16.msra.mxu0 %v3847
    %5547 = vmatpush.bf16.msra.mxu0 %v3843
    %5548 = vmatpush.bf16.msra.mxu0 %v3839
    %5549 = vmatpush.bf16.msra.mxu0 %v3835
    %5550 = vmatpush.bf16.msra.mxu0 %v3831
    %5551 = vmatpush.bf16.msra.mxu0 %v3827
    %5552 = vmatpush.bf16.msra.mxu0 %v3823
    %5553 = vmatpush.bf16.msra.mxu0 %v3819
    %5554 = vmatmul.bf16.gmra.mxu0 %v932
    %v5555 = vpop.f32.mrf.mxu0
    %v5556 = vadd.f32 %v5543, %v5555
    %v5557 = vpop.f32.mrf.mxu0
    %5558 = vdwg.mxu0
    %5559 = vmatpush.bf16.msra.mxu0 %v3879
    %5560 = vmatpush.bf16.msra.mxu0 %v3875
    %5561 = vmatpush.bf16.msra.mxu0 %v3871
    %5562 = vmatpush.bf16.msra.mxu0 %v3867
    %5563 = vmatpush.bf16.msra.mxu0 %v3863
    %5564 = vmatpush.bf16.msra.mxu0 %v3859
    %5565 = vmatpush.bf16.msra.mxu0 %v3855
    %5566 = vmatpush.bf16.msra.mxu0 %v3851
    %5567 = vmatmul.bf16.gmra.mxu0 %v933
    %v5568 = vpop.f32.mrf.mxu0
    %v5569 = vadd.f32 %v5556, %v5568
    %v5570 = vpop.f32.mrf.mxu0
    %5571 = vdwg.mxu0
    %5572 = vmatpush.bf16.msra.mxu0 %v3911
    %5573 = vmatpush.bf16.msra.mxu0 %v3907
    %5574 = vmatpush.bf16.msra.mxu0 %v3903
    %5575 = vmatpush.bf16.msra.mxu0 %v3899
    %5576 = vmatpush.bf16.msra.mxu0 %v3895
    %5577 = vmatpush.bf16.msra.mxu0 %v3891
    %5578 = vmatpush.bf16.msra.mxu0 %v3887
    %5579 = vmatpush.bf16.msra.mxu0 %v3883
    %5580 = vmatmul.bf16.gmra.mxu0 %v934
    %v5581 = vpop.f32.mrf.mxu0
    %v5582 = vadd.f32 %v5569, %v5581
    %v5583 = vpop.f32.mrf.mxu0
    %5584 = vdwg.mxu0
    %5585 = vmatpush.bf16.msra.mxu0 %v3943
    %5586 = vmatpush.bf16.msra.mxu0 %v3939
    %5587 = vmatpush.bf16.msra.mxu0 %v3935
    %5588 = vmatpush.bf16.msra.mxu0 %v3931
    %5589 = vmatpush.bf16.msra.mxu0 %v3927
    %5590 = vmatpush.bf16.msra.mxu0 %v3923
    %5591 = vmatpush.bf16.msra.mxu0 %v3919
    %5592 = vmatpush.bf16.msra.mxu0 %v3915
    %5593 = vmatmul.bf16.gmra.mxu0 %v935
    %v5594 = vpop.f32.mrf.mxu0
    %v5595 = vadd.f32 %v5582, %v5594
    %v5596 = vpop.f32.mrf.mxu0
    %5597 = vdwg.mxu0
    %5598 = vmatpush.bf16.msra.mxu0 %v3975
    %5599 = vmatpush.bf16.msra.mxu0 %v3971
    %5600 = vmatpush.bf16.msra.mxu0 %v3967
    %5601 = vmatpush.bf16.msra.mxu0 %v3963
    %5602 = vmatpush.bf16.msra.mxu0 %v3959
    %5603 = vmatpush.bf16.msra.mxu0 %v3955
    %5604 = vmatpush.bf16.msra.mxu0 %v3951
    %5605 = vmatpush.bf16.msra.mxu0 %v3947
    %5606 = vmatmul.bf16.gmra.mxu0 %v938
    %v5607 = vpop.f32.mrf.mxu0
    %v5608 = vadd.f32 %v5595, %v5607
    %v5609 = vpop.f32.mrf.mxu0
    %5610 = vdwg.mxu0
    %5611 = vmatpush.bf16.msra.mxu0 %v4007
    %5612 = vmatpush.bf16.msra.mxu0 %v4003
    %5613 = vmatpush.bf16.msra.mxu0 %v3999
    %5614 = vmatpush.bf16.msra.mxu0 %v3995
    %5615 = vmatpush.bf16.msra.mxu0 %v3991
    %5616 = vmatpush.bf16.msra.mxu0 %v3987
    %5617 = vmatpush.bf16.msra.mxu0 %v3983
    %5618 = vmatpush.bf16.msra.mxu0 %v3979
    %5619 = vmatmul.bf16.gmra.mxu0 %v939
    %v5620 = vpop.f32.mrf.mxu0
    %v5621 = vadd.f32 %v5608, %v5620
    %v5622 = vpop.f32.mrf.mxu0
    %5623 = vdwg.mxu0
    %5624 = vmatpush.bf16.msra.mxu0 %v4039
    %5625 = vmatpush.bf16.msra.mxu0 %v4035
    %5626 = vmatpush.bf16.msra.mxu0 %v4031
    %5627 = vmatpush.bf16.msra.mxu0 %v4027
    %5628 = vmatpush.bf16.msra.mxu0 %v4023
    %5629 = vmatpush.bf16.msra.mxu0 %v4019
    %5630 = vmatpush.bf16.msra.mxu0 %v4015
    %5631 = vmatpush.bf16.msra.mxu0 %v4011
    %5632 = vmatmul.bf16.gmra.mxu0 %v940
    %v5633 = vpop.f32.mrf.mxu0
    %v5634 = vadd.f32 %v5621, %v5633
    %v5635 = vpop.f32.mrf.mxu0
    %5636 = vdwg.mxu0
    %5637 = vmatpush.bf16.msra.mxu0 %v4071
    %5638 = vmatpush.bf16.msra.mxu0 %v4067
    %5639 = vmatpush.bf16.msra.mxu0 %v4063
    %5640 = vmatpush.bf16.msra.mxu0 %v4059
    %5641 = vmatpush.bf16.msra.mxu0 %v4055
    %5642 = vmatpush.bf16.msra.mxu0 %v4051
    %5643 = vmatpush.bf16.msra.mxu0 %v4047
    %5644 = vmatpush.bf16.msra.mxu0 %v4043
    %5645 = vmatmul.bf16.gmra.mxu0 %v941
    %v5646 = vpop.f32.mrf.mxu0
    %v5647 = vadd.f32 %v5634, %v5646
    %v5648 = vpop.f32.mrf.mxu0
    %5649 = vdwg.mxu0
    %5650 = vmatpush.bf16.msra.mxu0 %v4103
    %5651 = vmatpush.bf16.msra.mxu0 %v4099
    %5652 = vmatpush.bf16.msra.mxu0 %v4095
    %5653 = vmatpush.bf16.msra.mxu0 %v4091
    %5654 = vmatpush.bf16.msra.mxu0 %v4087
    %5655 = vmatpush.bf16.msra.mxu0 %v4083
    %5656 = vmatpush.bf16.msra.mxu0 %v4079
    %5657 = vmatpush.bf16.msra.mxu0 %v4075
    %5658 = vmatmul.bf16.gmra.mxu0 %v942
    %v5659 = vpop.f32.mrf.mxu0
    %v5660 = vadd.f32 %v5647, %v5659
    %v5661 = vpop.f32.mrf.mxu0
    %5662 = vdwg.mxu0
    %5663 = vmatpush.bf16.msra.mxu0 %v4135
    %5664 = vmatpush.bf16.msra.mxu0 %v4131
    %5665 = vmatpush.bf16.msra.mxu0 %v4127
    %5666 = vmatpush.bf16.msra.mxu0 %v4123
    %5667 = vmatpush.bf16.msra.mxu0 %v4119
    %5668 = vmatpush.bf16.msra.mxu0 %v4115
    %5669 = vmatpush.bf16.msra.mxu0 %v4111
    %5670 = vmatpush.bf16.msra.mxu0 %v4107
    %5671 = vmatmul.bf16.gmra.mxu0 %v943
    %v5672 = vpop.f32.mrf.mxu0
    %v5673 = vadd.f32 %v5660, %v5672
    %v5674 = vpop.f32.mrf.mxu0
    %5675 = vdwg.mxu0
    %5676 = vmatpush.bf16.msra.mxu0 %v4167
    %5677 = vmatpush.bf16.msra.mxu0 %v4163
    %5678 = vmatpush.bf16.msra.mxu0 %v4159
    %5679 = vmatpush.bf16.msra.mxu0 %v4155
    %5680 = vmatpush.bf16.msra.mxu0 %v4151
    %5681 = vmatpush.bf16.msra.mxu0 %v4147
    %5682 = vmatpush.bf16.msra.mxu0 %v4143
    %5683 = vmatpush.bf16.msra.mxu0 %v4139
    %5684 = vmatmul.bf16.gmra.mxu0 %v944
    %v5685 = vpop.f32.mrf.mxu0
    %v5686 = vadd.f32 %v5673, %v5685
    %v5687 = vpop.f32.mrf.mxu0
    %5688 = vdwg.mxu0
    %5689 = vmatpush.bf16.msra.mxu0 %v4199
    %5690 = vmatpush.bf16.msra.mxu0 %v4195
    %5691 = vmatpush.bf16.msra.mxu0 %v4191
    %5692 = vmatpush.bf16.msra.mxu0 %v4187
    %5693 = vmatpush.bf16.msra.mxu0 %v4183
    %5694 = vmatpush.bf16.msra.mxu0 %v4179
    %5695 = vmatpush.bf16.msra.mxu0 %v4175
    %5696 = vmatpush.bf16.msra.mxu0 %v4171
    %5697 = vmatmul.bf16.gmra.mxu0 %v945
    %v5698 = vpop.f32.mrf.mxu0
    %v5699 = vadd.f32 %v5686, %v5698
    %v5700 = vpop.f32.mrf.mxu0
    %5701 = vdwg.mxu0
    %5702 = vmatpush.bf16.msra.mxu0 %v4231
    %5703 = vmatpush.bf16.msra.mxu0 %v4227
    %5704 = vmatpush.bf16.msra.mxu0 %v4223
    %5705 = vmatpush.bf16.msra.mxu0 %v4219
    %5706 = vmatpush.bf16.msra.mxu0 %v4215
    %5707 = vmatpush.bf16.msra.mxu0 %v4211
    %5708 = vmatpush.bf16.msra.mxu0 %v4207
    %5709 = vmatpush.bf16.msra.mxu0 %v4203
    %5710 = vmatmul.bf16.gmra.mxu0 %v948
    %v5711 = vpop.f32.mrf.mxu0
    %v5712 = vadd.f32 %v5699, %v5711
    %v5713 = vpop.f32.mrf.mxu0
    %5714 = vdwg.mxu0
    %5715 = vmatpush.bf16.msra.mxu0 %v4263
    %5716 = vmatpush.bf16.msra.mxu0 %v4259
    %5717 = vmatpush.bf16.msra.mxu0 %v4255
    %5718 = vmatpush.bf16.msra.mxu0 %v4251
    %5719 = vmatpush.bf16.msra.mxu0 %v4247
    %5720 = vmatpush.bf16.msra.mxu0 %v4243
    %5721 = vmatpush.bf16.msra.mxu0 %v4239
    %5722 = vmatpush.bf16.msra.mxu0 %v4235
    %5723 = vmatmul.bf16.gmra.mxu0 %v949
    %v5724 = vpop.f32.mrf.mxu0
    %v5725 = vadd.f32 %v5712, %v5724
    %v5726 = vpop.f32.mrf.mxu0
    %5727 = vdwg.mxu0
    %5728 = vmatpush.bf16.msra.mxu0 %v4295
    %5729 = vmatpush.bf16.msra.mxu0 %v4291
    %5730 = vmatpush.bf16.msra.mxu0 %v4287
    %5731 = vmatpush.bf16.msra.mxu0 %v4283
    %5732 = vmatpush.bf16.msra.mxu0 %v4279
    %5733 = vmatpush.bf16.msra.mxu0 %v4275
    %5734 = vmatpush.bf16.msra.mxu0 %v4271
    %5735 = vmatpush.bf16.msra.mxu0 %v4267
    %5736 = vmatmul.bf16.gmra.mxu0 %v950
    %v5737 = vpop.f32.mrf.mxu0
    %v5738 = vadd.f32 %v5725, %v5737
    %v5739 = vpop.f32.mrf.mxu0
    %5740 = vdwg.mxu0
    %5741 = vmatpush.bf16.msra.mxu0 %v4327
    %5742 = vmatpush.bf16.msra.mxu0 %v4323
    %5743 = vmatpush.bf16.msra.mxu0 %v4319
    %5744 = vmatpush.bf16.msra.mxu0 %v4315
    %5745 = vmatpush.bf16.msra.mxu0 %v4311
    %5746 = vmatpush.bf16.msra.mxu0 %v4307
    %5747 = vmatpush.bf16.msra.mxu0 %v4303
    %5748 = vmatpush.bf16.msra.mxu0 %v4299
    %5749 = vmatmul.bf16.gmra.mxu0 %v951
    %v5750 = vpop.f32.mrf.mxu0
    %v5751 = vadd.f32 %v5738, %v5750
    %v5752 = vpop.f32.mrf.mxu0
    %5753 = vdwg.mxu0
    %5754 = vmatpush.bf16.msra.mxu0 %v4359
    %5755 = vmatpush.bf16.msra.mxu0 %v4355
    %5756 = vmatpush.bf16.msra.mxu0 %v4351
    %5757 = vmatpush.bf16.msra.mxu0 %v4347
    %5758 = vmatpush.bf16.msra.mxu0 %v4343
    %5759 = vmatpush.bf16.msra.mxu0 %v4339
    %5760 = vmatpush.bf16.msra.mxu0 %v4335
    %5761 = vmatpush.bf16.msra.mxu0 %v4331
    %5762 = vmatmul.bf16.gmra.mxu0 %v952
    %v5763 = vpop.f32.mrf.mxu0
    %v5764 = vadd.f32 %v5751, %v5763
    %v5765 = vpop.f32.mrf.mxu0
    %5766 = vdwg.mxu0
    %5767 = vmatpush.bf16.msra.mxu0 %v4391
    %5768 = vmatpush.bf16.msra.mxu0 %v4387
    %5769 = vmatpush.bf16.msra.mxu0 %v4383
    %5770 = vmatpush.bf16.msra.mxu0 %v4379
    %5771 = vmatpush.bf16.msra.mxu0 %v4375
    %5772 = vmatpush.bf16.msra.mxu0 %v4371
    %5773 = vmatpush.bf16.msra.mxu0 %v4367
    %5774 = vmatpush.bf16.msra.mxu0 %v4363
    %5775 = vmatmul.bf16.gmra.mxu0 %v953
    %v5776 = vpop.f32.mrf.mxu0
    %v5777 = vadd.f32 %v5764, %v5776
    %v5778 = vpop.f32.mrf.mxu0
    %5779 = vdwg.mxu0
    %5780 = vmatpush.bf16.msra.mxu0 %v4423
    %5781 = vmatpush.bf16.msra.mxu0 %v4419
    %5782 = vmatpush.bf16.msra.mxu0 %v4415
    %5783 = vmatpush.bf16.msra.mxu0 %v4411
    %5784 = vmatpush.bf16.msra.mxu0 %v4407
    %5785 = vmatpush.bf16.msra.mxu0 %v4403
    %5786 = vmatpush.bf16.msra.mxu0 %v4399
    %5787 = vmatpush.bf16.msra.mxu0 %v4395
    %5788 = vmatmul.bf16.gmra.mxu0 %v954
    %v5789 = vpop.f32.mrf.mxu0
    %v5790 = vadd.f32 %v5777, %v5789
    %v5791 = vpop.f32.mrf.mxu0
    %5792 = vdwg.mxu0
    %5793 = vmatpush.bf16.msra.mxu0 %v4455
    %5794 = vmatpush.bf16.msra.mxu0 %v4451
    %5795 = vmatpush.bf16.msra.mxu0 %v4447
    %5796 = vmatpush.bf16.msra.mxu0 %v4443
    %5797 = vmatpush.bf16.msra.mxu0 %v4439
    %5798 = vmatpush.bf16.msra.mxu0 %v4435
    %5799 = vmatpush.bf16.msra.mxu0 %v4431
    %5800 = vmatpush.bf16.msra.mxu0 %v4427
    %5801 = vmatmul.bf16.gmra.mxu0 %v955
    %v5802 = vpop.f32.mrf.mxu0
    %v5803 = vadd.f32 %v5790, %v5802
    %v5804 = vpop.f32.mrf.mxu0
    %5805 = vdwg.mxu0
    %5806 = vmatpush.bf16.msra.mxu0 %v4487
    %5807 = vmatpush.bf16.msra.mxu0 %v4483
    %5808 = vmatpush.bf16.msra.mxu0 %v4479
    %5809 = vmatpush.bf16.msra.mxu0 %v4475
    %5810 = vmatpush.bf16.msra.mxu0 %v4471
    %5811 = vmatpush.bf16.msra.mxu0 %v4467
    %5812 = vmatpush.bf16.msra.mxu0 %v4463
    %5813 = vmatpush.bf16.msra.mxu0 %v4459
    %5814 = vmatmul.bf16.gmra.mxu0 %v958
    %v5815 = vpop.f32.mrf.mxu0
    %v5816 = vadd.f32 %v5803, %v5815
    %v5817 = vpop.f32.mrf.mxu0
    %5818 = vdwg.mxu0
    %5819 = vmatpush.bf16.msra.mxu0 %v4519
    %5820 = vmatpush.bf16.msra.mxu0 %v4515
    %5821 = vmatpush.bf16.msra.mxu0 %v4511
    %5822 = vmatpush.bf16.msra.mxu0 %v4507
    %5823 = vmatpush.bf16.msra.mxu0 %v4503
    %5824 = vmatpush.bf16.msra.mxu0 %v4499
    %5825 = vmatpush.bf16.msra.mxu0 %v4495
    %5826 = vmatpush.bf16.msra.mxu0 %v4491
    %5827 = vmatmul.bf16.gmra.mxu0 %v959
    %v5828 = vpop.f32.mrf.mxu0
    %v5829 = vadd.f32 %v5816, %v5828
    %v5830 = vpop.f32.mrf.mxu0
    %5831 = vdwg.mxu0
    %5832 = vmatpush.bf16.msra.mxu0 %v4551
    %5833 = vmatpush.bf16.msra.mxu0 %v4547
    %5834 = vmatpush.bf16.msra.mxu0 %v4543
    %5835 = vmatpush.bf16.msra.mxu0 %v4539
    %5836 = vmatpush.bf16.msra.mxu0 %v4535
    %5837 = vmatpush.bf16.msra.mxu0 %v4531
    %5838 = vmatpush.bf16.msra.mxu0 %v4527
    %5839 = vmatpush.bf16.msra.mxu0 %v4523
    %5840 = vmatmul.bf16.gmra.mxu0 %v960
    %v5841 = vpop.f32.mrf.mxu0
    %v5842 = vadd.f32 %v5829, %v5841
    %v5843 = vpop.f32.mrf.mxu0
    %5844 = vdwg.mxu0
    %5845 = vmatpush.bf16.msra.mxu0 %v4583
    %5846 = vmatpush.bf16.msra.mxu0 %v4579
    %5847 = vmatpush.bf16.msra.mxu0 %v4575
    %5848 = vmatpush.bf16.msra.mxu0 %v4571
    %5849 = vmatpush.bf16.msra.mxu0 %v4567
    %5850 = vmatpush.bf16.msra.mxu0 %v4563
    %5851 = vmatpush.bf16.msra.mxu0 %v4559
    %5852 = vmatpush.bf16.msra.mxu0 %v4555
    %5853 = vmatmul.bf16.gmra.mxu0 %v961
    %v5854 = vpop.f32.mrf.mxu0
    %v5855 = vadd.f32 %v5842, %v5854
    %v5856 = vpop.f32.mrf.mxu0
    %5857 = vdwg.mxu0
    %5858 = vmatpush.bf16.msra.mxu0 0
    %5859 = vmatpush.bf16.msra.mxu0 0
    %5860 = vmatpush.bf16.msra.mxu0 0
    %5861 = vmatpush.bf16.msra.mxu0 0
    %5862 = vmatpush.bf16.msra.mxu0 0
    %5863 = vmatpush.bf16.msra.mxu0 0
    %5864 = vmatpush.bf16.msra.mxu0 0
    %5865 = vmatpush.bf16.msra.mxu0 %v4587
    %5866 = vmatmul.bf16.gmra.mxu0 %v5492
    %v5867 = vpop.f32.mrf.mxu0
    %v5868 = vadd.f32 %v5855, %v5867
    %v5869 = vpop.f32.mrf.mxu0
    %5870 = vdwg.mxu0
    %5871 = vmatpush.bf16.msra.mxu0 %v3720
    %5872 = vmatpush.bf16.msra.mxu0 %v3716
    %5873 = vmatpush.bf16.msra.mxu0 %v3712
    %5874 = vmatpush.bf16.msra.mxu0 %v3708
    %5875 = vmatpush.bf16.msra.mxu0 %v3704
    %5876 = vmatpush.bf16.msra.mxu0 %v3700
    %5877 = vmatpush.bf16.msra.mxu0 %v3696
    %5878 = vmatpush.bf16.msra.mxu0 %v3692
    %5879 = vmatmul.bf16.gmra.mxu0 %v928
    %v5880 = vpop.f32.mrf.mxu0
    %v5881 = vadd.f32 0.0, %v5880
    %v5882 = vpop.f32.mrf.mxu0
    %5883 = vdwg.mxu0
    %5884 = vmatpush.bf16.msra.mxu0 %v3752
    %5885 = vmatpush.bf16.msra.mxu0 %v3748
    %5886 = vmatpush.bf16.msra.mxu0 %v3744
    %5887 = vmatpush.bf16.msra.mxu0 %v3740
    %5888 = vmatpush.bf16.msra.mxu0 %v3736
    %5889 = vmatpush.bf16.msra.mxu0 %v3732
    %5890 = vmatpush.bf16.msra.mxu0 %v3728
    %5891 = vmatpush.bf16.msra.mxu0 %v3724
    %5892 = vmatmul.bf16.gmra.mxu0 %v929
    %v5893 = vpop.f32.mrf.mxu0
    %v5894 = vadd.f32 %v5881, %v5893
    %v5895 = vpop.f32.mrf.mxu0
    %5896 = vdwg.mxu0
    %5897 = vmatpush.bf16.msra.mxu0 %v3784
    %5898 = vmatpush.bf16.msra.mxu0 %v3780
    %5899 = vmatpush.bf16.msra.mxu0 %v3776
    %5900 = vmatpush.bf16.msra.mxu0 %v3772
    %5901 = vmatpush.bf16.msra.mxu0 %v3768
    %5902 = vmatpush.bf16.msra.mxu0 %v3764
    %5903 = vmatpush.bf16.msra.mxu0 %v3760
    %5904 = vmatpush.bf16.msra.mxu0 %v3756
    %5905 = vmatmul.bf16.gmra.mxu0 %v930
    %v5906 = vpop.f32.mrf.mxu0
    %v5907 = vadd.f32 %v5894, %v5906
    %v5908 = vpop.f32.mrf.mxu0
    %5909 = vdwg.mxu0
    %5910 = vmatpush.bf16.msra.mxu0 %v3816
    %5911 = vmatpush.bf16.msra.mxu0 %v3812
    %5912 = vmatpush.bf16.msra.mxu0 %v3808
    %5913 = vmatpush.bf16.msra.mxu0 %v3804
    %5914 = vmatpush.bf16.msra.mxu0 %v3800
    %5915 = vmatpush.bf16.msra.mxu0 %v3796
    %5916 = vmatpush.bf16.msra.mxu0 %v3792
    %5917 = vmatpush.bf16.msra.mxu0 %v3788
    %5918 = vmatmul.bf16.gmra.mxu0 %v931
    %v5919 = vpop.f32.mrf.mxu0
    %v5920 = vadd.f32 %v5907, %v5919
    %v5921 = vpop.f32.mrf.mxu0
    %5922 = vdwg.mxu0
    %5923 = vmatpush.bf16.msra.mxu0 %v3848
    %5924 = vmatpush.bf16.msra.mxu0 %v3844
    %5925 = vmatpush.bf16.msra.mxu0 %v3840
    %5926 = vmatpush.bf16.msra.mxu0 %v3836
    %5927 = vmatpush.bf16.msra.mxu0 %v3832
    %5928 = vmatpush.bf16.msra.mxu0 %v3828
    %5929 = vmatpush.bf16.msra.mxu0 %v3824
    %5930 = vmatpush.bf16.msra.mxu0 %v3820
    %5931 = vmatmul.bf16.gmra.mxu0 %v932
    %v5932 = vpop.f32.mrf.mxu0
    %v5933 = vadd.f32 %v5920, %v5932
    %v5934 = vpop.f32.mrf.mxu0
    %5935 = vdwg.mxu0
    %5936 = vmatpush.bf16.msra.mxu0 %v3880
    %5937 = vmatpush.bf16.msra.mxu0 %v3876
    %5938 = vmatpush.bf16.msra.mxu0 %v3872
    %5939 = vmatpush.bf16.msra.mxu0 %v3868
    %5940 = vmatpush.bf16.msra.mxu0 %v3864
    %5941 = vmatpush.bf16.msra.mxu0 %v3860
    %5942 = vmatpush.bf16.msra.mxu0 %v3856
    %5943 = vmatpush.bf16.msra.mxu0 %v3852
    %5944 = vmatmul.bf16.gmra.mxu0 %v933
    %v5945 = vpop.f32.mrf.mxu0
    %v5946 = vadd.f32 %v5933, %v5945
    %v5947 = vpop.f32.mrf.mxu0
    %5948 = vdwg.mxu0
    %5949 = vmatpush.bf16.msra.mxu0 %v3912
    %5950 = vmatpush.bf16.msra.mxu0 %v3908
    %5951 = vmatpush.bf16.msra.mxu0 %v3904
    %5952 = vmatpush.bf16.msra.mxu0 %v3900
    %5953 = vmatpush.bf16.msra.mxu0 %v3896
    %5954 = vmatpush.bf16.msra.mxu0 %v3892
    %5955 = vmatpush.bf16.msra.mxu0 %v3888
    %5956 = vmatpush.bf16.msra.mxu0 %v3884
    %5957 = vmatmul.bf16.gmra.mxu0 %v934
    %v5958 = vpop.f32.mrf.mxu0
    %v5959 = vadd.f32 %v5946, %v5958
    %v5960 = vpop.f32.mrf.mxu0
    %5961 = vdwg.mxu0
    %5962 = vmatpush.bf16.msra.mxu0 %v3944
    %5963 = vmatpush.bf16.msra.mxu0 %v3940
    %5964 = vmatpush.bf16.msra.mxu0 %v3936
    %5965 = vmatpush.bf16.msra.mxu0 %v3932
    %5966 = vmatpush.bf16.msra.mxu0 %v3928
    %5967 = vmatpush.bf16.msra.mxu0 %v3924
    %5968 = vmatpush.bf16.msra.mxu0 %v3920
    %5969 = vmatpush.bf16.msra.mxu0 %v3916
    %5970 = vmatmul.bf16.gmra.mxu0 %v935
    %v5971 = vpop.f32.mrf.mxu0
    %v5972 = vadd.f32 %v5959, %v5971
    %v5973 = vpop.f32.mrf.mxu0
    %5974 = vdwg.mxu0
    %5975 = vmatpush.bf16.msra.mxu0 %v3976
    %5976 = vmatpush.bf16.msra.mxu0 %v3972
    %5977 = vmatpush.bf16.msra.mxu0 %v3968
    %5978 = vmatpush.bf16.msra.mxu0 %v3964
    %5979 = vmatpush.bf16.msra.mxu0 %v3960
    %5980 = vmatpush.bf16.msra.mxu0 %v3956
    %5981 = vmatpush.bf16.msra.mxu0 %v3952
    %5982 = vmatpush.bf16.msra.mxu0 %v3948
    %5983 = vmatmul.bf16.gmra.mxu0 %v938
    %v5984 = vpop.f32.mrf.mxu0
    %v5985 = vadd.f32 %v5972, %v5984
    %v5986 = vpop.f32.mrf.mxu0
    %5987 = vdwg.mxu0
    %5988 = vmatpush.bf16.msra.mxu0 %v4008
    %5989 = vmatpush.bf16.msra.mxu0 %v4004
    %5990 = vmatpush.bf16.msra.mxu0 %v4000
    %5991 = vmatpush.bf16.msra.mxu0 %v3996
    %5992 = vmatpush.bf16.msra.mxu0 %v3992
    %5993 = vmatpush.bf16.msra.mxu0 %v3988
    %5994 = vmatpush.bf16.msra.mxu0 %v3984
    %5995 = vmatpush.bf16.msra.mxu0 %v3980
    %5996 = vmatmul.bf16.gmra.mxu0 %v939
    %v5997 = vpop.f32.mrf.mxu0
    %v5998 = vadd.f32 %v5985, %v5997
    %v5999 = vpop.f32.mrf.mxu0
    %6000 = vdwg.mxu0
    %6001 = vmatpush.bf16.msra.mxu0 %v4040
    %6002 = vmatpush.bf16.msra.mxu0 %v4036
    %6003 = vmatpush.bf16.msra.mxu0 %v4032
    %6004 = vmatpush.bf16.msra.mxu0 %v4028
    %6005 = vmatpush.bf16.msra.mxu0 %v4024
    %6006 = vmatpush.bf16.msra.mxu0 %v4020
    %6007 = vmatpush.bf16.msra.mxu0 %v4016
    %6008 = vmatpush.bf16.msra.mxu0 %v4012
    %6009 = vmatmul.bf16.gmra.mxu0 %v940
    %v6010 = vpop.f32.mrf.mxu0
    %v6011 = vadd.f32 %v5998, %v6010
    %v6012 = vpop.f32.mrf.mxu0
    %6013 = vdwg.mxu0
    %6014 = vmatpush.bf16.msra.mxu0 %v4072
    %6015 = vmatpush.bf16.msra.mxu0 %v4068
    %6016 = vmatpush.bf16.msra.mxu0 %v4064
    %6017 = vmatpush.bf16.msra.mxu0 %v4060
    %6018 = vmatpush.bf16.msra.mxu0 %v4056
    %6019 = vmatpush.bf16.msra.mxu0 %v4052
    %6020 = vmatpush.bf16.msra.mxu0 %v4048
    %6021 = vmatpush.bf16.msra.mxu0 %v4044
    %6022 = vmatmul.bf16.gmra.mxu0 %v941
    %v6023 = vpop.f32.mrf.mxu0
    %v6024 = vadd.f32 %v6011, %v6023
    %v6025 = vpop.f32.mrf.mxu0
    %6026 = vdwg.mxu0
    %6027 = vmatpush.bf16.msra.mxu0 %v4104
    %6028 = vmatpush.bf16.msra.mxu0 %v4100
    %6029 = vmatpush.bf16.msra.mxu0 %v4096
    %6030 = vmatpush.bf16.msra.mxu0 %v4092
    %6031 = vmatpush.bf16.msra.mxu0 %v4088
    %6032 = vmatpush.bf16.msra.mxu0 %v4084
    %6033 = vmatpush.bf16.msra.mxu0 %v4080
    %6034 = vmatpush.bf16.msra.mxu0 %v4076
    %6035 = vmatmul.bf16.gmra.mxu0 %v942
    %v6036 = vpop.f32.mrf.mxu0
    %v6037 = vadd.f32 %v6024, %v6036
    %v6038 = vpop.f32.mrf.mxu0
    %6039 = vdwg.mxu0
    %6040 = vmatpush.bf16.msra.mxu0 %v4136
    %6041 = vmatpush.bf16.msra.mxu0 %v4132
    %6042 = vmatpush.bf16.msra.mxu0 %v4128
    %6043 = vmatpush.bf16.msra.mxu0 %v4124
    %6044 = vmatpush.bf16.msra.mxu0 %v4120
    %6045 = vmatpush.bf16.msra.mxu0 %v4116
    %6046 = vmatpush.bf16.msra.mxu0 %v4112
    %6047 = vmatpush.bf16.msra.mxu0 %v4108
    %6048 = vmatmul.bf16.gmra.mxu0 %v943
    %v6049 = vpop.f32.mrf.mxu0
    %v6050 = vadd.f32 %v6037, %v6049
    %v6051 = vpop.f32.mrf.mxu0
    %6052 = vdwg.mxu0
    %6053 = vmatpush.bf16.msra.mxu0 %v4168
    %6054 = vmatpush.bf16.msra.mxu0 %v4164
    %6055 = vmatpush.bf16.msra.mxu0 %v4160
    %6056 = vmatpush.bf16.msra.mxu0 %v4156
    %6057 = vmatpush.bf16.msra.mxu0 %v4152
    %6058 = vmatpush.bf16.msra.mxu0 %v4148
    %6059 = vmatpush.bf16.msra.mxu0 %v4144
    %6060 = vmatpush.bf16.msra.mxu0 %v4140
    %6061 = vmatmul.bf16.gmra.mxu0 %v944
    %v6062 = vpop.f32.mrf.mxu0
    %v6063 = vadd.f32 %v6050, %v6062
    %v6064 = vpop.f32.mrf.mxu0
    %6065 = vdwg.mxu0
    %6066 = vmatpush.bf16.msra.mxu0 %v4200
    %6067 = vmatpush.bf16.msra.mxu0 %v4196
    %6068 = vmatpush.bf16.msra.mxu0 %v4192
    %6069 = vmatpush.bf16.msra.mxu0 %v4188
    %6070 = vmatpush.bf16.msra.mxu0 %v4184
    %6071 = vmatpush.bf16.msra.mxu0 %v4180
    %6072 = vmatpush.bf16.msra.mxu0 %v4176
    %6073 = vmatpush.bf16.msra.mxu0 %v4172
    %6074 = vmatmul.bf16.gmra.mxu0 %v945
    %v6075 = vpop.f32.mrf.mxu0
    %v6076 = vadd.f32 %v6063, %v6075
    %v6077 = vpop.f32.mrf.mxu0
    %6078 = vdwg.mxu0
    %6079 = vmatpush.bf16.msra.mxu0 %v4232
    %6080 = vmatpush.bf16.msra.mxu0 %v4228
    %6081 = vmatpush.bf16.msra.mxu0 %v4224
    %6082 = vmatpush.bf16.msra.mxu0 %v4220
    %6083 = vmatpush.bf16.msra.mxu0 %v4216
    %6084 = vmatpush.bf16.msra.mxu0 %v4212
    %6085 = vmatpush.bf16.msra.mxu0 %v4208
    %6086 = vmatpush.bf16.msra.mxu0 %v4204
    %6087 = vmatmul.bf16.gmra.mxu0 %v948
    %v6088 = vpop.f32.mrf.mxu0
    %v6089 = vadd.f32 %v6076, %v6088
    %v6090 = vpop.f32.mrf.mxu0
    %6091 = vdwg.mxu0
    %6092 = vmatpush.bf16.msra.mxu0 %v4264
    %6093 = vmatpush.bf16.msra.mxu0 %v4260
    %6094 = vmatpush.bf16.msra.mxu0 %v4256
    %6095 = vmatpush.bf16.msra.mxu0 %v4252
    %6096 = vmatpush.bf16.msra.mxu0 %v4248
    %6097 = vmatpush.bf16.msra.mxu0 %v4244
    %6098 = vmatpush.bf16.msra.mxu0 %v4240
    %6099 = vmatpush.bf16.msra.mxu0 %v4236
    %6100 = vmatmul.bf16.gmra.mxu0 %v949
    %v6101 = vpop.f32.mrf.mxu0
    %v6102 = vadd.f32 %v6089, %v6101
    %v6103 = vpop.f32.mrf.mxu0
    %6104 = vdwg.mxu0
    %6105 = vmatpush.bf16.msra.mxu0 %v4296
    %6106 = vmatpush.bf16.msra.mxu0 %v4292
    %6107 = vmatpush.bf16.msra.mxu0 %v4288
    %6108 = vmatpush.bf16.msra.mxu0 %v4284
    %6109 = vmatpush.bf16.msra.mxu0 %v4280
    %6110 = vmatpush.bf16.msra.mxu0 %v4276
    %6111 = vmatpush.bf16.msra.mxu0 %v4272
    %6112 = vmatpush.bf16.msra.mxu0 %v4268
    %6113 = vmatmul.bf16.gmra.mxu0 %v950
    %v6114 = vpop.f32.mrf.mxu0
    %v6115 = vadd.f32 %v6102, %v6114
    %v6116 = vpop.f32.mrf.mxu0
    %6117 = vdwg.mxu0
    %6118 = vmatpush.bf16.msra.mxu0 %v4328
    %6119 = vmatpush.bf16.msra.mxu0 %v4324
    %6120 = vmatpush.bf16.msra.mxu0 %v4320
    %6121 = vmatpush.bf16.msra.mxu0 %v4316
    %6122 = vmatpush.bf16.msra.mxu0 %v4312
    %6123 = vmatpush.bf16.msra.mxu0 %v4308
    %6124 = vmatpush.bf16.msra.mxu0 %v4304
    %6125 = vmatpush.bf16.msra.mxu0 %v4300
    %6126 = vmatmul.bf16.gmra.mxu0 %v951
    %v6127 = vpop.f32.mrf.mxu0
    %v6128 = vadd.f32 %v6115, %v6127
    %v6129 = vpop.f32.mrf.mxu0
    %6130 = vdwg.mxu0
    %6131 = vmatpush.bf16.msra.mxu0 %v4360
    %6132 = vmatpush.bf16.msra.mxu0 %v4356
    %6133 = vmatpush.bf16.msra.mxu0 %v4352
    %6134 = vmatpush.bf16.msra.mxu0 %v4348
    %6135 = vmatpush.bf16.msra.mxu0 %v4344
    %6136 = vmatpush.bf16.msra.mxu0 %v4340
    %6137 = vmatpush.bf16.msra.mxu0 %v4336
    %6138 = vmatpush.bf16.msra.mxu0 %v4332
    %6139 = vmatmul.bf16.gmra.mxu0 %v952
    %v6140 = vpop.f32.mrf.mxu0
    %v6141 = vadd.f32 %v6128, %v6140
    %v6142 = vpop.f32.mrf.mxu0
    %6143 = vdwg.mxu0
    %6144 = vmatpush.bf16.msra.mxu0 %v4392
    %6145 = vmatpush.bf16.msra.mxu0 %v4388
    %6146 = vmatpush.bf16.msra.mxu0 %v4384
    %6147 = vmatpush.bf16.msra.mxu0 %v4380
    %6148 = vmatpush.bf16.msra.mxu0 %v4376
    %6149 = vmatpush.bf16.msra.mxu0 %v4372
    %6150 = vmatpush.bf16.msra.mxu0 %v4368
    %6151 = vmatpush.bf16.msra.mxu0 %v4364
    %6152 = vmatmul.bf16.gmra.mxu0 %v953
    %v6153 = vpop.f32.mrf.mxu0
    %v6154 = vadd.f32 %v6141, %v6153
    %v6155 = vpop.f32.mrf.mxu0
    %6156 = vdwg.mxu0
    %6157 = vmatpush.bf16.msra.mxu0 %v4424
    %6158 = vmatpush.bf16.msra.mxu0 %v4420
    %6159 = vmatpush.bf16.msra.mxu0 %v4416
    %6160 = vmatpush.bf16.msra.mxu0 %v4412
    %6161 = vmatpush.bf16.msra.mxu0 %v4408
    %6162 = vmatpush.bf16.msra.mxu0 %v4404
    %6163 = vmatpush.bf16.msra.mxu0 %v4400
    %6164 = vmatpush.bf16.msra.mxu0 %v4396
    %6165 = vmatmul.bf16.gmra.mxu0 %v954
    %v6166 = vpop.f32.mrf.mxu0
    %v6167 = vadd.f32 %v6154, %v6166
    %v6168 = vpop.f32.mrf.mxu0
    %6169 = vdwg.mxu0
    %6170 = vmatpush.bf16.msra.mxu0 %v4456
    %6171 = vmatpush.bf16.msra.mxu0 %v4452
    %6172 = vmatpush.bf16.msra.mxu0 %v4448
    %6173 = vmatpush.bf16.msra.mxu0 %v4444
    %6174 = vmatpush.bf16.msra.mxu0 %v4440
    %6175 = vmatpush.bf16.msra.mxu0 %v4436
    %6176 = vmatpush.bf16.msra.mxu0 %v4432
    %6177 = vmatpush.bf16.msra.mxu0 %v4428
    %6178 = vmatmul.bf16.gmra.mxu0 %v955
    %v6179 = vpop.f32.mrf.mxu0
    %v6180 = vadd.f32 %v6167, %v6179
    %v6181 = vpop.f32.mrf.mxu0
    %6182 = vdwg.mxu0
    %6183 = vmatpush.bf16.msra.mxu0 %v4488
    %6184 = vmatpush.bf16.msra.mxu0 %v4484
    %6185 = vmatpush.bf16.msra.mxu0 %v4480
    %6186 = vmatpush.bf16.msra.mxu0 %v4476
    %6187 = vmatpush.bf16.msra.mxu0 %v4472
    %6188 = vmatpush.bf16.msra.mxu0 %v4468
    %6189 = vmatpush.bf16.msra.mxu0 %v4464
    %6190 = vmatpush.bf16.msra.mxu0 %v4460
    %6191 = vmatmul.bf16.gmra.mxu0 %v958
    %v6192 = vpop.f32.mrf.mxu0
    %v6193 = vadd.f32 %v6180, %v6192
    %v6194 = vpop.f32.mrf.mxu0
    %6195 = vdwg.mxu0
    %6196 = vmatpush.bf16.msra.mxu0 %v4520
    %6197 = vmatpush.bf16.msra.mxu0 %v4516
    %6198 = vmatpush.bf16.msra.mxu0 %v4512
    %6199 = vmatpush.bf16.msra.mxu0 %v4508
    %6200 = vmatpush.bf16.msra.mxu0 %v4504
    %6201 = vmatpush.bf16.msra.mxu0 %v4500
    %6202 = vmatpush.bf16.msra.mxu0 %v4496
    %6203 = vmatpush.bf16.msra.mxu0 %v4492
    %6204 = vmatmul.bf16.gmra.mxu0 %v959
    %v6205 = vpop.f32.mrf.mxu0
    %v6206 = vadd.f32 %v6193, %v6205
    %v6207 = vpop.f32.mrf.mxu0
    %6208 = vdwg.mxu0
    %6209 = vmatpush.bf16.msra.mxu0 %v4552
    %6210 = vmatpush.bf16.msra.mxu0 %v4548
    %6211 = vmatpush.bf16.msra.mxu0 %v4544
    %6212 = vmatpush.bf16.msra.mxu0 %v4540
    %6213 = vmatpush.bf16.msra.mxu0 %v4536
    %6214 = vmatpush.bf16.msra.mxu0 %v4532
    %6215 = vmatpush.bf16.msra.mxu0 %v4528
    %6216 = vmatpush.bf16.msra.mxu0 %v4524
    %6217 = vmatmul.bf16.gmra.mxu0 %v960
    %v6218 = vpop.f32.mrf.mxu0
    %v6219 = vadd.f32 %v6206, %v6218
    %v6220 = vpop.f32.mrf.mxu0
    %6221 = vdwg.mxu0
    %6222 = vmatpush.bf16.msra.mxu0 %v4584
    %6223 = vmatpush.bf16.msra.mxu0 %v4580
    %6224 = vmatpush.bf16.msra.mxu0 %v4576
    %6225 = vmatpush.bf16.msra.mxu0 %v4572
    %6226 = vmatpush.bf16.msra.mxu0 %v4568
    %6227 = vmatpush.bf16.msra.mxu0 %v4564
    %6228 = vmatpush.bf16.msra.mxu0 %v4560
    %6229 = vmatpush.bf16.msra.mxu0 %v4556
    %6230 = vmatmul.bf16.gmra.mxu0 %v961
    %v6231 = vpop.f32.mrf.mxu0
    %v6232 = vadd.f32 %v6219, %v6231
    %v6233 = vpop.f32.mrf.mxu0
    %6234 = vdwg.mxu0
    %6235 = vmatpush.bf16.msra.mxu0 0
    %6236 = vmatpush.bf16.msra.mxu0 0
    %6237 = vmatpush.bf16.msra.mxu0 0
    %6238 = vmatpush.bf16.msra.mxu0 0
    %6239 = vmatpush.bf16.msra.mxu0 0
    %6240 = vmatpush.bf16.msra.mxu0 0
    %6241 = vmatpush.bf16.msra.mxu0 0
    %6242 = vmatpush.bf16.msra.mxu0 %v4588
    %6243 = vmatmul.bf16.gmra.mxu0 %v5492
    %v6244 = vpop.f32.mrf.mxu0
    %v6245 = vadd.f32 %v6232, %v6244
    %v6246 = vpop.f32.mrf.mxu0
    %6247 = vdwg.mxu0
    %6248 = vmatpush.bf16.msra.mxu0 %v3721
    %6249 = vmatpush.bf16.msra.mxu0 %v3717
    %6250 = vmatpush.bf16.msra.mxu0 %v3713
    %6251 = vmatpush.bf16.msra.mxu0 %v3709
    %6252 = vmatpush.bf16.msra.mxu0 %v3705
    %6253 = vmatpush.bf16.msra.mxu0 %v3701
    %6254 = vmatpush.bf16.msra.mxu0 %v3697
    %6255 = vmatpush.bf16.msra.mxu0 %v3693
    %6256 = vmatmul.bf16.gmra.mxu0 %v928
    %v6257 = vpop.f32.mrf.mxu0
    %v6258 = vadd.f32 0.0, %v6257
    %v6259 = vpop.f32.mrf.mxu0
    %6260 = vdwg.mxu0
    %6261 = vmatpush.bf16.msra.mxu0 %v3753
    %6262 = vmatpush.bf16.msra.mxu0 %v3749
    %6263 = vmatpush.bf16.msra.mxu0 %v3745
    %6264 = vmatpush.bf16.msra.mxu0 %v3741
    %6265 = vmatpush.bf16.msra.mxu0 %v3737
    %6266 = vmatpush.bf16.msra.mxu0 %v3733
    %6267 = vmatpush.bf16.msra.mxu0 %v3729
    %6268 = vmatpush.bf16.msra.mxu0 %v3725
    %6269 = vmatmul.bf16.gmra.mxu0 %v929
    %v6270 = vpop.f32.mrf.mxu0
    %v6271 = vadd.f32 %v6258, %v6270
    %v6272 = vpop.f32.mrf.mxu0
    %6273 = vdwg.mxu0
    %6274 = vmatpush.bf16.msra.mxu0 %v3785
    %6275 = vmatpush.bf16.msra.mxu0 %v3781
    %6276 = vmatpush.bf16.msra.mxu0 %v3777
    %6277 = vmatpush.bf16.msra.mxu0 %v3773
    %6278 = vmatpush.bf16.msra.mxu0 %v3769
    %6279 = vmatpush.bf16.msra.mxu0 %v3765
    %6280 = vmatpush.bf16.msra.mxu0 %v3761
    %6281 = vmatpush.bf16.msra.mxu0 %v3757
    %6282 = vmatmul.bf16.gmra.mxu0 %v930
    %v6283 = vpop.f32.mrf.mxu0
    %v6284 = vadd.f32 %v6271, %v6283
    %v6285 = vpop.f32.mrf.mxu0
    %6286 = vdwg.mxu0
    %6287 = vmatpush.bf16.msra.mxu0 %v3817
    %6288 = vmatpush.bf16.msra.mxu0 %v3813
    %6289 = vmatpush.bf16.msra.mxu0 %v3809
    %6290 = vmatpush.bf16.msra.mxu0 %v3805
    %6291 = vmatpush.bf16.msra.mxu0 %v3801
    %6292 = vmatpush.bf16.msra.mxu0 %v3797
    %6293 = vmatpush.bf16.msra.mxu0 %v3793
    %6294 = vmatpush.bf16.msra.mxu0 %v3789
    %6295 = vmatmul.bf16.gmra.mxu0 %v931
    %v6296 = vpop.f32.mrf.mxu0
    %v6297 = vadd.f32 %v6284, %v6296
    %v6298 = vpop.f32.mrf.mxu0
    %6299 = vdwg.mxu0
    %6300 = vmatpush.bf16.msra.mxu0 %v3849
    %6301 = vmatpush.bf16.msra.mxu0 %v3845
    %6302 = vmatpush.bf16.msra.mxu0 %v3841
    %6303 = vmatpush.bf16.msra.mxu0 %v3837
    %6304 = vmatpush.bf16.msra.mxu0 %v3833
    %6305 = vmatpush.bf16.msra.mxu0 %v3829
    %6306 = vmatpush.bf16.msra.mxu0 %v3825
    %6307 = vmatpush.bf16.msra.mxu0 %v3821
    %6308 = vmatmul.bf16.gmra.mxu0 %v932
    %v6309 = vpop.f32.mrf.mxu0
    %v6310 = vadd.f32 %v6297, %v6309
    %v6311 = vpop.f32.mrf.mxu0
    %6312 = vdwg.mxu0
    %6313 = vmatpush.bf16.msra.mxu0 %v3881
    %6314 = vmatpush.bf16.msra.mxu0 %v3877
    %6315 = vmatpush.bf16.msra.mxu0 %v3873
    %6316 = vmatpush.bf16.msra.mxu0 %v3869
    %6317 = vmatpush.bf16.msra.mxu0 %v3865
    %6318 = vmatpush.bf16.msra.mxu0 %v3861
    %6319 = vmatpush.bf16.msra.mxu0 %v3857
    %6320 = vmatpush.bf16.msra.mxu0 %v3853
    %6321 = vmatmul.bf16.gmra.mxu0 %v933
    %v6322 = vpop.f32.mrf.mxu0
    %v6323 = vadd.f32 %v6310, %v6322
    %v6324 = vpop.f32.mrf.mxu0
    %6325 = vdwg.mxu0
    %6326 = vmatpush.bf16.msra.mxu0 %v3913
    %6327 = vmatpush.bf16.msra.mxu0 %v3909
    %6328 = vmatpush.bf16.msra.mxu0 %v3905
    %6329 = vmatpush.bf16.msra.mxu0 %v3901
    %6330 = vmatpush.bf16.msra.mxu0 %v3897
    %6331 = vmatpush.bf16.msra.mxu0 %v3893
    %6332 = vmatpush.bf16.msra.mxu0 %v3889
    %6333 = vmatpush.bf16.msra.mxu0 %v3885
    %6334 = vmatmul.bf16.gmra.mxu0 %v934
    %v6335 = vpop.f32.mrf.mxu0
    %v6336 = vadd.f32 %v6323, %v6335
    %v6337 = vpop.f32.mrf.mxu0
    %6338 = vdwg.mxu0
    %6339 = vmatpush.bf16.msra.mxu0 %v3945
    %6340 = vmatpush.bf16.msra.mxu0 %v3941
    %6341 = vmatpush.bf16.msra.mxu0 %v3937
    %6342 = vmatpush.bf16.msra.mxu0 %v3933
    %6343 = vmatpush.bf16.msra.mxu0 %v3929
    %6344 = vmatpush.bf16.msra.mxu0 %v3925
    %6345 = vmatpush.bf16.msra.mxu0 %v3921
    %6346 = vmatpush.bf16.msra.mxu0 %v3917
    %6347 = vmatmul.bf16.gmra.mxu0 %v935
    %v6348 = vpop.f32.mrf.mxu0
    %v6349 = vadd.f32 %v6336, %v6348
    %v6350 = vpop.f32.mrf.mxu0
    %6351 = vdwg.mxu0
    %6352 = vmatpush.bf16.msra.mxu0 %v3977
    %6353 = vmatpush.bf16.msra.mxu0 %v3973
    %6354 = vmatpush.bf16.msra.mxu0 %v3969
    %6355 = vmatpush.bf16.msra.mxu0 %v3965
    %6356 = vmatpush.bf16.msra.mxu0 %v3961
    %6357 = vmatpush.bf16.msra.mxu0 %v3957
    %6358 = vmatpush.bf16.msra.mxu0 %v3953
    %6359 = vmatpush.bf16.msra.mxu0 %v3949
    %6360 = vmatmul.bf16.gmra.mxu0 %v938
    %v6361 = vpop.f32.mrf.mxu0
    %v6362 = vadd.f32 %v6349, %v6361
    %v6363 = vpop.f32.mrf.mxu0
    %6364 = vdwg.mxu0
    %6365 = vmatpush.bf16.msra.mxu0 %v4009
    %6366 = vmatpush.bf16.msra.mxu0 %v4005
    %6367 = vmatpush.bf16.msra.mxu0 %v4001
    %6368 = vmatpush.bf16.msra.mxu0 %v3997
    %6369 = vmatpush.bf16.msra.mxu0 %v3993
    %6370 = vmatpush.bf16.msra.mxu0 %v3989
    %6371 = vmatpush.bf16.msra.mxu0 %v3985
    %6372 = vmatpush.bf16.msra.mxu0 %v3981
    %6373 = vmatmul.bf16.gmra.mxu0 %v939
    %v6374 = vpop.f32.mrf.mxu0
    %v6375 = vadd.f32 %v6362, %v6374
    %v6376 = vpop.f32.mrf.mxu0
    %6377 = vdwg.mxu0
    %6378 = vmatpush.bf16.msra.mxu0 %v4041
    %6379 = vmatpush.bf16.msra.mxu0 %v4037
    %6380 = vmatpush.bf16.msra.mxu0 %v4033
    %6381 = vmatpush.bf16.msra.mxu0 %v4029
    %6382 = vmatpush.bf16.msra.mxu0 %v4025
    %6383 = vmatpush.bf16.msra.mxu0 %v4021
    %6384 = vmatpush.bf16.msra.mxu0 %v4017
    %6385 = vmatpush.bf16.msra.mxu0 %v4013
    %6386 = vmatmul.bf16.gmra.mxu0 %v940
    %v6387 = vpop.f32.mrf.mxu0
    %v6388 = vadd.f32 %v6375, %v6387
    %v6389 = vpop.f32.mrf.mxu0
    %6390 = vdwg.mxu0
    %6391 = vmatpush.bf16.msra.mxu0 %v4073
    %6392 = vmatpush.bf16.msra.mxu0 %v4069
    %6393 = vmatpush.bf16.msra.mxu0 %v4065
    %6394 = vmatpush.bf16.msra.mxu0 %v4061
    %6395 = vmatpush.bf16.msra.mxu0 %v4057
    %6396 = vmatpush.bf16.msra.mxu0 %v4053
    %6397 = vmatpush.bf16.msra.mxu0 %v4049
    %6398 = vmatpush.bf16.msra.mxu0 %v4045
    %6399 = vmatmul.bf16.gmra.mxu0 %v941
    %v6400 = vpop.f32.mrf.mxu0
    %v6401 = vadd.f32 %v6388, %v6400
    %v6402 = vpop.f32.mrf.mxu0
    %6403 = vdwg.mxu0
    %6404 = vmatpush.bf16.msra.mxu0 %v4105
    %6405 = vmatpush.bf16.msra.mxu0 %v4101
    %6406 = vmatpush.bf16.msra.mxu0 %v4097
    %6407 = vmatpush.bf16.msra.mxu0 %v4093
    %6408 = vmatpush.bf16.msra.mxu0 %v4089
    %6409 = vmatpush.bf16.msra.mxu0 %v4085
    %6410 = vmatpush.bf16.msra.mxu0 %v4081
    %6411 = vmatpush.bf16.msra.mxu0 %v4077
    %6412 = vmatmul.bf16.gmra.mxu0 %v942
    %v6413 = vpop.f32.mrf.mxu0
    %v6414 = vadd.f32 %v6401, %v6413
    %v6415 = vpop.f32.mrf.mxu0
    %6416 = vdwg.mxu0
    %6417 = vmatpush.bf16.msra.mxu0 %v4137
    %6418 = vmatpush.bf16.msra.mxu0 %v4133
    %6419 = vmatpush.bf16.msra.mxu0 %v4129
    %6420 = vmatpush.bf16.msra.mxu0 %v4125
    %6421 = vmatpush.bf16.msra.mxu0 %v4121
    %6422 = vmatpush.bf16.msra.mxu0 %v4117
    %6423 = vmatpush.bf16.msra.mxu0 %v4113
    %6424 = vmatpush.bf16.msra.mxu0 %v4109
    %6425 = vmatmul.bf16.gmra.mxu0 %v943
    %v6426 = vpop.f32.mrf.mxu0
    %v6427 = vadd.f32 %v6414, %v6426
    %v6428 = vpop.f32.mrf.mxu0
    %6429 = vdwg.mxu0
    %6430 = vmatpush.bf16.msra.mxu0 %v4169
    %6431 = vmatpush.bf16.msra.mxu0 %v4165
    %6432 = vmatpush.bf16.msra.mxu0 %v4161
    %6433 = vmatpush.bf16.msra.mxu0 %v4157
    %6434 = vmatpush.bf16.msra.mxu0 %v4153
    %6435 = vmatpush.bf16.msra.mxu0 %v4149
    %6436 = vmatpush.bf16.msra.mxu0 %v4145
    %6437 = vmatpush.bf16.msra.mxu0 %v4141
    %6438 = vmatmul.bf16.gmra.mxu0 %v944
    %v6439 = vpop.f32.mrf.mxu0
    %v6440 = vadd.f32 %v6427, %v6439
    %v6441 = vpop.f32.mrf.mxu0
    %6442 = vdwg.mxu0
    %6443 = vmatpush.bf16.msra.mxu0 %v4201
    %6444 = vmatpush.bf16.msra.mxu0 %v4197
    %6445 = vmatpush.bf16.msra.mxu0 %v4193
    %6446 = vmatpush.bf16.msra.mxu0 %v4189
    %6447 = vmatpush.bf16.msra.mxu0 %v4185
    %6448 = vmatpush.bf16.msra.mxu0 %v4181
    %6449 = vmatpush.bf16.msra.mxu0 %v4177
    %6450 = vmatpush.bf16.msra.mxu0 %v4173
    %6451 = vmatmul.bf16.gmra.mxu0 %v945
    %v6452 = vpop.f32.mrf.mxu0
    %v6453 = vadd.f32 %v6440, %v6452
    %v6454 = vpop.f32.mrf.mxu0
    %6455 = vdwg.mxu0
    %6456 = vmatpush.bf16.msra.mxu0 %v4233
    %6457 = vmatpush.bf16.msra.mxu0 %v4229
    %6458 = vmatpush.bf16.msra.mxu0 %v4225
    %6459 = vmatpush.bf16.msra.mxu0 %v4221
    %6460 = vmatpush.bf16.msra.mxu0 %v4217
    %6461 = vmatpush.bf16.msra.mxu0 %v4213
    %6462 = vmatpush.bf16.msra.mxu0 %v4209
    %6463 = vmatpush.bf16.msra.mxu0 %v4205
    %6464 = vmatmul.bf16.gmra.mxu0 %v948
    %v6465 = vpop.f32.mrf.mxu0
    %v6466 = vadd.f32 %v6453, %v6465
    %v6467 = vpop.f32.mrf.mxu0
    %6468 = vdwg.mxu0
    %6469 = vmatpush.bf16.msra.mxu0 %v4265
    %6470 = vmatpush.bf16.msra.mxu0 %v4261
    %6471 = vmatpush.bf16.msra.mxu0 %v4257
    %6472 = vmatpush.bf16.msra.mxu0 %v4253
    %6473 = vmatpush.bf16.msra.mxu0 %v4249
    %6474 = vmatpush.bf16.msra.mxu0 %v4245
    %6475 = vmatpush.bf16.msra.mxu0 %v4241
    %6476 = vmatpush.bf16.msra.mxu0 %v4237
    %6477 = vmatmul.bf16.gmra.mxu0 %v949
    %v6478 = vpop.f32.mrf.mxu0
    %v6479 = vadd.f32 %v6466, %v6478
    %v6480 = vpop.f32.mrf.mxu0
    %6481 = vdwg.mxu0
    %6482 = vmatpush.bf16.msra.mxu0 %v4297
    %6483 = vmatpush.bf16.msra.mxu0 %v4293
    %6484 = vmatpush.bf16.msra.mxu0 %v4289
    %6485 = vmatpush.bf16.msra.mxu0 %v4285
    %6486 = vmatpush.bf16.msra.mxu0 %v4281
    %6487 = vmatpush.bf16.msra.mxu0 %v4277
    %6488 = vmatpush.bf16.msra.mxu0 %v4273
    %6489 = vmatpush.bf16.msra.mxu0 %v4269
    %6490 = vmatmul.bf16.gmra.mxu0 %v950
    %v6491 = vpop.f32.mrf.mxu0
    %v6492 = vadd.f32 %v6479, %v6491
    %v6493 = vpop.f32.mrf.mxu0
    %6494 = vdwg.mxu0
    %6495 = vmatpush.bf16.msra.mxu0 %v4329
    %6496 = vmatpush.bf16.msra.mxu0 %v4325
    %6497 = vmatpush.bf16.msra.mxu0 %v4321
    %6498 = vmatpush.bf16.msra.mxu0 %v4317
    %6499 = vmatpush.bf16.msra.mxu0 %v4313
    %6500 = vmatpush.bf16.msra.mxu0 %v4309
    %6501 = vmatpush.bf16.msra.mxu0 %v4305
    %6502 = vmatpush.bf16.msra.mxu0 %v4301
    %6503 = vmatmul.bf16.gmra.mxu0 %v951
    %v6504 = vpop.f32.mrf.mxu0
    %v6505 = vadd.f32 %v6492, %v6504
    %v6506 = vpop.f32.mrf.mxu0
    %6507 = vdwg.mxu0
    %6508 = vmatpush.bf16.msra.mxu0 %v4361
    %6509 = vmatpush.bf16.msra.mxu0 %v4357
    %6510 = vmatpush.bf16.msra.mxu0 %v4353
    %6511 = vmatpush.bf16.msra.mxu0 %v4349
    %6512 = vmatpush.bf16.msra.mxu0 %v4345
    %6513 = vmatpush.bf16.msra.mxu0 %v4341
    %6514 = vmatpush.bf16.msra.mxu0 %v4337
    %6515 = vmatpush.bf16.msra.mxu0 %v4333
    %6516 = vmatmul.bf16.gmra.mxu0 %v952
    %v6517 = vpop.f32.mrf.mxu0
    %v6518 = vadd.f32 %v6505, %v6517
    %v6519 = vpop.f32.mrf.mxu0
    %6520 = vdwg.mxu0
    %6521 = vmatpush.bf16.msra.mxu0 %v4393
    %6522 = vmatpush.bf16.msra.mxu0 %v4389
    %6523 = vmatpush.bf16.msra.mxu0 %v4385
    %6524 = vmatpush.bf16.msra.mxu0 %v4381
    %6525 = vmatpush.bf16.msra.mxu0 %v4377
    %6526 = vmatpush.bf16.msra.mxu0 %v4373
    %6527 = vmatpush.bf16.msra.mxu0 %v4369
    %6528 = vmatpush.bf16.msra.mxu0 %v4365
    %6529 = vmatmul.bf16.gmra.mxu0 %v953
    %v6530 = vpop.f32.mrf.mxu0
    %v6531 = vadd.f32 %v6518, %v6530
    %v6532 = vpop.f32.mrf.mxu0
    %6533 = vdwg.mxu0
    %6534 = vmatpush.bf16.msra.mxu0 %v4425
    %6535 = vmatpush.bf16.msra.mxu0 %v4421
    %6536 = vmatpush.bf16.msra.mxu0 %v4417
    %6537 = vmatpush.bf16.msra.mxu0 %v4413
    %6538 = vmatpush.bf16.msra.mxu0 %v4409
    %6539 = vmatpush.bf16.msra.mxu0 %v4405
    %6540 = vmatpush.bf16.msra.mxu0 %v4401
    %6541 = vmatpush.bf16.msra.mxu0 %v4397
    %6542 = vmatmul.bf16.gmra.mxu0 %v954
    %v6543 = vpop.f32.mrf.mxu0
    %v6544 = vadd.f32 %v6531, %v6543
    %v6545 = vpop.f32.mrf.mxu0
    %6546 = vdwg.mxu0
    %6547 = vmatpush.bf16.msra.mxu0 %v4457
    %6548 = vmatpush.bf16.msra.mxu0 %v4453
    %6549 = vmatpush.bf16.msra.mxu0 %v4449
    %6550 = vmatpush.bf16.msra.mxu0 %v4445
    %6551 = vmatpush.bf16.msra.mxu0 %v4441
    %6552 = vmatpush.bf16.msra.mxu0 %v4437
    %6553 = vmatpush.bf16.msra.mxu0 %v4433
    %6554 = vmatpush.bf16.msra.mxu0 %v4429
    %6555 = vmatmul.bf16.gmra.mxu0 %v955
    %v6556 = vpop.f32.mrf.mxu0
    %v6557 = vadd.f32 %v6544, %v6556
    %v6558 = vpop.f32.mrf.mxu0
    %6559 = vdwg.mxu0
    %6560 = vmatpush.bf16.msra.mxu0 %v4489
    %6561 = vmatpush.bf16.msra.mxu0 %v4485
    %6562 = vmatpush.bf16.msra.mxu0 %v4481
    %6563 = vmatpush.bf16.msra.mxu0 %v4477
    %6564 = vmatpush.bf16.msra.mxu0 %v4473
    %6565 = vmatpush.bf16.msra.mxu0 %v4469
    %6566 = vmatpush.bf16.msra.mxu0 %v4465
    %6567 = vmatpush.bf16.msra.mxu0 %v4461
    %6568 = vmatmul.bf16.gmra.mxu0 %v958
    %v6569 = vpop.f32.mrf.mxu0
    %v6570 = vadd.f32 %v6557, %v6569
    %v6571 = vpop.f32.mrf.mxu0
    %6572 = vdwg.mxu0
    %6573 = vmatpush.bf16.msra.mxu0 %v4521
    %6574 = vmatpush.bf16.msra.mxu0 %v4517
    %6575 = vmatpush.bf16.msra.mxu0 %v4513
    %6576 = vmatpush.bf16.msra.mxu0 %v4509
    %6577 = vmatpush.bf16.msra.mxu0 %v4505
    %6578 = vmatpush.bf16.msra.mxu0 %v4501
    %6579 = vmatpush.bf16.msra.mxu0 %v4497
    %6580 = vmatpush.bf16.msra.mxu0 %v4493
    %6581 = vmatmul.bf16.gmra.mxu0 %v959
    %v6582 = vpop.f32.mrf.mxu0
    %v6583 = vadd.f32 %v6570, %v6582
    %v6584 = vpop.f32.mrf.mxu0
    %6585 = vdwg.mxu0
    %6586 = vmatpush.bf16.msra.mxu0 %v4553
    %6587 = vmatpush.bf16.msra.mxu0 %v4549
    %6588 = vmatpush.bf16.msra.mxu0 %v4545
    %6589 = vmatpush.bf16.msra.mxu0 %v4541
    %6590 = vmatpush.bf16.msra.mxu0 %v4537
    %6591 = vmatpush.bf16.msra.mxu0 %v4533
    %6592 = vmatpush.bf16.msra.mxu0 %v4529
    %6593 = vmatpush.bf16.msra.mxu0 %v4525
    %6594 = vmatmul.bf16.gmra.mxu0 %v960
    %v6595 = vpop.f32.mrf.mxu0
    %v6596 = vadd.f32 %v6583, %v6595
    %v6597 = vpop.f32.mrf.mxu0
    %6598 = vdwg.mxu0
    %6599 = vmatpush.bf16.msra.mxu0 %v4585
    %6600 = vmatpush.bf16.msra.mxu0 %v4581
    %6601 = vmatpush.bf16.msra.mxu0 %v4577
    %6602 = vmatpush.bf16.msra.mxu0 %v4573
    %6603 = vmatpush.bf16.msra.mxu0 %v4569
    %6604 = vmatpush.bf16.msra.mxu0 %v4565
    %6605 = vmatpush.bf16.msra.mxu0 %v4561
    %6606 = vmatpush.bf16.msra.mxu0 %v4557
    %6607 = vmatmul.bf16.gmra.mxu0 %v961
    %v6608 = vpop.f32.mrf.mxu0
    %v6609 = vadd.f32 %v6596, %v6608
    %v6610 = vpop.f32.mrf.mxu0
    %6611 = vdwg.mxu0
    %6612 = vmatpush.bf16.msra.mxu0 0
    %6613 = vmatpush.bf16.msra.mxu0 0
    %6614 = vmatpush.bf16.msra.mxu0 0
    %6615 = vmatpush.bf16.msra.mxu0 0
    %6616 = vmatpush.bf16.msra.mxu0 0
    %6617 = vmatpush.bf16.msra.mxu0 0
    %6618 = vmatpush.bf16.msra.mxu0 0
    %6619 = vmatpush.bf16.msra.mxu0 %v4589
    %6620 = vmatmul.bf16.gmra.mxu0 %v5492
    %v6621 = vpop.f32.mrf.mxu0
    %v6622 = vadd.f32 %v6609, %v6621
    %v6623 = vpop.f32.mrf.mxu0
    %6624 = vdwg.mxu0
    %6625 = vmatpush.bf16.msra.mxu0 %v3722
    %6626 = vmatpush.bf16.msra.mxu0 %v3718
    %6627 = vmatpush.bf16.msra.mxu0 %v3714
    %6628 = vmatpush.bf16.msra.mxu0 %v3710
    %6629 = vmatpush.bf16.msra.mxu0 %v3706
    %6630 = vmatpush.bf16.msra.mxu0 %v3702
    %6631 = vmatpush.bf16.msra.mxu0 %v3698
    %6632 = vmatpush.bf16.msra.mxu0 %v3694
    %6633 = vmatmul.bf16.gmra.mxu0 %v928
    %v6634 = vpop.f32.mrf.mxu0
    %v6635 = vadd.f32 0.0, %v6634
    %v6636 = vpop.f32.mrf.mxu0
    %6637 = vdwg.mxu0
    %6638 = vmatpush.bf16.msra.mxu0 %v3754
    %6639 = vmatpush.bf16.msra.mxu0 %v3750
    %6640 = vmatpush.bf16.msra.mxu0 %v3746
    %6641 = vmatpush.bf16.msra.mxu0 %v3742
    %6642 = vmatpush.bf16.msra.mxu0 %v3738
    %6643 = vmatpush.bf16.msra.mxu0 %v3734
    %6644 = vmatpush.bf16.msra.mxu0 %v3730
    %6645 = vmatpush.bf16.msra.mxu0 %v3726
    %6646 = vmatmul.bf16.gmra.mxu0 %v929
    %v6647 = vpop.f32.mrf.mxu0
    %v6648 = vadd.f32 %v6635, %v6647
    %v6649 = vpop.f32.mrf.mxu0
    %6650 = vdwg.mxu0
    %6651 = vmatpush.bf16.msra.mxu0 %v3786
    %6652 = vmatpush.bf16.msra.mxu0 %v3782
    %6653 = vmatpush.bf16.msra.mxu0 %v3778
    %6654 = vmatpush.bf16.msra.mxu0 %v3774
    %6655 = vmatpush.bf16.msra.mxu0 %v3770
    %6656 = vmatpush.bf16.msra.mxu0 %v3766
    %6657 = vmatpush.bf16.msra.mxu0 %v3762
    %6658 = vmatpush.bf16.msra.mxu0 %v3758
    %6659 = vmatmul.bf16.gmra.mxu0 %v930
    %v6660 = vpop.f32.mrf.mxu0
    %v6661 = vadd.f32 %v6648, %v6660
    %v6662 = vpop.f32.mrf.mxu0
    %6663 = vdwg.mxu0
    %6664 = vmatpush.bf16.msra.mxu0 %v3818
    %6665 = vmatpush.bf16.msra.mxu0 %v3814
    %6666 = vmatpush.bf16.msra.mxu0 %v3810
    %6667 = vmatpush.bf16.msra.mxu0 %v3806
    %6668 = vmatpush.bf16.msra.mxu0 %v3802
    %6669 = vmatpush.bf16.msra.mxu0 %v3798
    %6670 = vmatpush.bf16.msra.mxu0 %v3794
    %6671 = vmatpush.bf16.msra.mxu0 %v3790
    %6672 = vmatmul.bf16.gmra.mxu0 %v931
    %v6673 = vpop.f32.mrf.mxu0
    %v6674 = vadd.f32 %v6661, %v6673
    %v6675 = vpop.f32.mrf.mxu0
    %6676 = vdwg.mxu0
    %6677 = vmatpush.bf16.msra.mxu0 %v3850
    %6678 = vmatpush.bf16.msra.mxu0 %v3846
    %6679 = vmatpush.bf16.msra.mxu0 %v3842
    %6680 = vmatpush.bf16.msra.mxu0 %v3838
    %6681 = vmatpush.bf16.msra.mxu0 %v3834
    %6682 = vmatpush.bf16.msra.mxu0 %v3830
    %6683 = vmatpush.bf16.msra.mxu0 %v3826
    %6684 = vmatpush.bf16.msra.mxu0 %v3822
    %6685 = vmatmul.bf16.gmra.mxu0 %v932
    %v6686 = vpop.f32.mrf.mxu0
    %v6687 = vadd.f32 %v6674, %v6686
    %v6688 = vpop.f32.mrf.mxu0
    %6689 = vdwg.mxu0
    %6690 = vmatpush.bf16.msra.mxu0 %v3882
    %6691 = vmatpush.bf16.msra.mxu0 %v3878
    %6692 = vmatpush.bf16.msra.mxu0 %v3874
    %6693 = vmatpush.bf16.msra.mxu0 %v3870
    %6694 = vmatpush.bf16.msra.mxu0 %v3866
    %6695 = vmatpush.bf16.msra.mxu0 %v3862
    %6696 = vmatpush.bf16.msra.mxu0 %v3858
    %6697 = vmatpush.bf16.msra.mxu0 %v3854
    %6698 = vmatmul.bf16.gmra.mxu0 %v933
    %v6699 = vpop.f32.mrf.mxu0
    %v6700 = vadd.f32 %v6687, %v6699
    %v6701 = vpop.f32.mrf.mxu0
    %6702 = vdwg.mxu0
    %6703 = vmatpush.bf16.msra.mxu0 %v3914
    %6704 = vmatpush.bf16.msra.mxu0 %v3910
    %6705 = vmatpush.bf16.msra.mxu0 %v3906
    %6706 = vmatpush.bf16.msra.mxu0 %v3902
    %6707 = vmatpush.bf16.msra.mxu0 %v3898
    %6708 = vmatpush.bf16.msra.mxu0 %v3894
    %6709 = vmatpush.bf16.msra.mxu0 %v3890
    %6710 = vmatpush.bf16.msra.mxu0 %v3886
    %6711 = vmatmul.bf16.gmra.mxu0 %v934
    %v6712 = vpop.f32.mrf.mxu0
    %v6713 = vadd.f32 %v6700, %v6712
    %v6714 = vpop.f32.mrf.mxu0
    %6715 = vdwg.mxu0
    %6716 = vmatpush.bf16.msra.mxu0 %v3946
    %6717 = vmatpush.bf16.msra.mxu0 %v3942
    %6718 = vmatpush.bf16.msra.mxu0 %v3938
    %6719 = vmatpush.bf16.msra.mxu0 %v3934
    %6720 = vmatpush.bf16.msra.mxu0 %v3930
    %6721 = vmatpush.bf16.msra.mxu0 %v3926
    %6722 = vmatpush.bf16.msra.mxu0 %v3922
    %6723 = vmatpush.bf16.msra.mxu0 %v3918
    %6724 = vmatmul.bf16.gmra.mxu0 %v935
    %v6725 = vpop.f32.mrf.mxu0
    %v6726 = vadd.f32 %v6713, %v6725
    %v6727 = vpop.f32.mrf.mxu0
    %6728 = vdwg.mxu0
    %6729 = vmatpush.bf16.msra.mxu0 %v3978
    %6730 = vmatpush.bf16.msra.mxu0 %v3974
    %6731 = vmatpush.bf16.msra.mxu0 %v3970
    %6732 = vmatpush.bf16.msra.mxu0 %v3966
    %6733 = vmatpush.bf16.msra.mxu0 %v3962
    %6734 = vmatpush.bf16.msra.mxu0 %v3958
    %6735 = vmatpush.bf16.msra.mxu0 %v3954
    %6736 = vmatpush.bf16.msra.mxu0 %v3950
    %6737 = vmatmul.bf16.gmra.mxu0 %v938
    %v6738 = vpop.f32.mrf.mxu0
    %v6739 = vadd.f32 %v6726, %v6738
    %v6740 = vpop.f32.mrf.mxu0
    %6741 = vdwg.mxu0
    %6742 = vmatpush.bf16.msra.mxu0 %v4010
    %6743 = vmatpush.bf16.msra.mxu0 %v4006
    %6744 = vmatpush.bf16.msra.mxu0 %v4002
    %6745 = vmatpush.bf16.msra.mxu0 %v3998
    %6746 = vmatpush.bf16.msra.mxu0 %v3994
    %6747 = vmatpush.bf16.msra.mxu0 %v3990
    %6748 = vmatpush.bf16.msra.mxu0 %v3986
    %6749 = vmatpush.bf16.msra.mxu0 %v3982
    %6750 = vmatmul.bf16.gmra.mxu0 %v939
    %v6751 = vpop.f32.mrf.mxu0
    %v6752 = vadd.f32 %v6739, %v6751
    %v6753 = vpop.f32.mrf.mxu0
    %6754 = vdwg.mxu0
    %6755 = vmatpush.bf16.msra.mxu0 %v4042
    %6756 = vmatpush.bf16.msra.mxu0 %v4038
    %6757 = vmatpush.bf16.msra.mxu0 %v4034
    %6758 = vmatpush.bf16.msra.mxu0 %v4030
    %6759 = vmatpush.bf16.msra.mxu0 %v4026
    %6760 = vmatpush.bf16.msra.mxu0 %v4022
    %6761 = vmatpush.bf16.msra.mxu0 %v4018
    %6762 = vmatpush.bf16.msra.mxu0 %v4014
    %6763 = vmatmul.bf16.gmra.mxu0 %v940
    %v6764 = vpop.f32.mrf.mxu0
    %v6765 = vadd.f32 %v6752, %v6764
    %v6766 = vpop.f32.mrf.mxu0
    %6767 = vdwg.mxu0
    %6768 = vmatpush.bf16.msra.mxu0 %v4074
    %6769 = vmatpush.bf16.msra.mxu0 %v4070
    %6770 = vmatpush.bf16.msra.mxu0 %v4066
    %6771 = vmatpush.bf16.msra.mxu0 %v4062
    %6772 = vmatpush.bf16.msra.mxu0 %v4058
    %6773 = vmatpush.bf16.msra.mxu0 %v4054
    %6774 = vmatpush.bf16.msra.mxu0 %v4050
    %6775 = vmatpush.bf16.msra.mxu0 %v4046
    %6776 = vmatmul.bf16.gmra.mxu0 %v941
    %v6777 = vpop.f32.mrf.mxu0
    %v6778 = vadd.f32 %v6765, %v6777
    %v6779 = vpop.f32.mrf.mxu0
    %6780 = vdwg.mxu0
    %6781 = vmatpush.bf16.msra.mxu0 %v4106
    %6782 = vmatpush.bf16.msra.mxu0 %v4102
    %6783 = vmatpush.bf16.msra.mxu0 %v4098
    %6784 = vmatpush.bf16.msra.mxu0 %v4094
    %6785 = vmatpush.bf16.msra.mxu0 %v4090
    %6786 = vmatpush.bf16.msra.mxu0 %v4086
    %6787 = vmatpush.bf16.msra.mxu0 %v4082
    %6788 = vmatpush.bf16.msra.mxu0 %v4078
    %6789 = vmatmul.bf16.gmra.mxu0 %v942
    %v6790 = vpop.f32.mrf.mxu0
    %v6791 = vadd.f32 %v6778, %v6790
    %v6792 = vpop.f32.mrf.mxu0
    %6793 = vdwg.mxu0
    %6794 = vmatpush.bf16.msra.mxu0 %v4138
    %6795 = vmatpush.bf16.msra.mxu0 %v4134
    %6796 = vmatpush.bf16.msra.mxu0 %v4130
    %6797 = vmatpush.bf16.msra.mxu0 %v4126
    %6798 = vmatpush.bf16.msra.mxu0 %v4122
    %6799 = vmatpush.bf16.msra.mxu0 %v4118
    %6800 = vmatpush.bf16.msra.mxu0 %v4114
    %6801 = vmatpush.bf16.msra.mxu0 %v4110
    %6802 = vmatmul.bf16.gmra.mxu0 %v943
    %v6803 = vpop.f32.mrf.mxu0
    %v6804 = vadd.f32 %v6791, %v6803
    %v6805 = vpop.f32.mrf.mxu0
    %6806 = vdwg.mxu0
    %6807 = vmatpush.bf16.msra.mxu0 %v4170
    %6808 = vmatpush.bf16.msra.mxu0 %v4166
    %6809 = vmatpush.bf16.msra.mxu0 %v4162
    %6810 = vmatpush.bf16.msra.mxu0 %v4158
    %6811 = vmatpush.bf16.msra.mxu0 %v4154
    %6812 = vmatpush.bf16.msra.mxu0 %v4150
    %6813 = vmatpush.bf16.msra.mxu0 %v4146
    %6814 = vmatpush.bf16.msra.mxu0 %v4142
    %6815 = vmatmul.bf16.gmra.mxu0 %v944
    %v6816 = vpop.f32.mrf.mxu0
    %v6817 = vadd.f32 %v6804, %v6816
    %v6818 = vpop.f32.mrf.mxu0
    %6819 = vdwg.mxu0
    %6820 = vmatpush.bf16.msra.mxu0 %v4202
    %6821 = vmatpush.bf16.msra.mxu0 %v4198
    %6822 = vmatpush.bf16.msra.mxu0 %v4194
    %6823 = vmatpush.bf16.msra.mxu0 %v4190
    %6824 = vmatpush.bf16.msra.mxu0 %v4186
    %6825 = vmatpush.bf16.msra.mxu0 %v4182
    %6826 = vmatpush.bf16.msra.mxu0 %v4178
    %6827 = vmatpush.bf16.msra.mxu0 %v4174
    %6828 = vmatmul.bf16.gmra.mxu0 %v945
    %v6829 = vpop.f32.mrf.mxu0
    %v6830 = vadd.f32 %v6817, %v6829
    %v6831 = vpop.f32.mrf.mxu0
    %6832 = vdwg.mxu0
    %6833 = vmatpush.bf16.msra.mxu0 %v4234
    %6834 = vmatpush.bf16.msra.mxu0 %v4230
    %6835 = vmatpush.bf16.msra.mxu0 %v4226
    %6836 = vmatpush.bf16.msra.mxu0 %v4222
    %6837 = vmatpush.bf16.msra.mxu0 %v4218
    %6838 = vmatpush.bf16.msra.mxu0 %v4214
    %6839 = vmatpush.bf16.msra.mxu0 %v4210
    %6840 = vmatpush.bf16.msra.mxu0 %v4206
    %6841 = vmatmul.bf16.gmra.mxu0 %v948
    %v6842 = vpop.f32.mrf.mxu0
    %v6843 = vadd.f32 %v6830, %v6842
    %v6844 = vpop.f32.mrf.mxu0
    %6845 = vdwg.mxu0
    %6846 = vmatpush.bf16.msra.mxu0 %v4266
    %6847 = vmatpush.bf16.msra.mxu0 %v4262
    %6848 = vmatpush.bf16.msra.mxu0 %v4258
    %6849 = vmatpush.bf16.msra.mxu0 %v4254
    %6850 = vmatpush.bf16.msra.mxu0 %v4250
    %6851 = vmatpush.bf16.msra.mxu0 %v4246
    %6852 = vmatpush.bf16.msra.mxu0 %v4242
    %6853 = vmatpush.bf16.msra.mxu0 %v4238
    %6854 = vmatmul.bf16.gmra.mxu0 %v949
    %v6855 = vpop.f32.mrf.mxu0
    %v6856 = vadd.f32 %v6843, %v6855
    %v6857 = vpop.f32.mrf.mxu0
    %6858 = vdwg.mxu0
    %6859 = vmatpush.bf16.msra.mxu0 %v4298
    %6860 = vmatpush.bf16.msra.mxu0 %v4294
    %6861 = vmatpush.bf16.msra.mxu0 %v4290
    %6862 = vmatpush.bf16.msra.mxu0 %v4286
    %6863 = vmatpush.bf16.msra.mxu0 %v4282
    %6864 = vmatpush.bf16.msra.mxu0 %v4278
    %6865 = vmatpush.bf16.msra.mxu0 %v4274
    %6866 = vmatpush.bf16.msra.mxu0 %v4270
    %6867 = vmatmul.bf16.gmra.mxu0 %v950
    %v6868 = vpop.f32.mrf.mxu0
    %v6869 = vadd.f32 %v6856, %v6868
    %v6870 = vpop.f32.mrf.mxu0
    %6871 = vdwg.mxu0
    %6872 = vmatpush.bf16.msra.mxu0 %v4330
    %6873 = vmatpush.bf16.msra.mxu0 %v4326
    %6874 = vmatpush.bf16.msra.mxu0 %v4322
    %6875 = vmatpush.bf16.msra.mxu0 %v4318
    %6876 = vmatpush.bf16.msra.mxu0 %v4314
    %6877 = vmatpush.bf16.msra.mxu0 %v4310
    %6878 = vmatpush.bf16.msra.mxu0 %v4306
    %6879 = vmatpush.bf16.msra.mxu0 %v4302
    %6880 = vmatmul.bf16.gmra.mxu0 %v951
    %v6881 = vpop.f32.mrf.mxu0
    %v6882 = vadd.f32 %v6869, %v6881
    %v6883 = vpop.f32.mrf.mxu0
    %6884 = vdwg.mxu0
    %6885 = vmatpush.bf16.msra.mxu0 %v4362
    %6886 = vmatpush.bf16.msra.mxu0 %v4358
    %6887 = vmatpush.bf16.msra.mxu0 %v4354
    %6888 = vmatpush.bf16.msra.mxu0 %v4350
    %6889 = vmatpush.bf16.msra.mxu0 %v4346
    %6890 = vmatpush.bf16.msra.mxu0 %v4342
    %6891 = vmatpush.bf16.msra.mxu0 %v4338
    %6892 = vmatpush.bf16.msra.mxu0 %v4334
    %6893 = vmatmul.bf16.gmra.mxu0 %v952
    %v6894 = vpop.f32.mrf.mxu0
    %v6895 = vadd.f32 %v6882, %v6894
    %v6896 = vpop.f32.mrf.mxu0
    %6897 = vdwg.mxu0
    %6898 = vmatpush.bf16.msra.mxu0 %v4394
    %6899 = vmatpush.bf16.msra.mxu0 %v4390
    %6900 = vmatpush.bf16.msra.mxu0 %v4386
    %6901 = vmatpush.bf16.msra.mxu0 %v4382
    %6902 = vmatpush.bf16.msra.mxu0 %v4378
    %6903 = vmatpush.bf16.msra.mxu0 %v4374
    %6904 = vmatpush.bf16.msra.mxu0 %v4370
    %6905 = vmatpush.bf16.msra.mxu0 %v4366
    %6906 = vmatmul.bf16.gmra.mxu0 %v953
    %v6907 = vpop.f32.mrf.mxu0
    %v6908 = vadd.f32 %v6895, %v6907
    %v6909 = vpop.f32.mrf.mxu0
    %6910 = vdwg.mxu0
    %6911 = vmatpush.bf16.msra.mxu0 %v4426
    %6912 = vmatpush.bf16.msra.mxu0 %v4422
    %6913 = vmatpush.bf16.msra.mxu0 %v4418
    %6914 = vmatpush.bf16.msra.mxu0 %v4414
    %6915 = vmatpush.bf16.msra.mxu0 %v4410
    %6916 = vmatpush.bf16.msra.mxu0 %v4406
    %6917 = vmatpush.bf16.msra.mxu0 %v4402
    %6918 = vmatpush.bf16.msra.mxu0 %v4398
    %6919 = vmatmul.bf16.gmra.mxu0 %v954
    %v6920 = vpop.f32.mrf.mxu0
    %v6921 = vadd.f32 %v6908, %v6920
    %v6922 = vpop.f32.mrf.mxu0
    %6923 = vdwg.mxu0
    %6924 = vmatpush.bf16.msra.mxu0 %v4458
    %6925 = vmatpush.bf16.msra.mxu0 %v4454
    %6926 = vmatpush.bf16.msra.mxu0 %v4450
    %6927 = vmatpush.bf16.msra.mxu0 %v4446
    %6928 = vmatpush.bf16.msra.mxu0 %v4442
    %6929 = vmatpush.bf16.msra.mxu0 %v4438
    %6930 = vmatpush.bf16.msra.mxu0 %v4434
    %6931 = vmatpush.bf16.msra.mxu0 %v4430
    %6932 = vmatmul.bf16.gmra.mxu0 %v955
    %v6933 = vpop.f32.mrf.mxu0
    %v6934 = vadd.f32 %v6921, %v6933
    %v6935 = vpop.f32.mrf.mxu0
    %6936 = vdwg.mxu0
    %6937 = vmatpush.bf16.msra.mxu0 %v4490
    %6938 = vmatpush.bf16.msra.mxu0 %v4486
    %6939 = vmatpush.bf16.msra.mxu0 %v4482
    %6940 = vmatpush.bf16.msra.mxu0 %v4478
    %6941 = vmatpush.bf16.msra.mxu0 %v4474
    %6942 = vmatpush.bf16.msra.mxu0 %v4470
    %6943 = vmatpush.bf16.msra.mxu0 %v4466
    %6944 = vmatpush.bf16.msra.mxu0 %v4462
    %6945 = vmatmul.bf16.gmra.mxu0 %v958
    %v6946 = vpop.f32.mrf.mxu0
    %v6947 = vadd.f32 %v6934, %v6946
    %v6948 = vpop.f32.mrf.mxu0
    %6949 = vdwg.mxu0
    %6950 = vmatpush.bf16.msra.mxu0 %v4522
    %6951 = vmatpush.bf16.msra.mxu0 %v4518
    %6952 = vmatpush.bf16.msra.mxu0 %v4514
    %6953 = vmatpush.bf16.msra.mxu0 %v4510
    %6954 = vmatpush.bf16.msra.mxu0 %v4506
    %6955 = vmatpush.bf16.msra.mxu0 %v4502
    %6956 = vmatpush.bf16.msra.mxu0 %v4498
    %6957 = vmatpush.bf16.msra.mxu0 %v4494
    %6958 = vmatmul.bf16.gmra.mxu0 %v959
    %v6959 = vpop.f32.mrf.mxu0
    %v6960 = vadd.f32 %v6947, %v6959
    %v6961 = vpop.f32.mrf.mxu0
    %6962 = vdwg.mxu0
    %6963 = vmatpush.bf16.msra.mxu0 %v4554
    %6964 = vmatpush.bf16.msra.mxu0 %v4550
    %6965 = vmatpush.bf16.msra.mxu0 %v4546
    %6966 = vmatpush.bf16.msra.mxu0 %v4542
    %6967 = vmatpush.bf16.msra.mxu0 %v4538
    %6968 = vmatpush.bf16.msra.mxu0 %v4534
    %6969 = vmatpush.bf16.msra.mxu0 %v4530
    %6970 = vmatpush.bf16.msra.mxu0 %v4526
    %6971 = vmatmul.bf16.gmra.mxu0 %v960
    %v6972 = vpop.f32.mrf.mxu0
    %v6973 = vadd.f32 %v6960, %v6972
    %v6974 = vpop.f32.mrf.mxu0
    %6975 = vdwg.mxu0
    %6976 = vmatpush.bf16.msra.mxu0 %v4586
    %6977 = vmatpush.bf16.msra.mxu0 %v4582
    %6978 = vmatpush.bf16.msra.mxu0 %v4578
    %6979 = vmatpush.bf16.msra.mxu0 %v4574
    %6980 = vmatpush.bf16.msra.mxu0 %v4570
    %6981 = vmatpush.bf16.msra.mxu0 %v4566
    %6982 = vmatpush.bf16.msra.mxu0 %v4562
    %6983 = vmatpush.bf16.msra.mxu0 %v4558
    %6984 = vmatmul.bf16.gmra.mxu0 %v961
    %v6985 = vpop.f32.mrf.mxu0
    %v6986 = vadd.f32 %v6973, %v6985
    %v6987 = vpop.f32.mrf.mxu0
    %6988 = vdwg.mxu0
    %6989 = vmatpush.bf16.msra.mxu0 0
    %6990 = vmatpush.bf16.msra.mxu0 0
    %6991 = vmatpush.bf16.msra.mxu0 0
    %6992 = vmatpush.bf16.msra.mxu0 0
    %6993 = vmatpush.bf16.msra.mxu0 0
    %6994 = vmatpush.bf16.msra.mxu0 0
    %6995 = vmatpush.bf16.msra.mxu0 0
    %6996 = vmatpush.bf16.msra.mxu0 %v4590
    %6997 = vmatmul.bf16.gmra.mxu0 %v5492
    %v6998 = vpop.f32.mrf.mxu0
    %v6999 = vadd.f32 %v6986, %v6998
    %v7000 = vpop.f32.mrf.mxu0
    %7001 = vdwg.mxu0
    %v7002 = vmax.f32 %v5868, 0.0
    %v7003 = vmax.f32 %v6245, 0.0
    %v7004 = vmax.f32 %v6622, 0.0
    %v7005 = vmax.f32 %v6999, 0.0
    %v7006 = vld [vmem:[%s2] sm:$0xff]
    %v7007 = vld [vmem:[%s2 + $0x8] sm:$0xff]
    %v7008 = vld [vmem:[%s2 + $0x10] sm:$0xff]
    %v7009 = vld [vmem:[%s2 + $0x18] sm:$0xff]
    %v7010 = vld [vmem:[%s2 + $0x20] sm:$0xff]
    %v7011 = vld [vmem:[%s2 + $0x28] sm:$0xff]
    %v7012 = vld [vmem:[%s2 + $0x30] sm:$0xff]
    %v7013 = vld [vmem:[%s2 + $0x38] sm:$0xff]
    %v7014 = vld [vmem:[%s2 + $0x40] sm:$0xff]
    %v7015 = vld [vmem:[%s2 + $0x48] sm:$0xff]
    %v7016 = vld [vmem:[%s2 + $0x50] sm:$0xff]
    %v7017 = vld [vmem:[%s2 + $0x58] sm:$0xff]
    %v7018 = vld [vmem:[%s2 + $0x60] sm:$0xff]
    %v7019 = vld [vmem:[%s2 + $0x68] sm:$0xff]
    %v7020 = vld [vmem:[%s2 + $0x70] sm:$0xff]
    %v7021 = vld [vmem:[%s2 + $0x78] sm:$0xff]
    %v7022 = vld [vmem:[%s2 + $0x80] sm:$0xff]
    %v7023 = vld [vmem:[%s2 + $0x88] sm:$0xff]
    %v7024 = vld [vmem:[%s2 + $0x90] sm:$0xff]
    %v7025 = vld [vmem:[%s2 + $0x98] sm:$0xff]
    %v7026 = vld [vmem:[%s2 + $0xa0] sm:$0xff]
    %v7027 = vld [vmem:[%s2 + $0xa8] sm:$0xff]
    %v7028 = vld [vmem:[%s2 + $0xb0] sm:$0xff]
    %v7029 = vld [vmem:[%s2 + $0xb8] sm:$0xff]
    %v7030 = vld [vmem:[%s2 + $0xc0] sm:$0xff]
    %v7031 = vld [vmem:[%s2 + $0xc8] sm:$0xff]
    %v7032 = vld [vmem:[%s2 + $0xd0] sm:$0xff]
    %v7033 = vld [vmem:[%s2 + $0xd8] sm:$0xff]
    %v7034 = vld [vmem:[%s2 + $0xe0] sm:$0xff]
    %v7035 = vld [vmem:[%s2 + $0xe8] sm:$0xff]
    %v7036 = vld [vmem:[%s2 + $0xf0] sm:$0xff]
    %v7037 = vld [vmem:[%s2 + $0xf8] sm:$0xff]
    %v7038 = vld [vmem:[%s2 + $0x100] sm:$0xff]
    %v7039 = vld [vmem:[%s2 + $0x108] sm:$0xff]
    %v7040 = vld [vmem:[%s2 + $0x110] sm:$0xff]
    %v7041 = vld [vmem:[%s2 + $0x118] sm:$0xff]
    %v7042 = vld [vmem:[%s2 + $0x120] sm:$0xff]
    %v7043 = vld [vmem:[%s2 + $0x128] sm:$0xff]
    %v7044 = vld [vmem:[%s2 + $0x130] sm:$0xff]
    %v7045 = vld [vmem:[%s2 + $0x138] sm:$0xff]
    %v7046 = vld [vmem:[%s2 + $0x140] sm:$0xff]
    %v7047 = vld [vmem:[%s2 + $0x148] sm:$0xff]
    %v7048 = vld [vmem:[%s2 + $0x150] sm:$0xff]
    %v7049 = vld [vmem:[%s2 + $0x158] sm:$0xff]
    %v7050 = vld [vmem:[%s2 + $0x160] sm:$0xff]
    %v7051 = vld [vmem:[%s2 + $0x168] sm:$0xff]
    %v7052 = vld [vmem:[%s2 + $0x170] sm:$0xff]
    %v7053 = vld [vmem:[%s2 + $0x178] sm:$0xff]
    %v7054 = vld [vmem:[%s2 + $0x180] sm:$0xff]
    %v7055 = vld [vmem:[%s2 + $0x188] sm:$0xff]
    %v7056 = vld [vmem:[%s2 + $0x190] sm:$0xff]
    %v7057 = vld [vmem:[%s2 + $0x198] sm:$0xff]
    %v7058 = vld [vmem:[%s2 + $0x1a0] sm:$0xff]
    %v7059 = vld [vmem:[%s2 + $0x1a8] sm:$0xff]
    %v7060 = vld [vmem:[%s2 + $0x1b0] sm:$0xff]
    %v7061 = vld [vmem:[%s2 + $0x1b8] sm:$0xff]
    %v7062 = vld [vmem:[%s2 + $0x1c0] sm:$0xff]
    %v7063 = vld [vmem:[%s2 + $0x1c8] sm:$0xff]
    %v7064 = vld [vmem:[%s2 + $0x1d0] sm:$0xff]
    %v7065 = vld [vmem:[%s2 + $0x1d8] sm:$0xff]
    %v7066 = vld [vmem:[%s2 + $0x1e0] sm:$0xff]
    %v7067 = vld [vmem:[%s2 + $0x1e8] sm:$0xff]
    %v7068 = vld [vmem:[%s2 + $0x1f0] sm:$0xff]
    %v7069 = vld [vmem:[%s2 + $0x1f8] sm:$0xff]
    %v7070 = vld [vmem:[%s2 + $0x200] sm:$0xff]
    %v7071 = vld [vmem:[%s2 + $0x208] sm:$0xff]
    %v7072 = vld [vmem:[%s2 + $0x210] sm:$0xff]
    %v7073 = vld [vmem:[%s2 + $0x218] sm:$0xff]
    %v7074 = vld [vmem:[%s2 + $0x220] sm:$0xff]
    %v7075 = vld [vmem:[%s2 + $0x228] sm:$0xff]
    %v7076 = vld [vmem:[%s2 + $0x230] sm:$0xff]
    %v7077 = vld [vmem:[%s2 + $0x238] sm:$0xff]
    %v7078 = vld [vmem:[%s2 + $0x240] sm:$0xff]
    %v7079 = vld [vmem:[%s2 + $0x248] sm:$0xff]
    %v7080 = vld [vmem:[%s2 + $0x250] sm:$0xff]
    %v7081 = vld [vmem:[%s2 + $0x258] sm:$0xff]
    %v7082 = vld [vmem:[%s2 + $0x260] sm:$0xff]
    %v7083 = vld [vmem:[%s2 + $0x268] sm:$0xff]
    %v7084 = vld [vmem:[%s2 + $0x270] sm:$0xff]
    %v7085 = vld [vmem:[%s2 + $0x278] sm:$0xff]
    %v7086 = vld [vmem:[%s2 + $0x280] sm:$0xff]
    %v7087 = vld [vmem:[%s2 + $0x288] sm:$0xff]
    %v7088 = vld [vmem:[%s2 + $0x290] sm:$0xff]
    %v7089 = vld [vmem:[%s2 + $0x298] sm:$0xff]
    %v7090 = vld [vmem:[%s2 + $0x2a0] sm:$0xff]
    %v7091 = vld [vmem:[%s2 + $0x2a8] sm:$0xff]
    %v7092 = vld [vmem:[%s2 + $0x2b0] sm:$0xff]
    %v7093 = vld [vmem:[%s2 + $0x2b8] sm:$0xff]
    %v7094 = vld [vmem:[%s2 + $0x2c0] sm:$0xff]
    %v7095 = vld [vmem:[%s2 + $0x2c8] sm:$0xff]
    %v7096 = vld [vmem:[%s2 + $0x2d0] sm:$0xff]
    %v7097 = vld [vmem:[%s2 + $0x2d8] sm:$0xff]
    %v7098 = vld [vmem:[%s2 + $0x2e0] sm:$0xff]
    %v7099 = vld [vmem:[%s2 + $0x2e8] sm:$0xff]
    %v7100 = vld [vmem:[%s2 + $0x2f0] sm:$0xff]
    %v7101 = vld [vmem:[%s2 + $0x2f8] sm:$0xff]
    %v7102 = vld [vmem:[%s2 + $0x300] sm:$0xff]
    %v7103 = vld [vmem:[%s2 + $0x308] sm:$0xff]
    %v7104 = vld [vmem:[%s2 + $0x310] sm:$0xff]
    %v7105 = vld [vmem:[%s2 + $0x318] sm:$0xff]
    %v7107 = vsel %vm5491, %v7005, 0
    %7109 = vmatpush.msra.mxu0 %v7036
    %7110 = vmatpush.msra.mxu0 %v7034
    %7111 = vmatpush.msra.mxu0 %v7032
    %7112 = vmatpush.msra.mxu0 %v7030
    %7113 = vmatpush.msra.mxu0 %v7028
    %7114 = vmatpush.msra.mxu0 %v7026
    %7115 = vmatpush.msra.mxu0 %v7024
    %7116 = vmatpush.msra.mxu0 %v7022
    %7117 = vmatpush.msra.mxu0 %v7020
    %7118 = vmatpush.msra.mxu0 %v7018
    %7119 = vmatpush.msra.mxu0 %v7016
    %7120 = vmatpush.msra.mxu0 %v7014
    %7121 = vmatpush.msra.mxu0 %v7012
    %7122 = vmatpush.msra.mxu0 %v7010
    %7123 = vmatpush.msra.mxu0 %v7008
    %7124 = vmatpush.msra.mxu0 %v7006
    %7125 = vmatmul.f32.gmra.mxu0 %v7002
    %v7126 = vpop.f32.mrf.mxu0
    %v7127 = vadd.f32 0.0, %v7126
    %7128 = vdwg.mxu0
    %7129 = vmatpush.msra.mxu0 %v7068
    %7130 = vmatpush.msra.mxu0 %v7066
    %7131 = vmatpush.msra.mxu0 %v7064
    %7132 = vmatpush.msra.mxu0 %v7062
    %7133 = vmatpush.msra.mxu0 %v7060
    %7134 = vmatpush.msra.mxu0 %v7058
    %7135 = vmatpush.msra.mxu0 %v7056
    %7136 = vmatpush.msra.mxu0 %v7054
    %7137 = vmatpush.msra.mxu0 %v7052
    %7138 = vmatpush.msra.mxu0 %v7050
    %7139 = vmatpush.msra.mxu0 %v7048
    %7140 = vmatpush.msra.mxu0 %v7046
    %7141 = vmatpush.msra.mxu0 %v7044
    %7142 = vmatpush.msra.mxu0 %v7042
    %7143 = vmatpush.msra.mxu0 %v7040
    %7144 = vmatpush.msra.mxu0 %v7038
    %7145 = vmatmul.f32.gmra.mxu0 %v7003
    %v7146 = vpop.f32.mrf.mxu0
    %v7147 = vadd.f32 %v7127, %v7146
    %7148 = vdwg.mxu0
    %7149 = vmatpush.msra.mxu0 %v7100
    %7150 = vmatpush.msra.mxu0 %v7098
    %7151 = vmatpush.msra.mxu0 %v7096
    %7152 = vmatpush.msra.mxu0 %v7094
    %7153 = vmatpush.msra.mxu0 %v7092
    %7154 = vmatpush.msra.mxu0 %v7090
    %7155 = vmatpush.msra.mxu0 %v7088
    %7156 = vmatpush.msra.mxu0 %v7086
    %7157 = vmatpush.msra.mxu0 %v7084
    %7158 = vmatpush.msra.mxu0 %v7082
    %7159 = vmatpush.msra.mxu0 %v7080
    %7160 = vmatpush.msra.mxu0 %v7078
    %7161 = vmatpush.msra.mxu0 %v7076
    %7162 = vmatpush.msra.mxu0 %v7074
    %7163 = vmatpush.msra.mxu0 %v7072
    %7164 = vmatpush.msra.mxu0 %v7070
    %7165 = vmatmul.f32.gmra.mxu0 %v7004
    %v7166 = vpop.f32.mrf.mxu0
    %v7167 = vadd.f32 %v7147, %v7166
    %7168 = vdwg.mxu0
    %7169 = vmatpush.msra.mxu0 0.0
    %7170 = vmatpush.msra.mxu0 0.0
    %7171 = vmatpush.msra.mxu0 0.0
    %7172 = vmatpush.msra.mxu0 0.0
    %7173 = vmatpush.msra.mxu0 0.0
    %7174 = vmatpush.msra.mxu0 0.0
    %7175 = vmatpush.msra.mxu0 0.0
    %7176 = vmatpush.msra.mxu0 0.0
    %7177 = vmatpush.msra.mxu0 0.0
    %7178 = vmatpush.msra.mxu0 0.0
    %7179 = vmatpush.msra.mxu0 0.0
    %7180 = vmatpush.msra.mxu0 0.0
    %7181 = vmatpush.msra.mxu0 0.0
    %7182 = vmatpush.msra.mxu0 0.0
    %7183 = vmatpush.msra.mxu0 %v7104
    %7184 = vmatpush.msra.mxu0 %v7102
    %7185 = vmatmul.f32.gmra.mxu0 %v7107
    %v7186 = vpop.f32.mrf.mxu0
    %v7187 = vadd.f32 %v7167, %v7186
    %7188 = vdwg.mxu0
    %7189 = vmatpush.msra.mxu0 %v7037
    %7190 = vmatpush.msra.mxu0 %v7035
    %7191 = vmatpush.msra.mxu0 %v7033
    %7192 = vmatpush.msra.mxu0 %v7031
    %7193 = vmatpush.msra.mxu0 %v7029
    %7194 = vmatpush.msra.mxu0 %v7027
    %7195 = vmatpush.msra.mxu0 %v7025
    %7196 = vmatpush.msra.mxu0 %v7023
    %7197 = vmatpush.msra.mxu0 %v7021
    %7198 = vmatpush.msra.mxu0 %v7019
    %7199 = vmatpush.msra.mxu0 %v7017
    %7200 = vmatpush.msra.mxu0 %v7015
    %7201 = vmatpush.msra.mxu0 %v7013
    %7202 = vmatpush.msra.mxu0 %v7011
    %7203 = vmatpush.msra.mxu0 %v7009
    %7204 = vmatpush.msra.mxu0 %v7007
    %7205 = vmatmul.f32.gmra.mxu0 %v7002
    %v7206 = vpop.f32.mrf.mxu0
    %v7207 = vadd.f32 0.0, %v7206
    %7208 = vdwg.mxu0
    %7209 = vmatpush.msra.mxu0 %v7069
    %7210 = vmatpush.msra.mxu0 %v7067
    %7211 = vmatpush.msra.mxu0 %v7065
    %7212 = vmatpush.msra.mxu0 %v7063
    %7213 = vmatpush.msra.mxu0 %v7061
    %7214 = vmatpush.msra.mxu0 %v7059
    %7215 = vmatpush.msra.mxu0 %v7057
    %7216 = vmatpush.msra.mxu0 %v7055
    %7217 = vmatpush.msra.mxu0 %v7053
    %7218 = vmatpush.msra.mxu0 %v7051
    %7219 = vmatpush.msra.mxu0 %v7049
    %7220 = vmatpush.msra.mxu0 %v7047
    %7221 = vmatpush.msra.mxu0 %v7045
    %7222 = vmatpush.msra.mxu0 %v7043
    %7223 = vmatpush.msra.mxu0 %v7041
    %7224 = vmatpush.msra.mxu0 %v7039
    %7225 = vmatmul.f32.gmra.mxu0 %v7003
    %v7226 = vpop.f32.mrf.mxu0
    %v7227 = vadd.f32 %v7207, %v7226
    %7228 = vdwg.mxu0
    %7229 = vmatpush.msra.mxu0 %v7101
    %7230 = vmatpush.msra.mxu0 %v7099
    %7231 = vmatpush.msra.mxu0 %v7097
    %7232 = vmatpush.msra.mxu0 %v7095
    %7233 = vmatpush.msra.mxu0 %v7093
    %7234 = vmatpush.msra.mxu0 %v7091
    %7235 = vmatpush.msra.mxu0 %v7089
    %7236 = vmatpush.msra.mxu0 %v7087
    %7237 = vmatpush.msra.mxu0 %v7085
    %7238 = vmatpush.msra.mxu0 %v7083
    %7239 = vmatpush.msra.mxu0 %v7081
    %7240 = vmatpush.msra.mxu0 %v7079
    %7241 = vmatpush.msra.mxu0 %v7077
    %7242 = vmatpush.msra.mxu0 %v7075
    %7243 = vmatpush.msra.mxu0 %v7073
    %7244 = vmatpush.msra.mxu0 %v7071
    %7245 = vmatmul.f32.gmra.mxu0 %v7004
    %v7246 = vpop.f32.mrf.mxu0
    %v7247 = vadd.f32 %v7227, %v7246
    %7248 = vdwg.mxu0
    %7249 = vmatpush.msra.mxu0 0.0
    %7250 = vmatpush.msra.mxu0 0.0
    %7251 = vmatpush.msra.mxu0 0.0
    %7252 = vmatpush.msra.mxu0 0.0
    %7253 = vmatpush.msra.mxu0 0.0
    %7254 = vmatpush.msra.mxu0 0.0
    %7255 = vmatpush.msra.mxu0 0.0
    %7256 = vmatpush.msra.mxu0 0.0
    %7257 = vmatpush.msra.mxu0 0.0
    %7258 = vmatpush.msra.mxu0 0.0
    %7259 = vmatpush.msra.mxu0 0.0
    %7260 = vmatpush.msra.mxu0 0.0
    %7261 = vmatpush.msra.mxu0 0.0
    %7262 = vmatpush.msra.mxu0 0.0
    %7263 = vmatpush.msra.mxu0 %v7105
    %7264 = vmatpush.msra.mxu0 %v7103
    %7265 = vmatmul.f32.gmra.mxu0 %v7107
    %v7266 = vpop.f32.mrf.mxu0
    %v7267 = vadd.f32 %v7247, %v7266
    %7268 = vdwg.mxu0
    %v7269 = vmax.f32 %v7187, 0.0
    %v7270 = vmax.f32 %v7267, 0.0
    %v7271 = vld [vmem:[%s3] sm:$0xff]
    %v7272 = vld [vmem:[%s3 + $0x8] sm:$0xff]
    %v7273 = vld [vmem:[%s3 + $0x10] sm:$0xff]
    %v7274 = vld [vmem:[%s3 + $0x18] sm:$0xff]
    %v7275 = vld [vmem:[%s3 + $0x20] sm:$0xff]
    %v7276 = vld [vmem:[%s3 + $0x28] sm:$0xff]
    %v7277 = vld [vmem:[%s3 + $0x30] sm:$0xff]
    %v7278 = vld [vmem:[%s3 + $0x38] sm:$0xff]
    %v7279 = vld [vmem:[%s3 + $0x40] sm:$0xff]
    %v7280 = vld [vmem:[%s3 + $0x48] sm:$0xff]
    %v7281 = vld [vmem:[%s3 + $0x50] sm:$0xff]
    %v7282 = vld [vmem:[%s3 + $0x58] sm:$0xff]
    %v7283 = vld [vmem:[%s3 + $0x60] sm:$0xff]
    %v7284 = vld [vmem:[%s3 + $0x68] sm:$0xff]
    %v7285 = vld [vmem:[%s3 + $0x70] sm:$0xff]
    %v7286 = vld [vmem:[%s3 + $0x78] sm:$0xff]
    %v7287 = vld [vmem:[%s3 + $0x80] sm:$0xff]
    %v7288 = vld [vmem:[%s3 + $0x88] sm:$0xff]
    %v7290 = vsel %vm5491, %v7270, 0
    %7292 = vmatpush.msra.mxu0 %v7286
    %7293 = vmatpush.msra.mxu0 %v7285
    %7294 = vmatpush.msra.mxu0 %v7284
    %7295 = vmatpush.msra.mxu0 %v7283
    %7296 = vmatpush.msra.mxu0 %v7282
    %7297 = vmatpush.msra.mxu0 %v7281
    %7298 = vmatpush.msra.mxu0 %v7280
    %7299 = vmatpush.msra.mxu0 %v7279
    %7300 = vmatpush.msra.mxu0 %v7278
    %7301 = vmatpush.msra.mxu0 %v7277
    %7302 = vmatpush.msra.mxu0 %v7276
    %7303 = vmatpush.msra.mxu0 %v7275
    %7304 = vmatpush.msra.mxu0 %v7274
    %7305 = vmatpush.msra.mxu0 %v7273
    %7306 = vmatpush.msra.mxu0 %v7272
    %7307 = vmatpush.msra.mxu0 %v7271
    %7308 = vmatmul.f32.gmra.mxu0 %v7269
    %v7309 = vpop.f32.mrf.mxu0
    %v7310 = vadd.f32 0.0, %v7309
    %7311 = vdwg.mxu0
    %7312 = vmatpush.msra.mxu0 0.0
    %7313 = vmatpush.msra.mxu0 0.0
    %7314 = vmatpush.msra.mxu0 0.0
    %7315 = vmatpush.msra.mxu0 0.0
    %7316 = vmatpush.msra.mxu0 0.0
    %7317 = vmatpush.msra.mxu0 0.0
    %7318 = vmatpush.msra.mxu0 0.0
    %7319 = vmatpush.msra.mxu0 0.0
    %7320 = vmatpush.msra.mxu0 0.0
    %7321 = vmatpush.msra.mxu0 0.0
    %7322 = vmatpush.msra.mxu0 0.0
    %7323 = vmatpush.msra.mxu0 0.0
    %7324 = vmatpush.msra.mxu0 0.0
    %7325 = vmatpush.msra.mxu0 0.0
    %7326 = vmatpush.msra.mxu0 %v7288
    %7327 = vmatpush.msra.mxu0 %v7287
    %7328 = vmatmul.f32.gmra.mxu0 %v7290
    %v7329 = vpop.f32.mrf.mxu0
    %v7330 = vadd.f32 %v7310, %v7329
    %7331 = vdwg.mxu0
    %v7332 = vmax.f32 %v7330, 0.0
    %v7333 = vld [vmem:[%s4] sm:$0xff]
    %v7334 = vld [vmem:[%s4 + $0x8] sm:$0xff]
    %v7336 = vsel %vm5491, %v7332, 0
    %7338 = vmatpush.msra.mxu0 0.0
    %7339 = vmatpush.msra.mxu0 0.0
    %7340 = vmatpush.msra.mxu0 0.0
    %7341 = vmatpush.msra.mxu0 0.0
    %7342 = vmatpush.msra.mxu0 0.0
    %7343 = vmatpush.msra.mxu0 0.0
    %7344 = vmatpush.msra.mxu0 0.0
    %7345 = vmatpush.msra.mxu0 0.0
    %7346 = vmatpush.msra.mxu0 0.0
    %7347 = vmatpush.msra.mxu0 0.0
    %7348 = vmatpush.msra.mxu0 0.0
    %7349 = vmatpush.msra.mxu0 0.0
    %7350 = vmatpush.msra.mxu0 0.0
    %7351 = vmatpush.msra.mxu0 0.0
    %7352 = vmatpush.msra.mxu0 %v7334
    %7353 = vmatpush.msra.mxu0 %v7333
    %7354 = vmatmul.f32.gmra.mxu0 %v7336
    %v7355 = vpop.f32.mrf.mxu0
    %v7356 = vadd.f32 0.0, %v7355
    %7357 = vdwg.mxu0
    %v7358 = vxor.u32 %v7356, 2147483648
    %v7359 = vmul.f32 %v7358, 1.442695
    %v7360 = vpow.pop %v7359
    %v7361 = vadd.f32 %v7360, 1.0
    %v7362 = vrcp.pop %v7361
    %v7363 = vmul.f32 %v7361, %v7362
    %v7364 = vsub.f32 1.0, %v7363
    %v7365 = vmul.f32 %v7362, %v7364
    %v7366 = vadd.f32 %v7362, %v7365
    %vm7367 = vweird.f32 %v7361
    %vm7368 = vweird.f32 %v7362
    %vm7369 = vmor %vm7367, %vm7368
    %v7370 = vsel %vm7369, %v7362, %v7366
    %v7371 = vand.u32 2147483647, %v7361
    %vm7372 = vcmp.eq.f32.partialorder %v7371, 8.507059e+37
    %v7373 = vand.u32 %v7361, 2147483648
    %v7374 = vor.u32 1.1754944e-38, %v7373
    %v7375 = vsel %vm7372, %v7374, %v7370
    %v7376 = vmul.f32 1.0, %v7375
    %vm7377 = vcmask 386048
    %7378 = vst.msk [vmem:[#allocation2] sm:$0x3] %vm7377, %v7376
    // Predicated region
    $region22: #{tpu_custom_call.1} parent=1 // pred_check
      _
    $region23: #{tpu_custom_call.1} parent=1 // pred_check_branch
      %7380 = sbr.rel (0) target = $region25
    $region24: #{tpu_custom_call.1} parent=1 // pred_region
      %7382 = vsyncadd [#allocation3], 0
      %s7384 = sshll.u32 [#allocation2], 4
      %s7385 = int_to_ptr.vmem [resolvable:$true] %s7384
      %s7386 = sshll.u32 %s5, 4
      %s7387 = int_to_ptr.hbm [resolvable:$true] %s7386
      %7389 = dma.vmem_to_hbm [thread:$0]  %s7385, 32, %s7387, [#allocation3]
    $region25: #{tpu_custom_call.1} parent=1 // pred_fallthru
      _
    // Predicated region
    $region26: #{tpu_custom_call.1} parent=1 // pred_check
      _
    $region27: #{tpu_custom_call.1} parent=1 // pred_check_branch
      %7391 = sbr.rel (0) target = $region29
    $region28: #{tpu_custom_call.1} parent=1 // pred_region
      %7393 = dma.done [#allocation3], 32
    $region29: #{tpu_custom_call.1} parent=1 // pred_fallthru
      _
    %7394 = vsyncpa [#allocation3], 1

</llo_original>
